<compile_context>
chip_gen: v7x
topology: tpu7x:2x2x1
jax: 0.10.0
libtpu: 0.0.40
codegen_flags: <defaults>
</compile_context>

<pallas_src>
import math
import functools

import jax
import jax.numpy as jnp
from jax.experimental import pallas as pl
from jax.experimental.pallas import tpu as pltpu


# ----------------------------- fused kernel ----------------------------------

def fused_transformer_kernel(x_ref, pe_ref, ew_ref, eb_ref,
                             wqkv_ref, bqkv_ref, wo_ref, bo_ref,
                             g1_ref, be1_ref,
                             w1_ref, b1_ref, w2_ref, b2_ref,
                             g2_ref, be2_ref,
                             fcw_ref, fcb_ref,
                             out_ref, h_ref, *, B, S, D, nhead):
    l = pl.program_id(0)
    L = pl.num_programs(0)
    hd = D // nhead
    scale = 1.0 / math.sqrt(hd)

    # --- step 0: embedding projection + positional encoding (fused) ----------
    @pl.when(l == 0)
    def _():
        h_ref[...] = (jnp.dot(x_ref[...], ew_ref[...],
                              preferred_element_type=jnp.float32)
                      + eb_ref[...] + pe_ref[...])

    # --- encoder layer l (post-norm, relu FFN), whole batch at once ----------
    x = h_ref[...]                                          # (B*S, D)

    # fused QKV projection: one (B*S, D) @ (D, 3D) matmul
    qkv = jnp.dot(x, wqkv_ref[0],
                  preferred_element_type=jnp.float32) + bqkv_ref[0]
    qkv3 = qkv.reshape(B, S, 3 * D)
    q3 = qkv3[:, :, 0:D]
    k3 = qkv3[:, :, D:2 * D]
    v3 = qkv3[:, :, 2 * D:3 * D]

    ctx_heads = []
    for h in range(nhead):                  # static loop; each head batched over B
        qh = q3[:, :, h * hd:(h + 1) * hd] * scale
        kh = k3[:, :, h * hd:(h + 1) * hd]
        vh = v3[:, :, h * hd:(h + 1) * hd]
        s = jnp.einsum('bqd,bkd->bqk', qh, kh,
                       preferred_element_type=jnp.float32)          # (B, S, S)
        m = jnp.max(s, axis=-1, keepdims=True)
        p = jnp.exp(s - m)
        p = p * pl.reciprocal(jnp.sum(p, axis=-1, keepdims=True), approx=True)
        ctx_heads.append(jnp.einsum('bqk,bkd->bqd', p, vh,
                                    preferred_element_type=jnp.float32))
    ctx = jnp.concatenate(ctx_heads, axis=-1).reshape(B * S, D)

    attn = jnp.dot(ctx, wo_ref[0],
                   preferred_element_type=jnp.float32) + bo_ref[0]

    # residual + LayerNorm 1
    h1 = x + attn
    mu = jnp.mean(h1, axis=-1, keepdims=True)
    var = jnp.mean((h1 - mu) ** 2, axis=-1, keepdims=True)
    h1n = (h1 - mu) * jax.lax.rsqrt(var + 1e-5) * g1_ref[0] + be1_ref[0]

    # FFN (Linear -> ReLU -> Linear), residual + LayerNorm 2
    f = jnp.dot(h1n, w1_ref[0], preferred_element_type=jnp.float32) + b1_ref[0]
    f = jnp.maximum(f, 0.0)
    f = jnp.dot(f, w2_ref[0], preferred_element_type=jnp.float32) + b2_ref[0]
    h2 = h1n + f
    mu2 = jnp.mean(h2, axis=-1, keepdims=True)
    var2 = jnp.mean((h2 - mu2) ** 2, axis=-1, keepdims=True)
    h2n = (h2 - mu2) * jax.lax.rsqrt(var2 + 1e-5) * g2_ref[0] + be2_ref[0]

    h_ref[...] = h2n                                         # stays in VMEM

    # --- last step: select last time step + final fc (fused) -----------------
    @pl.when(l == L - 1)
    def _():
        # TODO(synk): dropout layers are identity (eval-mode semantics).
        last = h2n.reshape(B, S, D)[:, S - 1, :]             # (B, D)
        out_ref[...] = (jnp.dot(last, fcw_ref[...],
                                preferred_element_type=jnp.float32)
                        + fcb_ref[...])


# ----------------------------- wrapper ----------------------------------------

def transformer_forward(x, params, nhead):
    """x: (B, S, input_size) -> (B, output_size)."""
    B, S, F = x.shape
    D = params["emb_w_t"].shape[1]
    O = params["fc_w_t"].shape[1]
    L = params["wqkv_t"].shape[0]
    assert D % nhead == 0

    x_flat = x.reshape(B * S, F)
    # row b*S + s gets pe[s]  (== PyTorch's (S, B, D) broadcast of pe[:S])
    pe_flat = jnp.tile(params["pe"], (B, 1))                 # (B*S, D)

    def const_spec(a):
        nd = a.ndim
        return pl.BlockSpec(a.shape, lambda l, _nd=nd: (0,) * _nd)

    def layer_spec(a):                                       # (L, r, c) stacked
        return pl.BlockSpec((1,) + a.shape[1:], lambda l: (l, 0, 0))

    args = [x_flat, pe_flat, params["emb_w_t"], params["emb_b"],
            params["wqkv_t"], params["bqkv"], params["wo_t"], params["bo"],
            params["ln1_g"], params["ln1_b"],
            params["w1_t"], params["b1"], params["w2_t"], params["b2"],
            params["ln2_g"], params["ln2_b"],
            params["fc_w_t"], params["fc_b"]]
    in_specs = ([const_spec(x_flat), const_spec(pe_flat),
                 const_spec(params["emb_w_t"]), const_spec(params["emb_b"])] +
                [layer_spec(params[k]) for k in
                 ("wqkv_t", "bqkv", "wo_t", "bo", "ln1_g", "ln1_b",
                  "w1_t", "b1", "w2_t", "b2", "ln2_g", "ln2_b")] +
                [const_spec(params["fc_w_t"]), const_spec(params["fc_b"])])

    kernel = functools.partial(fused_transformer_kernel,
                               B=B, S=S, D=D, nhead=nhead)

    return pl.pallas_call(
        kernel,
        out_shape=jax.ShapeDtypeStruct((B, O), jnp.float32),
        grid=(L,),
        in_specs=in_specs,
        out_specs=pl.BlockSpec((B, O), lambda l: (0, 0)),
        scratch_shapes=[pltpu.VMEM((B * S, D), jnp.float32)],   # resident acts
        compiler_params=pltpu.CompilerParams(
            dimension_semantics=("arbitrary",)),                # layers are sequential
    )(*args)


# ----------------------------- parameter setup --------------------------------

def positional_encoding(seq_len, d_model):
    # NOTE: assumes even d_model (matches the PyTorch reference usage).
    pos = jnp.arange(seq_len, dtype=jnp.float32)[:, None]
    div = jnp.exp(jnp.arange(0, d_model, 2, dtype=jnp.float32)
                  * (-math.log(10000.0) / d_model))
    pe = jnp.zeros((seq_len, d_model), jnp.float32)
    pe = pe.at[:, 0::2].set(jnp.sin(pos * div))
    pe = pe.at[:, 1::2].set(jnp.cos(pos * div))
    return pe


def init_params(key, input_size, d_model, nhead, num_layers, output_size,
                seq_len, dim_feedforward=2048):
    def nrm(k, shape, scale=0.05):
        return (scale * jax.random.normal(k, shape)).astype(jnp.float32)

    keys = jax.random.split(key, 4 + num_layers)
    lk = [jax.random.split(keys[4 + i], 8) for i in range(num_layers)]

    params = {
        "emb_w_t": nrm(keys[0], (input_size, d_model)),
        "emb_b":   nrm(keys[1], (1, d_model)),
        "fc_w_t":  nrm(keys[2], (d_model, output_size)),
        "fc_b":    nrm(keys[3], (1, output_size)),
        "pe":      positional_encoding(seq_len, d_model),
        # per-layer params stacked on a leading layer axis (streamed per grid step)
        "wqkv_t": jnp.stack([nrm(lk[i][0], (d_model, 3 * d_model))
                             for i in range(num_layers)]),
        "bqkv":   jnp.stack([nrm(lk[i][1], (1, 3 * d_model))
                             for i in range(num_layers)]),
        "wo_t":   jnp.stack([nrm(lk[i][2], (d_model, d_model))
                             for i in range(num_layers)]),
        "bo":     jnp.stack([nrm(lk[i][3], (1, d_model))
                             for i in range(num_layers)]),
        "ln1_g":  jnp.ones((num_layers, 1, d_model), jnp.float32),
        "ln1_b":  jnp.zeros((num_layers, 1, d_model), jnp.float32),
        "w1_t":   jnp.stack([nrm(lk[i][4], (d_model, dim_feedforward))
                             for i in range(num_layers)]),
        "b1":     jnp.stack([nrm(lk[i][5], (1, dim_feedforward))
                             for i in range(num_layers)]),
        "w2_t":   jnp.stack([nrm(lk[i][6], (dim_feedforward, d_model))
                             for i in range(num_layers)]),
        "b2":     jnp.stack([nrm(lk[i][7], (1, d_model))
                             for i in range(num_layers)]),
        "ln2_g":  jnp.ones((num_layers, 1, d_model), jnp.float32),
        "ln2_b":  jnp.zeros((num_layers, 1, d_model), jnp.float32),
    }
    return params


# ----------------------------- main -------------------------------------------

if __name__ == "__main__":
    batch, seq_len = 2, 8
    input_size, d_model, nhead, num_layers, output_size = 4, 32, 4, 2, 1

    key = jax.random.PRNGKey(0)
    kx, kp = jax.random.split(key)
    x = jax.random.normal(kx, (batch, seq_len, input_size), dtype=jnp.float32)
    params = init_params(kp, input_size, d_model, nhead, num_layers,
                         output_size, seq_len)

    out = transformer_forward(x, params, nhead)
    out = jax.block_until_ready(out)
    assert out.shape == (batch, output_size), out.shape
    print("KERNEL_OK")
</pallas_src>

<mosaic_0001>
module attributes {stable_mosaic.version = 11 : i64} {
  func.func @fused_transformer_kernel(%arg0: i32, %arg1: memref<16x4xf32, #tpu.memory_space<vmem>>, %arg2: memref<16x32xf32, #tpu.memory_space<vmem>>, %arg3: memref<4x32xf32, #tpu.memory_space<vmem>>, %arg4: memref<1x32xf32, #tpu.memory_space<vmem>>, %arg5: memref<1x32x96xf32, #tpu.memory_space<vmem>>, %arg6: memref<1x1x96xf32, #tpu.memory_space<vmem>>, %arg7: memref<1x32x32xf32, #tpu.memory_space<vmem>>, %arg8: memref<1x1x32xf32, #tpu.memory_space<vmem>>, %arg9: memref<1x1x32xf32, #tpu.memory_space<vmem>>, %arg10: memref<1x1x32xf32, #tpu.memory_space<vmem>>, %arg11: memref<1x32x2048xf32, #tpu.memory_space<vmem>>, %arg12: memref<1x1x2048xf32, #tpu.memory_space<vmem>>, %arg13: memref<1x2048x32xf32, #tpu.memory_space<vmem>>, %arg14: memref<1x1x32xf32, #tpu.memory_space<vmem>>, %arg15: memref<1x1x32xf32, #tpu.memory_space<vmem>>, %arg16: memref<1x1x32xf32, #tpu.memory_space<vmem>>, %arg17: memref<32x1xf32, #tpu.memory_space<vmem>>, %arg18: memref<1x1xf32, #tpu.memory_space<vmem>>, %arg19: memref<2x1xf32, #tpu.memory_space<vmem>>, %arg20: memref<16x32xf32, #tpu.memory_space<vmem>>) attributes {dimension_semantics = [#tpu.dimension_semantics<arbitrary>], iteration_bounds = array<i64: 2>, scalar_prefetch = 0 : i64, scratch_operands = 1 : i64, tpu.core_type = #tpu.core_type<tc>, window_params = [{pipeline_mode = #tpu.pipeline_mode<synchronous>, transform_indices = @transform_0, window_bounds = array<i64: 16, 4>}, {pipeline_mode = #tpu.pipeline_mode<synchronous>, transform_indices = @transform_1, window_bounds = array<i64: 16, 32>}, {pipeline_mode = #tpu.pipeline_mode<synchronous>, transform_indices = @transform_2, window_bounds = array<i64: 4, 32>}, {pipeline_mode = #tpu.pipeline_mode<synchronous>, transform_indices = @transform_3, window_bounds = array<i64: 1, 32>}, {transform_indices = @transform_4, window_bounds = array<i64: 1, 32, 96>}, {transform_indices = @transform_5, window_bounds = array<i64: 1, 1, 96>}, {transform_indices = @transform_6, window_bounds = array<i64: 1, 32, 32>}, {transform_indices = @transform_7, window_bounds = array<i64: 1, 1, 32>}, {transform_indices = @transform_8, window_bounds = array<i64: 1, 1, 32>}, {transform_indices = @transform_9, window_bounds = array<i64: 1, 1, 32>}, {transform_indices = @transform_10, window_bounds = array<i64: 1, 32, 2048>}, {transform_indices = @transform_11, window_bounds = array<i64: 1, 1, 2048>}, {transform_indices = @transform_12, window_bounds = array<i64: 1, 2048, 32>}, {transform_indices = @transform_13, window_bounds = array<i64: 1, 1, 32>}, {transform_indices = @transform_14, window_bounds = array<i64: 1, 1, 32>}, {transform_indices = @transform_15, window_bounds = array<i64: 1, 1, 32>}, {pipeline_mode = #tpu.pipeline_mode<synchronous>, transform_indices = @transform_16, window_bounds = array<i64: 32, 1>}, {pipeline_mode = #tpu.pipeline_mode<synchronous>, transform_indices = @transform_17, window_bounds = array<i64: 1, 1>}, {pipeline_mode = #tpu.pipeline_mode<synchronous>, transform_indices = @transform_18, window_bounds = array<i64: 2, 1>}]} {
    %c0_i32 = arith.constant 0 : i32
    %0 = arith.cmpi eq, %arg0, %c0_i32 : i32
    %1 = arith.extui %0 : i1 to i32
    %c0_i32_0 = arith.constant 0 : i32
    %2 = arith.cmpi ne, %1, %c0_i32_0 : i32
    scf.if %2 {
      %c0_75 = arith.constant 0 : index
      %c0_76 = arith.constant 0 : index
      %166 = vector.load %arg1[%c0_75, %c0_76] : memref<16x4xf32, #tpu.memory_space<vmem>>, vector<16x4xf32>
      %c0_77 = arith.constant 0 : index
      %c0_78 = arith.constant 0 : index
      %167 = vector.load %arg3[%c0_77, %c0_78] : memref<4x32xf32, #tpu.memory_space<vmem>>, vector<4x32xf32>
      %cst_79 = arith.constant dense<0.000000e+00> : vector<16x32xf32>
      %168 = tpu.matmul %166, %167, %cst_79 {dimension_numbers = #tpu.dot_dimension_numbers<[1], [0], [0], [1], [0, 0, 1, 1], [], []>} : vector<16x4xf32>, vector<4x32xf32>, vector<16x32xf32> -> vector<16x32xf32>
      %c0_80 = arith.constant 0 : index
      %c0_81 = arith.constant 0 : index
      %169 = vector.load %arg4[%c0_80, %c0_81] : memref<1x32xf32, #tpu.memory_space<vmem>>, vector<1x32xf32>
      %170 = vector.broadcast %169 : vector<1x32xf32> to vector<16x32xf32>
      %171 = arith.addf %168, %170 : vector<16x32xf32>
      %c0_82 = arith.constant 0 : index
      %c0_83 = arith.constant 0 : index
      %172 = vector.load %arg2[%c0_82, %c0_83] : memref<16x32xf32, #tpu.memory_space<vmem>>, vector<16x32xf32>
      %173 = arith.addf %171, %172 : vector<16x32xf32>
      %c0_84 = arith.constant 0 : index
      %c0_85 = arith.constant 0 : index
      %174 = vector.load %arg20[%c0_84, %c0_85] : memref<16x32xf32, #tpu.memory_space<vmem>>, vector<16x32xf32>
      tpu.vector_store %arg20[%c0_84, %c0_85], %173 {strides = array<i32>} : memref<16x32xf32, #tpu.memory_space<vmem>>, vector<16x32xf32>,
    } else {
    }
    %c0 = arith.constant 0 : index
    %c0_1 = arith.constant 0 : index
    %3 = vector.load %arg20[%c0, %c0_1] : memref<16x32xf32, #tpu.memory_space<vmem>>, vector<16x32xf32>
    %c0_2 = arith.constant 0 : index
    %c0_3 = arith.constant 0 : index
    %c0_4 = arith.constant 0 : index
    %4 = vector.load %arg5[%c0_2, %c0_3, %c0_4] : memref<1x32x96xf32, #tpu.memory_space<vmem>>, vector<1x32x96xf32>
    %5 = vector.shape_cast %4 : vector<1x32x96xf32> to vector<32x96xf32>
    %cst = arith.constant dense<0.000000e+00> : vector<16x96xf32>
    %6 = tpu.matmul %3, %5, %cst {dimension_numbers = #tpu.dot_dimension_numbers<[1], [0], [0], [1], [0, 0, 1, 1], [], []>} : vector<16x32xf32>, vector<32x96xf32>, vector<16x96xf32> -> vector<16x96xf32>
    %c0_5 = arith.constant 0 : index
    %c0_6 = arith.constant 0 : index
    %c0_7 = arith.constant 0 : index
    %7 = vector.load %arg6[%c0_5, %c0_6, %c0_7] : memref<1x1x96xf32, #tpu.memory_space<vmem>>, vector<1x1x96xf32>
    %8 = vector.shape_cast %7 : vector<1x1x96xf32> to vector<1x96xf32>
    %9 = vector.broadcast %8 : vector<1x96xf32> to vector<16x96xf32>
    %10 = arith.addf %6, %9 : vector<16x96xf32>
    %11 = vector.shape_cast %10 : vector<16x96xf32> to vector<2x8x96xf32>
    %12 = vector.extract_strided_slice %11 {offsets = [0, 0, 0], sizes = [2, 8, 32], strides = [1, 1, 1]} : vector<2x8x96xf32> to vector<2x8x32xf32>
    %13 = vector.extract_strided_slice %11 {offsets = [0, 0, 32], sizes = [2, 8, 32], strides = [1, 1, 1]} : vector<2x8x96xf32> to vector<2x8x32xf32>
    %14 = vector.extract_strided_slice %11 {offsets = [0, 0, 64], sizes = [2, 8, 32], strides = [1, 1, 1]} : vector<2x8x96xf32> to vector<2x8x32xf32>
    %15 = vector.extract_strided_slice %12 {offsets = [0, 0, 0], sizes = [2, 8, 8], strides = [1, 1, 1]} : vector<2x8x32xf32> to vector<2x8x8xf32>
    %cst_8 = arith.constant 0.353553385 : f32
    %16 = vector.broadcast %cst_8 : f32 to vector<2x8x8xf32>
    %17 = arith.mulf %15, %16 : vector<2x8x8xf32>
    %18 = vector.extract_strided_slice %13 {offsets = [0, 0, 0], sizes = [2, 8, 8], strides = [1, 1, 1]} : vector<2x8x32xf32> to vector<2x8x8xf32>
    %19 = vector.extract_strided_slice %14 {offsets = [0, 0, 0], sizes = [2, 8, 8], strides = [1, 1, 1]} : vector<2x8x32xf32> to vector<2x8x8xf32>
    "tpu.trace_start"() <{level = 10 : i32, message = "bqd,bkd->bqk"}> : () -> ()
    %cst_9 = arith.constant dense<0.000000e+00> : vector<2x8x8xf32>
    %20 = tpu.matmul %17, %18, %cst_9 {dimension_numbers = #tpu.dot_dimension_numbers<[2], [2], [1], [1], [0, 0, 0, 1, 1, 1], [0], [0]>} : vector<2x8x8xf32>, vector<2x8x8xf32>, vector<2x8x8xf32> -> vector<2x8x8xf32>
    "tpu.trace_stop"() : () -> ()
    %cst_10 = arith.constant dense<0xFF800000> : vector<2x8xf32>
    %21 = vector.multi_reduction <maximumf>, %20, %cst_10 [2] : vector<2x8x8xf32> to vector<2x8xf32>
    %22 = vector.shape_cast %21 : vector<2x8xf32> to vector<2x8x1xf32>
    %23 = vector.broadcast %22 : vector<2x8x1xf32> to vector<2x8x8xf32>
    %24 = arith.subf %20, %23 : vector<2x8x8xf32>
    %25 = math.exp %24 : vector<2x8x8xf32>
    %cst_11 = arith.constant dense<0.000000e+00> : vector<2x8xf32>
    %26 = vector.multi_reduction <add>, %25, %cst_11 [2] : vector<2x8x8xf32> to vector<2x8xf32>
    %27 = vector.shape_cast %26 : vector<2x8xf32> to vector<2x8x1xf32>
    %28 = tpu.reciprocal %27 {approx = true} : vector<2x8x1xf32> -> vector<2x8x1xf32>
    %29 = vector.broadcast %28 : vector<2x8x1xf32> to vector<2x8x8xf32>
    %30 = arith.mulf %25, %29 : vector<2x8x8xf32>
    "tpu.trace_start"() <{level = 10 : i32, message = "bqk,bkd->bqd"}> : () -> ()
    %cst_12 = arith.constant dense<0.000000e+00> : vector<2x8x8xf32>
    %31 = tpu.matmul %30, %19, %cst_12 {dimension_numbers = #tpu.dot_dimension_numbers<[2], [1], [1], [2], [0, 0, 0, 1, 1, 2], [0], [0]>} : vector<2x8x8xf32>, vector<2x8x8xf32>, vector<2x8x8xf32> -> vector<2x8x8xf32>
    "tpu.trace_stop"() : () -> ()
    %32 = vector.extract_strided_slice %12 {offsets = [0, 0, 8], sizes = [2, 8, 8], strides = [1, 1, 1]} : vector<2x8x32xf32> to vector<2x8x8xf32>
    %cst_13 = arith.constant 0.353553385 : f32
    %33 = vector.broadcast %cst_13 : f32 to vector<2x8x8xf32>
    %34 = arith.mulf %32, %33 : vector<2x8x8xf32>
    %35 = vector.extract_strided_slice %13 {offsets = [0, 0, 8], sizes = [2, 8, 8], strides = [1, 1, 1]} : vector<2x8x32xf32> to vector<2x8x8xf32>
    %36 = vector.extract_strided_slice %14 {offsets = [0, 0, 8], sizes = [2, 8, 8], strides = [1, 1, 1]} : vector<2x8x32xf32> to vector<2x8x8xf32>
    "tpu.trace_start"() <{level = 10 : i32, message = "bqd,bkd->bqk"}> : () -> ()
    %cst_14 = arith.constant dense<0.000000e+00> : vector<2x8x8xf32>
    %37 = tpu.matmul %34, %35, %cst_14 {dimension_numbers = #tpu.dot_dimension_numbers<[2], [2], [1], [1], [0, 0, 0, 1, 1, 1], [0], [0]>} : vector<2x8x8xf32>, vector<2x8x8xf32>, vector<2x8x8xf32> -> vector<2x8x8xf32>
    "tpu.trace_stop"() : () -> ()
    %cst_15 = arith.constant dense<0xFF800000> : vector<2x8xf32>
    %38 = vector.multi_reduction <maximumf>, %37, %cst_15 [2] : vector<2x8x8xf32> to vector<2x8xf32>
    %39 = vector.shape_cast %38 : vector<2x8xf32> to vector<2x8x1xf32>
    %40 = vector.broadcast %39 : vector<2x8x1xf32> to vector<2x8x8xf32>
    %41 = arith.subf %37, %40 : vector<2x8x8xf32>
    %42 = math.exp %41 : vector<2x8x8xf32>
    %cst_16 = arith.constant dense<0.000000e+00> : vector<2x8xf32>
    %43 = vector.multi_reduction <add>, %42, %cst_16 [2] : vector<2x8x8xf32> to vector<2x8xf32>
    %44 = vector.shape_cast %43 : vector<2x8xf32> to vector<2x8x1xf32>
    %45 = tpu.reciprocal %44 {approx = true} : vector<2x8x1xf32> -> vector<2x8x1xf32>
    %46 = vector.broadcast %45 : vector<2x8x1xf32> to vector<2x8x8xf32>
    %47 = arith.mulf %42, %46 : vector<2x8x8xf32>
    "tpu.trace_start"() <{level = 10 : i32, message = "bqk,bkd->bqd"}> : () -> ()
    %cst_17 = arith.constant dense<0.000000e+00> : vector<2x8x8xf32>
    %48 = tpu.matmul %47, %36, %cst_17 {dimension_numbers = #tpu.dot_dimension_numbers<[2], [1], [1], [2], [0, 0, 0, 1, 1, 2], [0], [0]>} : vector<2x8x8xf32>, vector<2x8x8xf32>, vector<2x8x8xf32> -> vector<2x8x8xf32>
    "tpu.trace_stop"() : () -> ()
    %49 = vector.extract_strided_slice %12 {offsets = [0, 0, 16], sizes = [2, 8, 8], strides = [1, 1, 1]} : vector<2x8x32xf32> to vector<2x8x8xf32>
    %cst_18 = arith.constant 0.353553385 : f32
    %50 = vector.broadcast %cst_18 : f32 to vector<2x8x8xf32>
    %51 = arith.mulf %49, %50 : vector<2x8x8xf32>
    %52 = vector.extract_strided_slice %13 {offsets = [0, 0, 16], sizes = [2, 8, 8], strides = [1, 1, 1]} : vector<2x8x32xf32> to vector<2x8x8xf32>
    %53 = vector.extract_strided_slice %14 {offsets = [0, 0, 16], sizes = [2, 8, 8], strides = [1, 1, 1]} : vector<2x8x32xf32> to vector<2x8x8xf32>
    "tpu.trace_start"() <{level = 10 : i32, message = "bqd,bkd->bqk"}> : () -> ()
    %cst_19 = arith.constant dense<0.000000e+00> : vector<2x8x8xf32>
    %54 = tpu.matmul %51, %52, %cst_19 {dimension_numbers = #tpu.dot_dimension_numbers<[2], [2], [1], [1], [0, 0, 0, 1, 1, 1], [0], [0]>} : vector<2x8x8xf32>, vector<2x8x8xf32>, vector<2x8x8xf32> -> vector<2x8x8xf32>
    "tpu.trace_stop"() : () -> ()
    %cst_20 = arith.constant dense<0xFF800000> : vector<2x8xf32>
    %55 = vector.multi_reduction <maximumf>, %54, %cst_20 [2] : vector<2x8x8xf32> to vector<2x8xf32>
    %56 = vector.shape_cast %55 : vector<2x8xf32> to vector<2x8x1xf32>
    %57 = vector.broadcast %56 : vector<2x8x1xf32> to vector<2x8x8xf32>
    %58 = arith.subf %54, %57 : vector<2x8x8xf32>
    %59 = math.exp %58 : vector<2x8x8xf32>
    %cst_21 = arith.constant dense<0.000000e+00> : vector<2x8xf32>
    %60 = vector.multi_reduction <add>, %59, %cst_21 [2] : vector<2x8x8xf32> to vector<2x8xf32>
    %61 = vector.shape_cast %60 : vector<2x8xf32> to vector<2x8x1xf32>
    %62 = tpu.reciprocal %61 {approx = true} : vector<2x8x1xf32> -> vector<2x8x1xf32>
    %63 = vector.broadcast %62 : vector<2x8x1xf32> to vector<2x8x8xf32>
    %64 = arith.mulf %59, %63 : vector<2x8x8xf32>
    "tpu.trace_start"() <{level = 10 : i32, message = "bqk,bkd->bqd"}> : () -> ()
    %cst_22 = arith.constant dense<0.000000e+00> : vector<2x8x8xf32>
    %65 = tpu.matmul %64, %53, %cst_22 {dimension_numbers = #tpu.dot_dimension_numbers<[2], [1], [1], [2], [0, 0, 0, 1, 1, 2], [0], [0]>} : vector<2x8x8xf32>, vector<2x8x8xf32>, vector<2x8x8xf32> -> vector<2x8x8xf32>
    "tpu.trace_stop"() : () -> ()
    %66 = vector.extract_strided_slice %12 {offsets = [0, 0, 24], sizes = [2, 8, 8], strides = [1, 1, 1]} : vector<2x8x32xf32> to vector<2x8x8xf32>
    %cst_23 = arith.constant 0.353553385 : f32
    %67 = vector.broadcast %cst_23 : f32 to vector<2x8x8xf32>
    %68 = arith.mulf %66, %67 : vector<2x8x8xf32>
    %69 = vector.extract_strided_slice %13 {offsets = [0, 0, 24], sizes = [2, 8, 8], strides = [1, 1, 1]} : vector<2x8x32xf32> to vector<2x8x8xf32>
    %70 = vector.extract_strided_slice %14 {offsets = [0, 0, 24], sizes = [2, 8, 8], strides = [1, 1, 1]} : vector<2x8x32xf32> to vector<2x8x8xf32>
    "tpu.trace_start"() <{level = 10 : i32, message = "bqd,bkd->bqk"}> : () -> ()
    %cst_24 = arith.constant dense<0.000000e+00> : vector<2x8x8xf32>
    %71 = tpu.matmul %68, %69, %cst_24 {dimension_numbers = #tpu.dot_dimension_numbers<[2], [2], [1], [1], [0, 0, 0, 1, 1, 1], [0], [0]>} : vector<2x8x8xf32>, vector<2x8x8xf32>, vector<2x8x8xf32> -> vector<2x8x8xf32>
    "tpu.trace_stop"() : () -> ()
    %cst_25 = arith.constant dense<0xFF800000> : vector<2x8xf32>
    %72 = vector.multi_reduction <maximumf>, %71, %cst_25 [2] : vector<2x8x8xf32> to vector<2x8xf32>
    %73 = vector.shape_cast %72 : vector<2x8xf32> to vector<2x8x1xf32>
    %74 = vector.broadcast %73 : vector<2x8x1xf32> to vector<2x8x8xf32>
    %75 = arith.subf %71, %74 : vector<2x8x8xf32>
    %76 = math.exp %75 : vector<2x8x8xf32>
    %cst_26 = arith.constant dense<0.000000e+00> : vector<2x8xf32>
    %77 = vector.multi_reduction <add>, %76, %cst_26 [2] : vector<2x8x8xf32> to vector<2x8xf32>
    %78 = vector.shape_cast %77 : vector<2x8xf32> to vector<2x8x1xf32>
    %79 = tpu.reciprocal %78 {approx = true} : vector<2x8x1xf32> -> vector<2x8x1xf32>
    %80 = vector.broadcast %79 : vector<2x8x1xf32> to vector<2x8x8xf32>
    %81 = arith.mulf %76, %80 : vector<2x8x8xf32>
    "tpu.trace_start"() <{level = 10 : i32, message = "bqk,bkd->bqd"}> : () -> ()
    %cst_27 = arith.constant dense<0.000000e+00> : vector<2x8x8xf32>
    %82 = tpu.matmul %81, %70, %cst_27 {dimension_numbers = #tpu.dot_dimension_numbers<[2], [1], [1], [2], [0, 0, 0, 1, 1, 2], [0], [0]>} : vector<2x8x8xf32>, vector<2x8x8xf32>, vector<2x8x8xf32> -> vector<2x8x8xf32>
    "tpu.trace_stop"() : () -> ()
    %83 = tpu.concatenate %31, %48, %65, %82 in 2 : vector<2x8x8xf32>, vector<2x8x8xf32>, vector<2x8x8xf32>, vector<2x8x8xf32> -> vector<2x8x32xf32>
    %84 = vector.shape_cast %83 : vector<2x8x32xf32> to vector<16x32xf32>
    %c0_28 = arith.constant 0 : index
    %c0_29 = arith.constant 0 : index
    %c0_30 = arith.constant 0 : index
    %85 = vector.load %arg7[%c0_28, %c0_29, %c0_30] : memref<1x32x32xf32, #tpu.memory_space<vmem>>, vector<1x32x32xf32>
    %86 = vector.shape_cast %85 : vector<1x32x32xf32> to vector<32x32xf32>
    %cst_31 = arith.constant dense<0.000000e+00> : vector<16x32xf32>
    %87 = tpu.matmul %84, %86, %cst_31 {dimension_numbers = #tpu.dot_dimension_numbers<[1], [0], [0], [1], [0, 0, 1, 1], [], []>} : vector<16x32xf32>, vector<32x32xf32>, vector<16x32xf32> -> vector<16x32xf32>
    %c0_32 = arith.constant 0 : index
    %c0_33 = arith.constant 0 : index
    %c0_34 = arith.constant 0 : index
    %88 = vector.load %arg8[%c0_32, %c0_33, %c0_34] : memref<1x1x32xf32, #tpu.memory_space<vmem>>, vector<1x1x32xf32>
    %89 = vector.shape_cast %88 : vector<1x1x32xf32> to vector<1x32xf32>
    %90 = vector.broadcast %89 : vector<1x32xf32> to vector<16x32xf32>
    %91 = arith.addf %87, %90 : vector<16x32xf32>
    %92 = arith.addf %3, %91 : vector<16x32xf32>
    %cst_35 = arith.constant dense<0.000000e+00> : vector<16xf32>
    %93 = vector.multi_reduction <add>, %92, %cst_35 [1] : vector<16x32xf32> to vector<16xf32>
    %94 = vector.shape_cast %93 : vector<16xf32> to vector<16x1xf32>
    %cst_36 = arith.constant 3.200000e+01 : f32
    %95 = vector.broadcast %cst_36 : f32 to vector<16x1xf32>
    %96 = arith.divf %94, %95 : vector<16x1xf32>
    %97 = vector.broadcast %96 : vector<16x1xf32> to vector<16x32xf32>
    %98 = arith.subf %92, %97 : vector<16x32xf32>
    %99 = arith.mulf %98, %98 : vector<16x32xf32>
    %cst_37 = arith.constant dense<0.000000e+00> : vector<16xf32>
    %100 = vector.multi_reduction <add>, %99, %cst_37 [1] : vector<16x32xf32> to vector<16xf32>
    %101 = vector.shape_cast %100 : vector<16xf32> to vector<16x1xf32>
    %cst_38 = arith.constant 3.200000e+01 : f32
    %102 = vector.broadcast %cst_38 : f32 to vector<16x1xf32>
    %103 = arith.divf %101, %102 : vector<16x1xf32>
    %104 = vector.broadcast %96 : vector<16x1xf32> to vector<16x32xf32>
    %105 = arith.subf %92, %104 : vector<16x32xf32>
    %cst_39 = arith.constant 9.99999974E-6 : f32
    %106 = vector.broadcast %cst_39 : f32 to vector<16x1xf32>
    %107 = arith.addf %103, %106 : vector<16x1xf32>
    %108 = math.rsqrt %107 : vector<16x1xf32>
    %109 = vector.broadcast %108 : vector<16x1xf32> to vector<16x32xf32>
    %110 = arith.mulf %105, %109 : vector<16x32xf32>
    %c0_40 = arith.constant 0 : index
    %c0_41 = arith.constant 0 : index
    %c0_42 = arith.constant 0 : index
    %111 = vector.load %arg9[%c0_40, %c0_41, %c0_42] : memref<1x1x32xf32, #tpu.memory_space<vmem>>, vector<1x1x32xf32>
    %112 = vector.shape_cast %111 : vector<1x1x32xf32> to vector<1x32xf32>
    %113 = vector.broadcast %112 : vector<1x32xf32> to vector<16x32xf32>
    %114 = arith.mulf %110, %113 : vector<16x32xf32>
    %c0_43 = arith.constant 0 : index
    %c0_44 = arith.constant 0 : index
    %c0_45 = arith.constant 0 : index
    %115 = vector.load %arg10[%c0_43, %c0_44, %c0_45] : memref<1x1x32xf32, #tpu.memory_space<vmem>>, vector<1x1x32xf32>
    %116 = vector.shape_cast %115 : vector<1x1x32xf32> to vector<1x32xf32>
    %117 = vector.broadcast %116 : vector<1x32xf32> to vector<16x32xf32>
    %118 = arith.addf %114, %117 : vector<16x32xf32>
    %c0_46 = arith.constant 0 : index
    %c0_47 = arith.constant 0 : index
    %c0_48 = arith.constant 0 : index
    %119 = vector.load %arg11[%c0_46, %c0_47, %c0_48] : memref<1x32x2048xf32, #tpu.memory_space<vmem>>, vector<1x32x2048xf32>
    %120 = vector.shape_cast %119 : vector<1x32x2048xf32> to vector<32x2048xf32>
    %cst_49 = arith.constant dense<0.000000e+00> : vector<16x2048xf32>
    %121 = tpu.matmul %118, %120, %cst_49 {dimension_numbers = #tpu.dot_dimension_numbers<[1], [0], [0], [1], [0, 0, 1, 1], [], []>} : vector<16x32xf32>, vector<32x2048xf32>, vector<16x2048xf32> -> vector<16x2048xf32>
    %c0_50 = arith.constant 0 : index
    %c0_51 = arith.constant 0 : index
    %c0_52 = arith.constant 0 : index
    %122 = vector.load %arg12[%c0_50, %c0_51, %c0_52] : memref<1x1x2048xf32, #tpu.memory_space<vmem>>, vector<1x1x2048xf32>
    %123 = vector.shape_cast %122 : vector<1x1x2048xf32> to vector<1x2048xf32>
    %124 = vector.broadcast %123 : vector<1x2048xf32> to vector<16x2048xf32>
    %125 = arith.addf %121, %124 : vector<16x2048xf32>
    %cst_53 = arith.constant 0.000000e+00 : f32
    %126 = vector.broadcast %cst_53 : f32 to vector<16x2048xf32>
    %127 = arith.maximumf %125, %126 : vector<16x2048xf32>
    %c0_54 = arith.constant 0 : index
    %c0_55 = arith.constant 0 : index
    %c0_56 = arith.constant 0 : index
    %128 = vector.load %arg13[%c0_54, %c0_55, %c0_56] : memref<1x2048x32xf32, #tpu.memory_space<vmem>>, vector<1x2048x32xf32>
    %129 = vector.shape_cast %128 : vector<1x2048x32xf32> to vector<2048x32xf32>
    %cst_57 = arith.constant dense<0.000000e+00> : vector<16x32xf32>
    %130 = tpu.matmul %127, %129, %cst_57 {dimension_numbers = #tpu.dot_dimension_numbers<[1], [0], [0], [1], [0, 0, 1, 1], [], []>} : vector<16x2048xf32>, vector<2048x32xf32>, vector<16x32xf32> -> vector<16x32xf32>
    %c0_58 = arith.constant 0 : index
    %c0_59 = arith.constant 0 : index
    %c0_60 = arith.constant 0 : index
    %131 = vector.load %arg14[%c0_58, %c0_59, %c0_60] : memref<1x1x32xf32, #tpu.memory_space<vmem>>, vector<1x1x32xf32>
    %132 = vector.shape_cast %131 : vector<1x1x32xf32> to vector<1x32xf32>
    %133 = vector.broadcast %132 : vector<1x32xf32> to vector<16x32xf32>
    %134 = arith.addf %130, %133 : vector<16x32xf32>
    %135 = arith.addf %118, %134 : vector<16x32xf32>
    %cst_61 = arith.constant dense<0.000000e+00> : vector<16xf32>
    %136 = vector.multi_reduction <add>, %135, %cst_61 [1] : vector<16x32xf32> to vector<16xf32>
    %137 = vector.shape_cast %136 : vector<16xf32> to vector<16x1xf32>
    %cst_62 = arith.constant 3.200000e+01 : f32
    %138 = vector.broadcast %cst_62 : f32 to vector<16x1xf32>
    %139 = arith.divf %137, %138 : vector<16x1xf32>
    %140 = vector.broadcast %139 : vector<16x1xf32> to vector<16x32xf32>
    %141 = arith.subf %135, %140 : vector<16x32xf32>
    %142 = arith.mulf %141, %141 : vector<16x32xf32>
    %cst_63 = arith.constant dense<0.000000e+00> : vector<16xf32>
    %143 = vector.multi_reduction <add>, %142, %cst_63 [1] : vector<16x32xf32> to vector<16xf32>
    %144 = vector.shape_cast %143 : vector<16xf32> to vector<16x1xf32>
    %cst_64 = arith.constant 3.200000e+01 : f32
    %145 = vector.broadcast %cst_64 : f32 to vector<16x1xf32>
    %146 = arith.divf %144, %145 : vector<16x1xf32>
    %147 = vector.broadcast %139 : vector<16x1xf32> to vector<16x32xf32>
    %148 = arith.subf %135, %147 : vector<16x32xf32>
    %cst_65 = arith.constant 9.99999974E-6 : f32
    %149 = vector.broadcast %cst_65 : f32 to vector<16x1xf32>
    %150 = arith.addf %146, %149 : vector<16x1xf32>
    %151 = math.rsqrt %150 : vector<16x1xf32>
    %152 = vector.broadcast %151 : vector<16x1xf32> to vector<16x32xf32>
    %153 = arith.mulf %148, %152 : vector<16x32xf32>
    %c0_66 = arith.constant 0 : index
    %c0_67 = arith.constant 0 : index
    %c0_68 = arith.constant 0 : index
    %154 = vector.load %arg15[%c0_66, %c0_67, %c0_68] : memref<1x1x32xf32, #tpu.memory_space<vmem>>, vector<1x1x32xf32>
    %155 = vector.shape_cast %154 : vector<1x1x32xf32> to vector<1x32xf32>
    %156 = vector.broadcast %155 : vector<1x32xf32> to vector<16x32xf32>
    %157 = arith.mulf %153, %156 : vector<16x32xf32>
    %c0_69 = arith.constant 0 : index
    %c0_70 = arith.constant 0 : index
    %c0_71 = arith.constant 0 : index
    %158 = vector.load %arg16[%c0_69, %c0_70, %c0_71] : memref<1x1x32xf32, #tpu.memory_space<vmem>>, vector<1x1x32xf32>
    %159 = vector.shape_cast %158 : vector<1x1x32xf32> to vector<1x32xf32>
    %160 = vector.broadcast %159 : vector<1x32xf32> to vector<16x32xf32>
    %161 = arith.addf %157, %160 : vector<16x32xf32>
    %c0_72 = arith.constant 0 : index
    %c0_73 = arith.constant 0 : index
    %162 = vector.load %arg20[%c0_72, %c0_73] : memref<16x32xf32, #tpu.memory_space<vmem>>, vector<16x32xf32>
    tpu.vector_store %arg20[%c0_72, %c0_73], %161 {strides = array<i32>} : memref<16x32xf32, #tpu.memory_space<vmem>>, vector<16x32xf32>,
    %c1_i32 = arith.constant 1 : i32
    %163 = arith.cmpi eq, %arg0, %c1_i32 : i32
    %164 = arith.extui %163 : i1 to i32
    %c0_i32_74 = arith.constant 0 : i32
    %165 = arith.cmpi ne, %164, %c0_i32_74 : i32
    scf.if %165 {
      %166 = vector.shape_cast %161 : vector<16x32xf32> to vector<2x8x32xf32>
      %167 = vector.extract_strided_slice %166 {offsets = [0, 7, 0], sizes = [2, 1, 32], strides = [1, 1, 1]} : vector<2x8x32xf32> to vector<2x1x32xf32>
      %168 = vector.shape_cast %167 : vector<2x1x32xf32> to vector<2x32xf32>
      %c0_75 = arith.constant 0 : index
      %c0_76 = arith.constant 0 : index
      %169 = vector.load %arg17[%c0_75, %c0_76] : memref<32x1xf32, #tpu.memory_space<vmem>>, vector<32x1xf32>
      %cst_77 = arith.constant dense<0.000000e+00> : vector<2x1xf32>
      %170 = tpu.matmul %168, %169, %cst_77 {dimension_numbers = #tpu.dot_dimension_numbers<[1], [0], [0], [1], [0, 0, 1, 1], [], []>} : vector<2x32xf32>, vector<32x1xf32>, vector<2x1xf32> -> vector<2x1xf32>
      %c0_78 = arith.constant 0 : index
      %c0_79 = arith.constant 0 : index
      %171 = vector.load %arg18[%c0_78, %c0_79] : memref<1x1xf32, #tpu.memory_space<vmem>>, vector<1x1xf32>
      %172 = vector.broadcast %171 : vector<1x1xf32> to vector<2x1xf32>
      %173 = arith.addf %170, %172 : vector<2x1xf32>
      %c0_80 = arith.constant 0 : index
      %c0_81 = arith.constant 0 : index
      %174 = vector.load %arg19[%c0_80, %c0_81] : memref<2x1xf32, #tpu.memory_space<vmem>>, vector<2x1xf32>
      tpu.vector_store %arg19[%c0_80, %c0_81], %173 {strides = array<i32>} : memref<2x1xf32, #tpu.memory_space<vmem>>, vector<2x1xf32>,
    } else {
    }
    return
  }
  func.func @transform_0(%arg0: i32) -> (i32, i32) {
    %c0_i32 = arith.constant 0 : i32
    %c0_i32_0 = arith.constant 0 : i32
    %c0_i32_1 = arith.constant 0 : i32
    return %c0_i32, %c0_i32_0 : i32, i32
  }
  func.func @transform_1(%arg0: i32) -> (i32, i32) {
    %c0_i32 = arith.constant 0 : i32
    %c0_i32_0 = arith.constant 0 : i32
    %c0_i32_1 = arith.constant 0 : i32
    return %c0_i32, %c0_i32_0 : i32, i32
  }
  func.func @transform_2(%arg0: i32) -> (i32, i32) {
    %c0_i32 = arith.constant 0 : i32
    %c0_i32_0 = arith.constant 0 : i32
    %c0_i32_1 = arith.constant 0 : i32
    return %c0_i32, %c0_i32_0 : i32, i32
  }
  func.func @transform_3(%arg0: i32) -> (i32, i32) {
    %c0_i32 = arith.constant 0 : i32
    %c0_i32_0 = arith.constant 0 : i32
    %c0_i32_1 = arith.constant 0 : i32
    return %c0_i32, %c0_i32_0 : i32, i32
  }
  func.func @transform_4(%arg0: i32) -> (i32, i32, i32) {
    %c0_i32 = arith.constant 0 : i32
    %c0_i32_0 = arith.constant 0 : i32
    %c0_i32_1 = arith.constant 0 : i32
    return %arg0, %c0_i32, %c0_i32_0 : i32, i32, i32
  }
  func.func @transform_5(%arg0: i32) -> (i32, i32, i32) {
    %c0_i32 = arith.constant 0 : i32
    %c0_i32_0 = arith.constant 0 : i32
    %c0_i32_1 = arith.constant 0 : i32
    return %arg0, %c0_i32, %c0_i32_0 : i32, i32, i32
  }
  func.func @transform_6(%arg0: i32) -> (i32, i32, i32) {
    %c0_i32 = arith.constant 0 : i32
    %c0_i32_0 = arith.constant 0 : i32
    %c0_i32_1 = arith.constant 0 : i32
    return %arg0, %c0_i32, %c0_i32_0 : i32, i32, i32
  }
  func.func @transform_7(%arg0: i32) -> (i32, i32, i32) {
    %c0_i32 = arith.constant 0 : i32
    %c0_i32_0 = arith.constant 0 : i32
    %c0_i32_1 = arith.constant 0 : i32
    return %arg0, %c0_i32, %c0_i32_0 : i32, i32, i32
  }
  func.func @transform_8(%arg0: i32) -> (i32, i32, i32) {
    %c0_i32 = arith.constant 0 : i32
    %c0_i32_0 = arith.constant 0 : i32
    %c0_i32_1 = arith.constant 0 : i32
    return %arg0, %c0_i32, %c0_i32_0 : i32, i32, i32
  }
  func.func @transform_9(%arg0: i32) -> (i32, i32, i32) {
    %c0_i32 = arith.constant 0 : i32
    %c0_i32_0 = arith.constant 0 : i32
    %c0_i32_1 = arith.constant 0 : i32
    return %arg0, %c0_i32, %c0_i32_0 : i32, i32, i32
  }
  func.func @transform_10(%arg0: i32) -> (i32, i32, i32) {
    %c0_i32 = arith.constant 0 : i32
    %c0_i32_0 = arith.constant 0 : i32
    %c0_i32_1 = arith.constant 0 : i32
    return %arg0, %c0_i32, %c0_i32_0 : i32, i32, i32
  }
  func.func @transform_11(%arg0: i32) -> (i32, i32, i32) {
    %c0_i32 = arith.constant 0 : i32
    %c0_i32_0 = arith.constant 0 : i32
    %c0_i32_1 = arith.constant 0 : i32
    return %arg0, %c0_i32, %c0_i32_0 : i32, i32, i32
  }
  func.func @transform_12(%arg0: i32) -> (i32, i32, i32) {
    %c0_i32 = arith.constant 0 : i32
    %c0_i32_0 = arith.constant 0 : i32
    %c0_i32_1 = arith.constant 0 : i32
    return %arg0, %c0_i32, %c0_i32_0 : i32, i32, i32
  }
  func.func @transform_13(%arg0: i32) -> (i32, i32, i32) {
    %c0_i32 = arith.constant 0 : i32
    %c0_i32_0 = arith.constant 0 : i32
    %c0_i32_1 = arith.constant 0 : i32
    return %arg0, %c0_i32, %c0_i32_0 : i32, i32, i32
  }
  func.func @transform_14(%arg0: i32) -> (i32, i32, i32) {
    %c0_i32 = arith.constant 0 : i32
    %c0_i32_0 = arith.constant 0 : i32
    %c0_i32_1 = arith.constant 0 : i32
    return %arg0, %c0_i32, %c0_i32_0 : i32, i32, i32
  }
  func.func @transform_15(%arg0: i32) -> (i32, i32, i32) {
    %c0_i32 = arith.constant 0 : i32
    %c0_i32_0 = arith.constant 0 : i32
    %c0_i32_1 = arith.constant 0 : i32
    return %arg0, %c0_i32, %c0_i32_0 : i32, i32, i32
  }
  func.func @transform_16(%arg0: i32) -> (i32, i32) {
    %c0_i32 = arith.constant 0 : i32
    %c0_i32_0 = arith.constant 0 : i32
    %c0_i32_1 = arith.constant 0 : i32
    return %c0_i32, %c0_i32_0 : i32, i32
  }
  func.func @transform_17(%arg0: i32) -> (i32, i32) {
    %c0_i32 = arith.constant 0 : i32
    %c0_i32_0 = arith.constant 0 : i32
    %c0_i32_1 = arith.constant 0 : i32
    return %c0_i32, %c0_i32_0 : i32, i32
  }
  func.func @transform_18(%arg0: i32) -> (i32, i32) {
    %c0_i32 = arith.constant 0 : i32
    %c0_i32_0 = arith.constant 0 : i32
    %c0_i32_1 = arith.constant 0 : i32
    return %c0_i32, %c0_i32_0 : i32, i32
  }
}

</mosaic_0001>

<llo_original>
// kernel: tpu_custom_call.1
$region0: #{tpu_custom_call.1}
  #allocation0 [shape = 'u32[]', space=smem, size = 0x4, offset = 0x4, fixed_abs, tag = 'smem constant byte address 0x4 - core index']
  #allocation1 [shape = 'u32[144,128]{1,0:T(1,128)}', space=vmem, size = 0x12000, scoped, tag = 'internal scratch']
  #allocation2 [shape = 'f32[16,32]{1,0:T(8,128)}', space=vmem, size = 0x2000, scoped, tag = 'scratch operand']
  #allocation3 [shape = 'f32[1,1]{1,0:T(1,128)S(1)}', space=vmem, size = 0x200, scoped, tag = 'scoped memory for tpu_custom_call.1']
  %s0 = inlined_call_operand.vmem [shape: f32[16,4], index: 0, kind: input, shape index: {}]
  %s1 = inlined_call_operand.vmem [shape: f32[16,32], index: 1, kind: input, shape index: {}]
  %s2 = inlined_call_operand.vmem [shape: f32[4,32], index: 2, kind: input, shape index: {}]
  %s3 = inlined_call_operand.vmem [shape: f32[1,32], index: 3, kind: input, shape index: {}]
  %s4 = inlined_call_operand.vmem [shape: f32[2,32,96], index: 4, kind: input, shape index: {}]
  %s5 = inlined_call_operand.vmem [shape: f32[2,1,96], index: 5, kind: input, shape index: {}]
  %s6 = inlined_call_operand.vmem [shape: f32[2,32,32], index: 6, kind: input, shape index: {}]
  %s7 = inlined_call_operand.vmem [shape: f32[2,1,32], index: 7, kind: input, shape index: {}]
  %s8 = inlined_call_operand.vmem [shape: f32[2,1,32], index: 8, kind: input, shape index: {}]
  %s9 = inlined_call_operand.vmem [shape: f32[2,1,32], index: 9, kind: input, shape index: {}]
  %s10 = inlined_call_operand.vmem [shape: f32[2,32,2048], index: 10, kind: input, shape index: {}]
  %s11 = inlined_call_operand.vmem [shape: f32[2,1,2048], index: 11, kind: input, shape index: {}]
  %s12 = inlined_call_operand.vmem [shape: f32[2,2048,32], index: 12, kind: input, shape index: {}]
  %s13 = inlined_call_operand.vmem [shape: f32[2,1,32], index: 13, kind: input, shape index: {}]
  %s14 = inlined_call_operand.vmem [shape: f32[2,1,32], index: 14, kind: input, shape index: {}]
  %s15 = inlined_call_operand.vmem [shape: f32[2,1,32], index: 15, kind: input, shape index: {}]
  %s16 = inlined_call_operand.vmem [shape: f32[32,1], index: 16, kind: input, shape index: {}]
  %s17 = inlined_call_operand.<no memory space> [shape: f32[1,1], index: 17, kind: input, shape index: {}]
  %s18 = inlined_call_operand.vmem [shape: f32[2,1], index: 18, kind: output, shape index: {}]
  %s19 = sld [smem:[#allocation0]]
  $region113: #{tpu_custom_call.1} parent=0
    _
  %s21 = ssub.s32 1, %s19
  %s22 = scalar_select 0, %s21, %s19
  %v23 = vstv %s17
  %24 = vst [vmem:[#allocation3] sm:$0x1] %v23
  loop: start=0, step=1, limit=4
  $region2: #{tpu_custom_call.1} parent=0 // loop_pre_header
    _
  $region3: #{tpu_custom_call.1} parent=0 // loop_header
    %s26 = sphi 0, %s30
    %p27 = scmp.ge.s32.totalorder %s26, 4
    %s34 = sphi 0, %s34
    %s36 = sphi 0, %s34
    %s37 = sphi 0, %s36
    %s51 = sphi 0, %s37
    %s55 = sphi 0, %s55
    %s57 = sphi 0, %s55
    %s58 = sphi 0, %s57
    %s72 = sphi 0, %s58
    %s76 = sphi 0, %s76
    %s78 = sphi 0, %s76
    %s79 = sphi 0, %s78
    %s93 = sphi 0, %s79
    %s97 = sphi 0, %s97
    %s99 = sphi 0, %s97
    %s100 = sphi 0, %s99
    %s114 = sphi 0, %s100
    %s120 = sphi 0, %s122
    %s123 = sphi 0, %s120
    %s124 = sphi 0, %s123
    %s140 = sphi 0, %s124
    %s146 = sphi 0, %s148
    %s149 = sphi 0, %s146
    %s150 = sphi 0, %s149
    %s166 = sphi 0, %s150
    %s172 = sphi 0, %s174
    %s175 = sphi 0, %s172
    %s176 = sphi 0, %s175
    %s192 = sphi 0, %s176
    %s198 = sphi 0, %s200
    %s201 = sphi 0, %s198
    %s202 = sphi 0, %s201
    %s218 = sphi 0, %s202
    %s224 = sphi 0, %s226
    %s227 = sphi 0, %s224
    %s228 = sphi 0, %s227
    %s244 = sphi 0, %s228
    %s250 = sphi 0, %s252
    %s253 = sphi 0, %s250
    %s254 = sphi 0, %s253
    %s270 = sphi 0, %s254
    %s276 = sphi 0, %s278
    %s279 = sphi 0, %s276
    %s280 = sphi 0, %s279
    %s296 = sphi 0, %s280
    %s302 = sphi 0, %s304
    %s305 = sphi 0, %s302
    %s306 = sphi 0, %s305
    %s322 = sphi 0, %s306
    %s328 = sphi 0, %s330
    %s331 = sphi 0, %s328
    %s332 = sphi 0, %s331
    %s348 = sphi 0, %s332
    %s354 = sphi 0, %s356
    %s357 = sphi 0, %s354
    %s358 = sphi 0, %s357
    %s374 = sphi 0, %s358
    %s380 = sphi 0, %s382
    %s383 = sphi 0, %s380
    %s384 = sphi 0, %s383
    %s400 = sphi 0, %s384
    %s406 = sphi 0, %s408
    %s409 = sphi 0, %s406
    %s410 = sphi 0, %s409
    %s426 = sphi 0, %s410
    %s430 = sphi 0, %s430
    %s432 = sphi 0, %s430
    %s433 = sphi 0, %s432
    %s447 = sphi 0, %s433
    %s451 = sphi 0, %s451
    %s453 = sphi 0, %s451
    %s454 = sphi 0, %s453
    %s468 = sphi 0, %s454
    %s472 = sphi 0, %s472
    %s474 = sphi 0, %s472
    %s475 = sphi 0, %s474
    %s489 = sphi 0, %s475
  $region4: #{tpu_custom_call.1} parent=0 // loop_header_branch
    %29 = sbr.rel (%p27) target = $region8
  $region5: #{tpu_custom_call.1} parent=0 // loop_body
    %s31 = ssub.s32 %s26, 1
    %s32 = ssub.s32 %s26, 2
    %s33 = sadd.s32 %s26, 1
    %s35 = sadd.s32 %s34, 1
    %p38 = scmp.eq.s32.totalorder %s26, 1
    %p39 = scmp.ne.s32.totalorder %s34, %s36
    %p40 = scmp.eq.s32.totalorder %s26, 0
    %p41 = por %p39, %p40
    %p42 = scmp.ne.s32.totalorder %s34, %s36
    %p43 = scmp.eq.s32.totalorder %s31, 1
    %p44 = por %p42, %p43
    %p45 = scmp.ne.s32.totalorder %s36, %s37
    %p46 = scmp.eq.s32.totalorder %s31, 0
    %p47 = por %p45, %p46
    %p48 = scmp.ne.s32.totalorder %s36, %s37
    %p49 = scmp.eq.s32.totalorder %s32, 1
    %p50 = por %p48, %p49
    %p52 = scmp.ne.s32.totalorder %s37, %s51
    %p53 = scmp.eq.s32.totalorder %s32, 0
    %p54 = por %p52, %p53
    %s56 = sadd.s32 %s55, 1
    %p59 = scmp.eq.s32.totalorder %s26, 1
    %p60 = scmp.ne.s32.totalorder %s55, %s57
    %p61 = scmp.eq.s32.totalorder %s26, 0
    %p62 = por %p60, %p61
    %p63 = scmp.ne.s32.totalorder %s55, %s57
    %p64 = scmp.eq.s32.totalorder %s31, 1
    %p65 = por %p63, %p64
    %p66 = scmp.ne.s32.totalorder %s57, %s58
    %p67 = scmp.eq.s32.totalorder %s31, 0
    %p68 = por %p66, %p67
    %p69 = scmp.ne.s32.totalorder %s57, %s58
    %p70 = scmp.eq.s32.totalorder %s32, 1
    %p71 = por %p69, %p70
    %p73 = scmp.ne.s32.totalorder %s58, %s72
    %p74 = scmp.eq.s32.totalorder %s32, 0
    %p75 = por %p73, %p74
    %s77 = sadd.s32 %s76, 1
    %p80 = scmp.eq.s32.totalorder %s26, 1
    %p81 = scmp.ne.s32.totalorder %s76, %s78
    %p82 = scmp.eq.s32.totalorder %s26, 0
    %p83 = por %p81, %p82
    %p84 = scmp.ne.s32.totalorder %s76, %s78
    %p85 = scmp.eq.s32.totalorder %s31, 1
    %p86 = por %p84, %p85
    %p87 = scmp.ne.s32.totalorder %s78, %s79
    %p88 = scmp.eq.s32.totalorder %s31, 0
    %p89 = por %p87, %p88
    %p90 = scmp.ne.s32.totalorder %s78, %s79
    %p91 = scmp.eq.s32.totalorder %s32, 1
    %p92 = por %p90, %p91
    %p94 = scmp.ne.s32.totalorder %s79, %s93
    %p95 = scmp.eq.s32.totalorder %s32, 0
    %p96 = por %p94, %p95
    %s98 = sadd.s32 %s97, 1
    %p101 = scmp.eq.s32.totalorder %s26, 1
    %p102 = scmp.ne.s32.totalorder %s97, %s99
    %p103 = scmp.eq.s32.totalorder %s26, 0
    %p104 = por %p102, %p103
    %p105 = scmp.ne.s32.totalorder %s97, %s99
    %p106 = scmp.eq.s32.totalorder %s31, 1
    %p107 = por %p105, %p106
    %p108 = scmp.ne.s32.totalorder %s99, %s100
    %p109 = scmp.eq.s32.totalorder %s31, 0
    %p110 = por %p108, %p109
    %p111 = scmp.ne.s32.totalorder %s99, %s100
    %p112 = scmp.eq.s32.totalorder %s32, 1
    %p113 = por %p111, %p112
    %p115 = scmp.ne.s32.totalorder %s100, %s114
    %p116 = scmp.eq.s32.totalorder %s32, 0
    %p117 = por %p115, %p116
    %s118 = ssub.s32 %s26, %s33
    %p119 = scmp.eq.s32.totalorder %s118, 0
    %s121 = sadd.s32 %s120, 1
    %s122 = scalar_select %p119, %s120, %s121
    %p125 = pneg %p119
    %p126 = scmp.eq.s32.totalorder %s26, 1
    %p127 = por %p125, %p126
    %p128 = scmp.ne.s32.totalorder %s120, %s123
    %p129 = scmp.eq.s32.totalorder %s26, 0
    %p130 = por %p128, %p129
    %p131 = scmp.ne.s32.totalorder %s120, %s123
    %p132 = scmp.eq.s32.totalorder %s31, 1
    %p133 = por %p131, %p132
    %p134 = scmp.ne.s32.totalorder %s123, %s124
    %p135 = scmp.eq.s32.totalorder %s31, 0
    %p136 = por %p134, %p135
    %p137 = scmp.ne.s32.totalorder %s123, %s124
    %p138 = scmp.eq.s32.totalorder %s32, 1
    %p139 = por %p137, %p138
    %p141 = scmp.ne.s32.totalorder %s124, %s140
    %p142 = scmp.eq.s32.totalorder %s32, 0
    %p143 = por %p141, %p142
    %s144 = ssub.s32 %s26, %s33
    %p145 = scmp.eq.s32.totalorder %s144, 0
    %s147 = sadd.s32 %s146, 1
    %s148 = scalar_select %p145, %s146, %s147
    %p151 = pneg %p145
    %p152 = scmp.eq.s32.totalorder %s26, 1
    %p153 = por %p151, %p152
    %p154 = scmp.ne.s32.totalorder %s146, %s149
    %p155 = scmp.eq.s32.totalorder %s26, 0
    %p156 = por %p154, %p155
    %p157 = scmp.ne.s32.totalorder %s146, %s149
    %p158 = scmp.eq.s32.totalorder %s31, 1
    %p159 = por %p157, %p158
    %p160 = scmp.ne.s32.totalorder %s149, %s150
    %p161 = scmp.eq.s32.totalorder %s31, 0
    %p162 = por %p160, %p161
    %p163 = scmp.ne.s32.totalorder %s149, %s150
    %p164 = scmp.eq.s32.totalorder %s32, 1
    %p165 = por %p163, %p164
    %p167 = scmp.ne.s32.totalorder %s150, %s166
    %p168 = scmp.eq.s32.totalorder %s32, 0
    %p169 = por %p167, %p168
    %s170 = ssub.s32 %s26, %s33
    %p171 = scmp.eq.s32.totalorder %s170, 0
    %s173 = sadd.s32 %s172, 1
    %s174 = scalar_select %p171, %s172, %s173
    %p177 = pneg %p171
    %p178 = scmp.eq.s32.totalorder %s26, 1
    %p179 = por %p177, %p178
    %p180 = scmp.ne.s32.totalorder %s172, %s175
    %p181 = scmp.eq.s32.totalorder %s26, 0
    %p182 = por %p180, %p181
    %p183 = scmp.ne.s32.totalorder %s172, %s175
    %p184 = scmp.eq.s32.totalorder %s31, 1
    %p185 = por %p183, %p184
    %p186 = scmp.ne.s32.totalorder %s175, %s176
    %p187 = scmp.eq.s32.totalorder %s31, 0
    %p188 = por %p186, %p187
    %p189 = scmp.ne.s32.totalorder %s175, %s176
    %p190 = scmp.eq.s32.totalorder %s32, 1
    %p191 = por %p189, %p190
    %p193 = scmp.ne.s32.totalorder %s176, %s192
    %p194 = scmp.eq.s32.totalorder %s32, 0
    %p195 = por %p193, %p194
    %s196 = ssub.s32 %s26, %s33
    %p197 = scmp.eq.s32.totalorder %s196, 0
    %s199 = sadd.s32 %s198, 1
    %s200 = scalar_select %p197, %s198, %s199
    %p203 = pneg %p197
    %p204 = scmp.eq.s32.totalorder %s26, 1
    %p205 = por %p203, %p204
    %p206 = scmp.ne.s32.totalorder %s198, %s201
    %p207 = scmp.eq.s32.totalorder %s26, 0
    %p208 = por %p206, %p207
    %p209 = scmp.ne.s32.totalorder %s198, %s201
    %p210 = scmp.eq.s32.totalorder %s31, 1
    %p211 = por %p209, %p210
    %p212 = scmp.ne.s32.totalorder %s201, %s202
    %p213 = scmp.eq.s32.totalorder %s31, 0
    %p214 = por %p212, %p213
    %p215 = scmp.ne.s32.totalorder %s201, %s202
    %p216 = scmp.eq.s32.totalorder %s32, 1
    %p217 = por %p215, %p216
    %p219 = scmp.ne.s32.totalorder %s202, %s218
    %p220 = scmp.eq.s32.totalorder %s32, 0
    %p221 = por %p219, %p220
    %s222 = ssub.s32 %s26, %s33
    %p223 = scmp.eq.s32.totalorder %s222, 0
    %s225 = sadd.s32 %s224, 1
    %s226 = scalar_select %p223, %s224, %s225
    %p229 = pneg %p223
    %p230 = scmp.eq.s32.totalorder %s26, 1
    %p231 = por %p229, %p230
    %p232 = scmp.ne.s32.totalorder %s224, %s227
    %p233 = scmp.eq.s32.totalorder %s26, 0
    %p234 = por %p232, %p233
    %p235 = scmp.ne.s32.totalorder %s224, %s227
    %p236 = scmp.eq.s32.totalorder %s31, 1
    %p237 = por %p235, %p236
    %p238 = scmp.ne.s32.totalorder %s227, %s228
    %p239 = scmp.eq.s32.totalorder %s31, 0
    %p240 = por %p238, %p239
    %p241 = scmp.ne.s32.totalorder %s227, %s228
    %p242 = scmp.eq.s32.totalorder %s32, 1
    %p243 = por %p241, %p242
    %p245 = scmp.ne.s32.totalorder %s228, %s244
    %p246 = scmp.eq.s32.totalorder %s32, 0
    %p247 = por %p245, %p246
    %s248 = ssub.s32 %s26, %s33
    %p249 = scmp.eq.s32.totalorder %s248, 0
    %s251 = sadd.s32 %s250, 1
    %s252 = scalar_select %p249, %s250, %s251
    %p255 = pneg %p249
    %p256 = scmp.eq.s32.totalorder %s26, 1
    %p257 = por %p255, %p256
    %p258 = scmp.ne.s32.totalorder %s250, %s253
    %p259 = scmp.eq.s32.totalorder %s26, 0
    %p260 = por %p258, %p259
    %p261 = scmp.ne.s32.totalorder %s250, %s253
    %p262 = scmp.eq.s32.totalorder %s31, 1
    %p263 = por %p261, %p262
    %p264 = scmp.ne.s32.totalorder %s253, %s254
    %p265 = scmp.eq.s32.totalorder %s31, 0
    %p266 = por %p264, %p265
    %p267 = scmp.ne.s32.totalorder %s253, %s254
    %p268 = scmp.eq.s32.totalorder %s32, 1
    %p269 = por %p267, %p268
    %p271 = scmp.ne.s32.totalorder %s254, %s270
    %p272 = scmp.eq.s32.totalorder %s32, 0
    %p273 = por %p271, %p272
    %s274 = ssub.s32 %s26, %s33
    %p275 = scmp.eq.s32.totalorder %s274, 0
    %s277 = sadd.s32 %s276, 1
    %s278 = scalar_select %p275, %s276, %s277
    %p281 = pneg %p275
    %p282 = scmp.eq.s32.totalorder %s26, 1
    %p283 = por %p281, %p282
    %p284 = scmp.ne.s32.totalorder %s276, %s279
    %p285 = scmp.eq.s32.totalorder %s26, 0
    %p286 = por %p284, %p285
    %p287 = scmp.ne.s32.totalorder %s276, %s279
    %p288 = scmp.eq.s32.totalorder %s31, 1
    %p289 = por %p287, %p288
    %p290 = scmp.ne.s32.totalorder %s279, %s280
    %p291 = scmp.eq.s32.totalorder %s31, 0
    %p292 = por %p290, %p291
    %p293 = scmp.ne.s32.totalorder %s279, %s280
    %p294 = scmp.eq.s32.totalorder %s32, 1
    %p295 = por %p293, %p294
    %p297 = scmp.ne.s32.totalorder %s280, %s296
    %p298 = scmp.eq.s32.totalorder %s32, 0
    %p299 = por %p297, %p298
    %s300 = ssub.s32 %s26, %s33
    %p301 = scmp.eq.s32.totalorder %s300, 0
    %s303 = sadd.s32 %s302, 1
    %s304 = scalar_select %p301, %s302, %s303
    %p307 = pneg %p301
    %p308 = scmp.eq.s32.totalorder %s26, 1
    %p309 = por %p307, %p308
    %p310 = scmp.ne.s32.totalorder %s302, %s305
    %p311 = scmp.eq.s32.totalorder %s26, 0
    %p312 = por %p310, %p311
    %p313 = scmp.ne.s32.totalorder %s302, %s305
    %p314 = scmp.eq.s32.totalorder %s31, 1
    %p315 = por %p313, %p314
    %p316 = scmp.ne.s32.totalorder %s305, %s306
    %p317 = scmp.eq.s32.totalorder %s31, 0
    %p318 = por %p316, %p317
    %p319 = scmp.ne.s32.totalorder %s305, %s306
    %p320 = scmp.eq.s32.totalorder %s32, 1
    %p321 = por %p319, %p320
    %p323 = scmp.ne.s32.totalorder %s306, %s322
    %p324 = scmp.eq.s32.totalorder %s32, 0
    %p325 = por %p323, %p324
    %s326 = ssub.s32 %s26, %s33
    %p327 = scmp.eq.s32.totalorder %s326, 0
    %s329 = sadd.s32 %s328, 1
    %s330 = scalar_select %p327, %s328, %s329
    %p333 = pneg %p327
    %p334 = scmp.eq.s32.totalorder %s26, 1
    %p335 = por %p333, %p334
    %p336 = scmp.ne.s32.totalorder %s328, %s331
    %p337 = scmp.eq.s32.totalorder %s26, 0
    %p338 = por %p336, %p337
    %p339 = scmp.ne.s32.totalorder %s328, %s331
    %p340 = scmp.eq.s32.totalorder %s31, 1
    %p341 = por %p339, %p340
    %p342 = scmp.ne.s32.totalorder %s331, %s332
    %p343 = scmp.eq.s32.totalorder %s31, 0
    %p344 = por %p342, %p343
    %p345 = scmp.ne.s32.totalorder %s331, %s332
    %p346 = scmp.eq.s32.totalorder %s32, 1
    %p347 = por %p345, %p346
    %p349 = scmp.ne.s32.totalorder %s332, %s348
    %p350 = scmp.eq.s32.totalorder %s32, 0
    %p351 = por %p349, %p350
    %s352 = ssub.s32 %s26, %s33
    %p353 = scmp.eq.s32.totalorder %s352, 0
    %s355 = sadd.s32 %s354, 1
    %s356 = scalar_select %p353, %s354, %s355
    %p359 = pneg %p353
    %p360 = scmp.eq.s32.totalorder %s26, 1
    %p361 = por %p359, %p360
    %p362 = scmp.ne.s32.totalorder %s354, %s357
    %p363 = scmp.eq.s32.totalorder %s26, 0
    %p364 = por %p362, %p363
    %p365 = scmp.ne.s32.totalorder %s354, %s357
    %p366 = scmp.eq.s32.totalorder %s31, 1
    %p367 = por %p365, %p366
    %p368 = scmp.ne.s32.totalorder %s357, %s358
    %p369 = scmp.eq.s32.totalorder %s31, 0
    %p370 = por %p368, %p369
    %p371 = scmp.ne.s32.totalorder %s357, %s358
    %p372 = scmp.eq.s32.totalorder %s32, 1
    %p373 = por %p371, %p372
    %p375 = scmp.ne.s32.totalorder %s358, %s374
    %p376 = scmp.eq.s32.totalorder %s32, 0
    %p377 = por %p375, %p376
    %s378 = ssub.s32 %s26, %s33
    %p379 = scmp.eq.s32.totalorder %s378, 0
    %s381 = sadd.s32 %s380, 1
    %s382 = scalar_select %p379, %s380, %s381
    %p385 = pneg %p379
    %p386 = scmp.eq.s32.totalorder %s26, 1
    %p387 = por %p385, %p386
    %p388 = scmp.ne.s32.totalorder %s380, %s383
    %p389 = scmp.eq.s32.totalorder %s26, 0
    %p390 = por %p388, %p389
    %p391 = scmp.ne.s32.totalorder %s380, %s383
    %p392 = scmp.eq.s32.totalorder %s31, 1
    %p393 = por %p391, %p392
    %p394 = scmp.ne.s32.totalorder %s383, %s384
    %p395 = scmp.eq.s32.totalorder %s31, 0
    %p396 = por %p394, %p395
    %p397 = scmp.ne.s32.totalorder %s383, %s384
    %p398 = scmp.eq.s32.totalorder %s32, 1
    %p399 = por %p397, %p398
    %p401 = scmp.ne.s32.totalorder %s384, %s400
    %p402 = scmp.eq.s32.totalorder %s32, 0
    %p403 = por %p401, %p402
    %s404 = ssub.s32 %s26, %s33
    %p405 = scmp.eq.s32.totalorder %s404, 0
    %s407 = sadd.s32 %s406, 1
    %s408 = scalar_select %p405, %s406, %s407
    %p411 = pneg %p405
    %p412 = scmp.eq.s32.totalorder %s26, 1
    %p413 = por %p411, %p412
    %p414 = scmp.ne.s32.totalorder %s406, %s409
    %p415 = scmp.eq.s32.totalorder %s26, 0
    %p416 = por %p414, %p415
    %p417 = scmp.ne.s32.totalorder %s406, %s409
    %p418 = scmp.eq.s32.totalorder %s31, 1
    %p419 = por %p417, %p418
    %p420 = scmp.ne.s32.totalorder %s409, %s410
    %p421 = scmp.eq.s32.totalorder %s31, 0
    %p422 = por %p420, %p421
    %p423 = scmp.ne.s32.totalorder %s409, %s410
    %p424 = scmp.eq.s32.totalorder %s32, 1
    %p425 = por %p423, %p424
    %p427 = scmp.ne.s32.totalorder %s410, %s426
    %p428 = scmp.eq.s32.totalorder %s32, 0
    %p429 = por %p427, %p428
    %s431 = sadd.s32 %s430, 1
    %p434 = scmp.eq.s32.totalorder %s26, 1
    %p435 = scmp.ne.s32.totalorder %s430, %s432
    %p436 = scmp.eq.s32.totalorder %s26, 0
    %p437 = por %p435, %p436
    %p438 = scmp.ne.s32.totalorder %s430, %s432
    %p439 = scmp.eq.s32.totalorder %s31, 1
    %p440 = por %p438, %p439
    %p441 = scmp.ne.s32.totalorder %s432, %s433
    %p442 = scmp.eq.s32.totalorder %s31, 0
    %p443 = por %p441, %p442
    %p444 = scmp.ne.s32.totalorder %s432, %s433
    %p445 = scmp.eq.s32.totalorder %s32, 1
    %p446 = por %p444, %p445
    %p448 = scmp.ne.s32.totalorder %s433, %s447
    %p449 = scmp.eq.s32.totalorder %s32, 0
    %p450 = por %p448, %p449
    %s452 = sadd.s32 %s451, 1
    %p455 = scmp.eq.s32.totalorder %s26, 1
    %p456 = scmp.ne.s32.totalorder %s451, %s453
    %p457 = scmp.eq.s32.totalorder %s26, 0
    %p458 = por %p456, %p457
    %p459 = scmp.ne.s32.totalorder %s451, %s453
    %p460 = scmp.eq.s32.totalorder %s31, 1
    %p461 = por %p459, %p460
    %p462 = scmp.ne.s32.totalorder %s453, %s454
    %p463 = scmp.eq.s32.totalorder %s31, 0
    %p464 = por %p462, %p463
    %p465 = scmp.ne.s32.totalorder %s453, %s454
    %p466 = scmp.eq.s32.totalorder %s32, 1
    %p467 = por %p465, %p466
    %p469 = scmp.ne.s32.totalorder %s454, %s468
    %p470 = scmp.eq.s32.totalorder %s32, 0
    %p471 = por %p469, %p470
    %s473 = sadd.s32 %s472, 1
    %p476 = scmp.eq.s32.totalorder %s26, 1
    %p477 = scmp.ne.s32.totalorder %s472, %s474
    %p478 = scmp.eq.s32.totalorder %s26, 0
    %p479 = por %p477, %p478
    %p480 = scmp.ne.s32.totalorder %s472, %s474
    %p481 = scmp.eq.s32.totalorder %s31, 1
    %p482 = por %p480, %p481
    %p483 = scmp.ne.s32.totalorder %s474, %s475
    %p484 = scmp.eq.s32.totalorder %s31, 0
    %p485 = por %p483, %p484
    %p486 = scmp.ne.s32.totalorder %s474, %s475
    %p487 = scmp.eq.s32.totalorder %s32, 1
    %p488 = por %p486, %p487
    %p490 = scmp.ne.s32.totalorder %s475, %s489
    %p491 = scmp.eq.s32.totalorder %s32, 0
    %p492 = por %p490, %p491
    %p493 = scmp.le.s32.totalorder 1, %s26
    %p494 = scmp.lt.s32.totalorder %s26, 3
    %p495 = pnand %p493, %p494
    %p496 = pneg %p495
    // Predicated region
    $region9: #{tpu_custom_call.1} parent=5 // pred_check
      _
    $region10: #{tpu_custom_call.1} parent=5 // pred_check_branch
      %498 = sbr.rel (%p495) target = $region12
    $region11: #{tpu_custom_call.1} parent=5 // pred_region
      %s499 = ssub.s32 %s26, 1
      // Predicated region
      $region13: #{tpu_custom_call.1} parent=11 // pred_check
        %p500 = pneg %p47
      $region14: #{tpu_custom_call.1} parent=11 // pred_check_branch
        %502 = sbr.rel (%p500) target = $region16
      $region15: #{tpu_custom_call.1} parent=11 // pred_region
        _
      $region16: #{tpu_custom_call.1} parent=11 // pred_fallthru
        _
      // Predicated region
      $region17: #{tpu_custom_call.1} parent=11 // pred_check
        %p503 = pneg %p68
      $region18: #{tpu_custom_call.1} parent=11 // pred_check_branch
        %505 = sbr.rel (%p503) target = $region20
      $region19: #{tpu_custom_call.1} parent=11 // pred_region
        _
      $region20: #{tpu_custom_call.1} parent=11 // pred_fallthru
        _
      // Predicated region
      $region21: #{tpu_custom_call.1} parent=11 // pred_check
        %p506 = pneg %p89
      $region22: #{tpu_custom_call.1} parent=11 // pred_check_branch
        %508 = sbr.rel (%p506) target = $region24
      $region23: #{tpu_custom_call.1} parent=11 // pred_region
        _
      $region24: #{tpu_custom_call.1} parent=11 // pred_fallthru
        _
      // Predicated region
      $region25: #{tpu_custom_call.1} parent=11 // pred_check
        %p509 = pneg %p110
      $region26: #{tpu_custom_call.1} parent=11 // pred_check_branch
        %511 = sbr.rel (%p509) target = $region28
      $region27: #{tpu_custom_call.1} parent=11 // pred_region
        _
      $region28: #{tpu_custom_call.1} parent=11 // pred_fallthru
        _
      // Predicated region
      $region29: #{tpu_custom_call.1} parent=11 // pred_check
        %p512 = pneg %p443
      $region30: #{tpu_custom_call.1} parent=11 // pred_check_branch
        %514 = sbr.rel (%p512) target = $region32
      $region31: #{tpu_custom_call.1} parent=11 // pred_region
        _
      $region32: #{tpu_custom_call.1} parent=11 // pred_fallthru
        _
      // Predicated region
      $region33: #{tpu_custom_call.1} parent=11 // pred_check
        %p515 = pneg %p464
      $region34: #{tpu_custom_call.1} parent=11 // pred_check_branch
        %517 = sbr.rel (%p515) target = $region36
      $region35: #{tpu_custom_call.1} parent=11 // pred_region
        _
      $region36: #{tpu_custom_call.1} parent=11 // pred_fallthru
        _
    $region12: #{tpu_custom_call.1} parent=5 // pred_fallthru
      _
    %p518 = scmp.lt.s32.totalorder %s26, 2
    // Predicated region
    $region37: #{tpu_custom_call.1} parent=5 // pred_check
      %p519 = pneg %p518
    $region38: #{tpu_custom_call.1} parent=5 // pred_check_branch
      %521 = sbr.rel (%p519) target = $region40
    $region39: #{tpu_custom_call.1} parent=5 // pred_region
      // Predicated region
      $region41: #{tpu_custom_call.1} parent=39 // pred_check
        %p522 = pneg %p130
      $region42: #{tpu_custom_call.1} parent=39 // pred_check_branch
        %524 = sbr.rel (%p522) target = $region44
      $region43: #{tpu_custom_call.1} parent=39 // pred_region
        %p525 = scmp.lt.s32.totalorder %s26, 1
        %s526 = scalar_select %p525, %s26, 1
        %s527 = smul.addr %s526, 4
        %s528 = smul.addr %s527, 8
        %s529 = scalar_lea.vmem %s4, %s528
      $region44: #{tpu_custom_call.1} parent=39 // pred_fallthru
        _
      // Predicated region
      $region45: #{tpu_custom_call.1} parent=39 // pred_check
        %p530 = pneg %p156
      $region46: #{tpu_custom_call.1} parent=39 // pred_check_branch
        %532 = sbr.rel (%p530) target = $region48
      $region47: #{tpu_custom_call.1} parent=39 // pred_region
        %p533 = scmp.lt.s32.totalorder %s26, 1
        %s534 = scalar_select %p533, %s26, 1
        %s535 = scalar_lea.vmem %s5, %s534
      $region48: #{tpu_custom_call.1} parent=39 // pred_fallthru
        _
      // Predicated region
      $region49: #{tpu_custom_call.1} parent=39 // pred_check
        %p536 = pneg %p182
      $region50: #{tpu_custom_call.1} parent=39 // pred_check_branch
        %538 = sbr.rel (%p536) target = $region52
      $region51: #{tpu_custom_call.1} parent=39 // pred_region
        %p539 = scmp.lt.s32.totalorder %s26, 1
        %s540 = scalar_select %p539, %s26, 1
        %s541 = smul.addr %s540, 4
        %s542 = smul.addr %s541, 8
        %s543 = scalar_lea.vmem %s6, %s542
      $region52: #{tpu_custom_call.1} parent=39 // pred_fallthru
        _
      // Predicated region
      $region53: #{tpu_custom_call.1} parent=39 // pred_check
        %p544 = pneg %p208
      $region54: #{tpu_custom_call.1} parent=39 // pred_check_branch
        %546 = sbr.rel (%p544) target = $region56
      $region55: #{tpu_custom_call.1} parent=39 // pred_region
        %p547 = scmp.lt.s32.totalorder %s26, 1
        %s548 = scalar_select %p547, %s26, 1
        %s549 = scalar_lea.vmem %s7, %s548
      $region56: #{tpu_custom_call.1} parent=39 // pred_fallthru
        _
      // Predicated region
      $region57: #{tpu_custom_call.1} parent=39 // pred_check
        %p550 = pneg %p234
      $region58: #{tpu_custom_call.1} parent=39 // pred_check_branch
        %552 = sbr.rel (%p550) target = $region60
      $region59: #{tpu_custom_call.1} parent=39 // pred_region
        %p553 = scmp.lt.s32.totalorder %s26, 1
        %s554 = scalar_select %p553, %s26, 1
        %s555 = scalar_lea.vmem %s8, %s554
      $region60: #{tpu_custom_call.1} parent=39 // pred_fallthru
        _
      // Predicated region
      $region61: #{tpu_custom_call.1} parent=39 // pred_check
        %p556 = pneg %p260
      $region62: #{tpu_custom_call.1} parent=39 // pred_check_branch
        %558 = sbr.rel (%p556) target = $region64
      $region63: #{tpu_custom_call.1} parent=39 // pred_region
        %p559 = scmp.lt.s32.totalorder %s26, 1
        %s560 = scalar_select %p559, %s26, 1
        %s561 = scalar_lea.vmem %s9, %s560
      $region64: #{tpu_custom_call.1} parent=39 // pred_fallthru
        _
      // Predicated region
      $region65: #{tpu_custom_call.1} parent=39 // pred_check
        %p562 = pneg %p286
      $region66: #{tpu_custom_call.1} parent=39 // pred_check_branch
        %564 = sbr.rel (%p562) target = $region68
      $region67: #{tpu_custom_call.1} parent=39 // pred_region
        %p565 = scmp.lt.s32.totalorder %s26, 1
        %s566 = scalar_select %p565, %s26, 1
        %s567 = smul.addr %s566, 64
        %s568 = smul.addr %s567, 8
        %s569 = scalar_lea.vmem %s10, %s568
      $region68: #{tpu_custom_call.1} parent=39 // pred_fallthru
        _
      // Predicated region
      $region69: #{tpu_custom_call.1} parent=39 // pred_check
        %p570 = pneg %p312
      $region70: #{tpu_custom_call.1} parent=39 // pred_check_branch
        %572 = sbr.rel (%p570) target = $region72
      $region71: #{tpu_custom_call.1} parent=39 // pred_region
        %p573 = scmp.lt.s32.totalorder %s26, 1
        %s574 = scalar_select %p573, %s26, 1
        %s575 = smul.addr %s574, 16
        %s576 = scalar_lea.vmem %s11, %s575
      $region72: #{tpu_custom_call.1} parent=39 // pred_fallthru
        _
      // Predicated region
      $region73: #{tpu_custom_call.1} parent=39 // pred_check
        %p577 = pneg %p338
      $region74: #{tpu_custom_call.1} parent=39 // pred_check_branch
        %579 = sbr.rel (%p577) target = $region76
      $region75: #{tpu_custom_call.1} parent=39 // pred_region
        %p580 = scmp.lt.s32.totalorder %s26, 1
        %s581 = scalar_select %p580, %s26, 1
        %s582 = smul.addr %s581, 256
        %s583 = smul.addr %s582, 8
        %s584 = scalar_lea.vmem %s12, %s583
      $region76: #{tpu_custom_call.1} parent=39 // pred_fallthru
        _
      // Predicated region
      $region77: #{tpu_custom_call.1} parent=39 // pred_check
        %p585 = pneg %p364
      $region78: #{tpu_custom_call.1} parent=39 // pred_check_branch
        %587 = sbr.rel (%p585) target = $region80
      $region79: #{tpu_custom_call.1} parent=39 // pred_region
        %p588 = scmp.lt.s32.totalorder %s26, 1
        %s589 = scalar_select %p588, %s26, 1
        %s590 = scalar_lea.vmem %s13, %s589
      $region80: #{tpu_custom_call.1} parent=39 // pred_fallthru
        _
      // Predicated region
      $region81: #{tpu_custom_call.1} parent=39 // pred_check
        %p591 = pneg %p390
      $region82: #{tpu_custom_call.1} parent=39 // pred_check_branch
        %593 = sbr.rel (%p591) target = $region84
      $region83: #{tpu_custom_call.1} parent=39 // pred_region
        %p594 = scmp.lt.s32.totalorder %s26, 1
        %s595 = scalar_select %p594, %s26, 1
        %s596 = scalar_lea.vmem %s14, %s595
      $region84: #{tpu_custom_call.1} parent=39 // pred_fallthru
        _
      // Predicated region
      $region85: #{tpu_custom_call.1} parent=39 // pred_check
        %p597 = pneg %p416
      $region86: #{tpu_custom_call.1} parent=39 // pred_check_branch
        %599 = sbr.rel (%p597) target = $region88
      $region87: #{tpu_custom_call.1} parent=39 // pred_region
        %p600 = scmp.lt.s32.totalorder %s26, 1
        %s601 = scalar_select %p600, %s26, 1
        %s602 = scalar_lea.vmem %s15, %s601
      $region88: #{tpu_custom_call.1} parent=39 // pred_fallthru
        _
    $region40: #{tpu_custom_call.1} parent=5 // pred_fallthru
      _
    %p603 = scmp.le.s32.totalorder 1, %s26
    %p604 = scmp.lt.s32.totalorder %s26, 3
    %p605 = pnand %p603, %p604
    %p606 = pneg %p605
    // Predicated region
    $region89: #{tpu_custom_call.1} parent=5 // pred_check
      _
    $region90: #{tpu_custom_call.1} parent=5 // pred_check_branch
      %608 = sbr.rel (%p605) target = $region92
    $region91: #{tpu_custom_call.1} parent=5 // pred_region
      %s609 = ssub.s32 %s26, 1
      %p610 = pneg %p47
      %p611 = pneg %p44
      %p612 = pneg %p68
      %p613 = pneg %p65
      %p614 = pneg %p89
      %p615 = pneg %p86
      %p616 = pneg %p110
      %p617 = pneg %p107
      %p618 = scmp.lt.s32.totalorder %s31, 1
      %s619 = scalar_select %p618, %s31, 1
      %s620 = smul.addr %s619, 4
      %s621 = smul.addr %s620, 8
      %s622 = scalar_lea.vmem %s4, %s621
      %p623 = pneg %p136
      %p624 = pneg %p133
      %p625 = scmp.lt.s32.totalorder %s31, 1
      %s626 = scalar_select %p625, %s31, 1
      %s627 = scalar_lea.vmem %s5, %s626
      %p628 = pneg %p162
      %p629 = pneg %p159
      %p630 = scmp.lt.s32.totalorder %s31, 1
      %s631 = scalar_select %p630, %s31, 1
      %s632 = smul.addr %s631, 4
      %s633 = smul.addr %s632, 8
      %s634 = scalar_lea.vmem %s6, %s633
      %p635 = pneg %p188
      %p636 = pneg %p185
      %p637 = scmp.lt.s32.totalorder %s31, 1
      %s638 = scalar_select %p637, %s31, 1
      %s639 = scalar_lea.vmem %s7, %s638
      %p640 = pneg %p214
      %p641 = pneg %p211
      %p642 = scmp.lt.s32.totalorder %s31, 1
      %s643 = scalar_select %p642, %s31, 1
      %s644 = scalar_lea.vmem %s8, %s643
      %p645 = pneg %p240
      %p646 = pneg %p237
      %p647 = scmp.lt.s32.totalorder %s31, 1
      %s648 = scalar_select %p647, %s31, 1
      %s649 = scalar_lea.vmem %s9, %s648
      %p650 = pneg %p266
      %p651 = pneg %p263
      %p652 = scmp.lt.s32.totalorder %s31, 1
      %s653 = scalar_select %p652, %s31, 1
      %s654 = smul.addr %s653, 64
      %s655 = smul.addr %s654, 8
      %s656 = scalar_lea.vmem %s10, %s655
      %p657 = pneg %p292
      %p658 = pneg %p289
      %p659 = scmp.lt.s32.totalorder %s31, 1
      %s660 = scalar_select %p659, %s31, 1
      %s661 = smul.addr %s660, 16
      %s662 = scalar_lea.vmem %s11, %s661
      %p663 = pneg %p318
      %p664 = pneg %p315
      %p665 = scmp.lt.s32.totalorder %s31, 1
      %s666 = scalar_select %p665, %s31, 1
      %s667 = smul.addr %s666, 256
      %s668 = smul.addr %s667, 8
      %s669 = scalar_lea.vmem %s12, %s668
      %p670 = pneg %p344
      %p671 = pneg %p341
      %p672 = scmp.lt.s32.totalorder %s31, 1
      %s673 = scalar_select %p672, %s31, 1
      %s674 = scalar_lea.vmem %s13, %s673
      %p675 = pneg %p370
      %p676 = pneg %p367
      %p677 = scmp.lt.s32.totalorder %s31, 1
      %s678 = scalar_select %p677, %s31, 1
      %s679 = scalar_lea.vmem %s14, %s678
      %p680 = pneg %p396
      %p681 = pneg %p393
      %p682 = scmp.lt.s32.totalorder %s31, 1
      %s683 = scalar_select %p682, %s31, 1
      %s684 = scalar_lea.vmem %s15, %s683
      %p685 = pneg %p422
      %p686 = pneg %p419
      %p687 = pneg %p443
      %p688 = pneg %p440
      %p689 = pneg %p464
      %p690 = pneg %p461
      %p691 = pneg %p485
      %p692 = pneg %p482
      %p693 = scmp.lt.s32.totalorder %s31, 1
      %s694 = scalar_select %p693, %s31, 1
      %s695 = smul.addr %s694, 4
      %s696 = smul.addr %s695, 8
      %s697 = scalar_lea.vmem %s4, %s696
      %p698 = scmp.lt.s32.totalorder %s31, 1
      %s699 = scalar_select %p698, %s31, 1
      %s700 = scalar_lea.vmem %s5, %s699
      %p701 = scmp.lt.s32.totalorder %s31, 1
      %s702 = scalar_select %p701, %s31, 1
      %s703 = smul.addr %s702, 4
      %s704 = smul.addr %s703, 8
      %s705 = scalar_lea.vmem %s6, %s704
      %p706 = scmp.lt.s32.totalorder %s31, 1
      %s707 = scalar_select %p706, %s31, 1
      %s708 = scalar_lea.vmem %s7, %s707
      %p709 = scmp.lt.s32.totalorder %s31, 1
      %s710 = scalar_select %p709, %s31, 1
      %s711 = scalar_lea.vmem %s8, %s710
      %p712 = scmp.lt.s32.totalorder %s31, 1
      %s713 = scalar_select %p712, %s31, 1
      %s714 = scalar_lea.vmem %s9, %s713
      %p715 = scmp.lt.s32.totalorder %s31, 1
      %s716 = scalar_select %p715, %s31, 1
      %s717 = smul.addr %s716, 64
      %s718 = smul.addr %s717, 8
      %s719 = scalar_lea.vmem %s10, %s718
      %p720 = scmp.lt.s32.totalorder %s31, 1
      %s721 = scalar_select %p720, %s31, 1
      %s722 = smul.addr %s721, 16
      %s723 = scalar_lea.vmem %s11, %s722
      %p724 = scmp.lt.s32.totalorder %s31, 1
      %s725 = scalar_select %p724, %s31, 1
      %s726 = smul.addr %s725, 256
      %s727 = smul.addr %s726, 8
      %s728 = scalar_lea.vmem %s12, %s727
      %p729 = scmp.lt.s32.totalorder %s31, 1
      %s730 = scalar_select %p729, %s31, 1
      %s731 = scalar_lea.vmem %s13, %s730
      %p732 = scmp.lt.s32.totalorder %s31, 1
      %s733 = scalar_select %p732, %s31, 1
      %s734 = scalar_lea.vmem %s14, %s733
      %p735 = scmp.lt.s32.totalorder %s31, 1
      %s736 = scalar_select %p735, %s31, 1
      %s737 = scalar_lea.vmem %s15, %s736
      %p738 = scmp.eq.s32.totalorder %s31, 0
      // Predicated region
      $region93: #{tpu_custom_call.1} parent=91 // pred_check
        %p739 = pneg %p738
      $region94: #{tpu_custom_call.1} parent=91 // pred_check_branch
        %741 = sbr.rel (%p739) target = $region96
      $region95: #{tpu_custom_call.1} parent=91 // pred_region
        %v742 = vld [vmem:[%s0] sm:$0xff]
        %v743 = vld [vmem:[%s0 + $0x8] sm:$0xff]
        %v744 = vld [vmem:[%s2] sm:$0xf]
        %v745 = vld [vmem:[%s3] sm:$0x1]
        %v747 = vlaneseq
        %v748 = vshrl.u32 %v747, 7
        %v749 = vsub.s32 0, %v748
        %v750 = vrot.slane %v745, %v749
        %vm752 = vcmask 31744
        %v754 = vsel %vm752, %v742, 0
        %v757 = vsel %vm752, %v743, 0
        %vm759 = vcmask 1043456
        %v761 = vsel %vm759, %v744, 0
        %763 = vmatprep.subr.mxu0 0.0
        %764 = vmatpush1.msra.mxu0 %v761
        %765 = vmatprep.subr.mxu0 0.0
        %766 = vmatpush1.msra.mxu0 0.0
        %767 = vmatprep.subr.mxu0 0.0
        %768 = vmatpush1.msra.mxu0 0.0
        %769 = vmatprep.subr.mxu0 0.0
        %770 = vmatpush1.msra.mxu0 0.0
        %771 = vmatprep.subr.mxu0 0.0
        %772 = vmatpush1.msra.mxu0 0.0
        %773 = vmatprep.subr.mxu0 0.0
        %774 = vmatpush1.msra.mxu0 0.0
        %775 = vmatprep.subr.mxu0 0.0
        %776 = vmatpush1.msra.mxu0 0.0
        %777 = vmatprep.subr.mxu0 0.0
        %778 = vmatpush1.msra.mxu0 0.0
        %779 = vmatprep.subr.mxu0 0.0
        %780 = vmatpush1.msra.mxu0 0.0
        %781 = vmatprep.subr.mxu0 0.0
        %782 = vmatpush1.msra.mxu0 0.0
        %783 = vmatprep.subr.mxu0 0.0
        %784 = vmatpush1.msra.mxu0 0.0
        %785 = vmatprep.subr.mxu0 0.0
        %786 = vmatpush1.msra.mxu0 0.0
        %787 = vmatprep.subr.mxu0 0.0
        %788 = vmatpush1.msra.mxu0 0.0
        %789 = vmatprep.subr.mxu0 0.0
        %790 = vmatpush1.msra.mxu0 0.0
        %791 = vmatprep.subr.mxu0 0.0
        %792 = vmatpush1.msra.mxu0 0.0
        %793 = vmatprep.subr.mxu0 0.0
        %794 = vmatpush1.msra.mxu0 0.0
        %795 = vmatprep.subr.mxu0 0.0
        %796 = vmatpush1.msra.mxu0 0.0
        %797 = vmatprep.subr.mxu0 0.0
        %798 = vmatpush1.msra.mxu0 0.0
        %799 = vmatprep.subr.mxu0 0.0
        %800 = vmatpush1.msra.mxu0 0.0
        %801 = vmatprep.subr.mxu0 0.0
        %802 = vmatpush1.msra.mxu0 0.0
        %803 = vmatprep.subr.mxu0 0.0
        %804 = vmatpush1.msra.mxu0 0.0
        %805 = vmatprep.subr.mxu0 0.0
        %806 = vmatpush1.msra.mxu0 0.0
        %807 = vmatprep.subr.mxu0 0.0
        %808 = vmatpush1.msra.mxu0 0.0
        %809 = vmatprep.subr.mxu0 0.0
        %810 = vmatpush1.msra.mxu0 0.0
        %811 = vmatprep.subr.mxu0 0.0
        %812 = vmatpush1.msra.mxu0 0.0
        %813 = vmatprep.subr.mxu0 0.0
        %814 = vmatpush1.msra.mxu0 0.0
        %815 = vmatprep.subr.mxu0 0.0
        %816 = vmatpush1.msra.mxu0 0.0
        %817 = vmatprep.subr.mxu0 0.0
        %818 = vmatpush1.msra.mxu0 0.0
        %819 = vmatprep.subr.mxu0 0.0
        %820 = vmatpush1.msra.mxu0 0.0
        %821 = vmatprep.subr.mxu0 0.0
        %822 = vmatpush1.msra.mxu0 0.0
        %823 = vmatprep.subr.mxu0 0.0
        %824 = vmatpush1.msra.mxu0 0.0
        %825 = vmatprep.subr.mxu0 0.0
        %826 = vmatpush1.msra.mxu0 0.0
        %827 = vmatprep.mubr.f32.mxu0 0.0
        %828 = vmatmul.mubr.f32.gmra.mrb[0].mxu0 %v754
        %v829 = vpop.f32.mrb[0].mxu0
        %v830 = vadd.f32 %v750, %v829
        %v831 = vpop.f32.mrb[0].mxu0
        %832 = vmatprep.mubr.f32.mxu0 0.0
        %833 = vmatmul.mubr.f32.gmra.mrb[0].mxu0 %v757
        %v834 = vpop.f32.mrb[0].mxu0
        %v835 = vadd.f32 %v750, %v834
        %v836 = vpop.f32.mrb[0].mxu0
        %837 = vdwg.mxu0
        %v838 = vld [vmem:[%s1] sm:$0xff]
        %v839 = vld [vmem:[%s1 + $0x8] sm:$0xff]
        %v840 = vadd.f32 %v830, %v838
        %v841 = vadd.f32 %v835, %v839
        %vm842 = vcmask 261120
        %843 = vst.msk [vmem:[#allocation2] sm:$0xff] %vm842, %v840
        %844 = vst.msk [vmem:[#allocation2 + $0x8] sm:$0xff] %vm842, %v841
      $region96: #{tpu_custom_call.1} parent=91 // pred_fallthru
        _
      %v845 = vld [vmem:[#allocation2] sm:$0xff]
      %v846 = vld [vmem:[#allocation2 + $0x8] sm:$0xff]
      %v847 = vld [vmem:[%s697] sm:$0xff]
      %v848 = vld [vmem:[%s697 + $0x8] sm:$0xff]
      %v849 = vld [vmem:[%s697 + $0x10] sm:$0xff]
      %v850 = vld [vmem:[%s697 + $0x18] sm:$0xff]
      %v851 = vld [vmem:[%s700] sm:$0x1]
      %v853 = vlaneseq
      %v854 = vshrl.u32 %v853, 7
      %v855 = vsub.s32 0, %v854
      %v856 = vrot.slane %v851, %v855
      %vm858 = vcmask 261120
      %v860 = vsel %vm858, %v845, 0
      %v863 = vsel %vm858, %v846, 0
      %865 = vmatprep.subr.mxu0 0.0
      %866 = vmatpush1.msra.mxu0 %v847
      %867 = vmatprep.subr.mxu0 0.0
      %868 = vmatpush1.msra.mxu0 %v848
      %869 = vmatprep.subr.mxu0 0.0
      %870 = vmatpush1.msra.mxu0 %v849
      %871 = vmatprep.subr.mxu0 0.0
      %872 = vmatpush1.msra.mxu0 %v850
      %873 = vmatprep.subr.mxu0 0.0
      %874 = vmatpush1.msra.mxu0 0.0
      %875 = vmatprep.subr.mxu0 0.0
      %876 = vmatpush1.msra.mxu0 0.0
      %877 = vmatprep.subr.mxu0 0.0
      %878 = vmatpush1.msra.mxu0 0.0
      %879 = vmatprep.subr.mxu0 0.0
      %880 = vmatpush1.msra.mxu0 0.0
      %881 = vmatprep.subr.mxu0 0.0
      %882 = vmatpush1.msra.mxu0 0.0
      %883 = vmatprep.subr.mxu0 0.0
      %884 = vmatpush1.msra.mxu0 0.0
      %885 = vmatprep.subr.mxu0 0.0
      %886 = vmatpush1.msra.mxu0 0.0
      %887 = vmatprep.subr.mxu0 0.0
      %888 = vmatpush1.msra.mxu0 0.0
      %889 = vmatprep.subr.mxu0 0.0
      %890 = vmatpush1.msra.mxu0 0.0
      %891 = vmatprep.subr.mxu0 0.0
      %892 = vmatpush1.msra.mxu0 0.0
      %893 = vmatprep.subr.mxu0 0.0
      %894 = vmatpush1.msra.mxu0 0.0
      %895 = vmatprep.subr.mxu0 0.0
      %896 = vmatpush1.msra.mxu0 0.0
      %897 = vmatprep.subr.mxu0 0.0
      %898 = vmatpush1.msra.mxu0 0.0
      %899 = vmatprep.subr.mxu0 0.0
      %900 = vmatpush1.msra.mxu0 0.0
      %901 = vmatprep.subr.mxu0 0.0
      %902 = vmatpush1.msra.mxu0 0.0
      %903 = vmatprep.subr.mxu0 0.0
      %904 = vmatpush1.msra.mxu0 0.0
      %905 = vmatprep.subr.mxu0 0.0
      %906 = vmatpush1.msra.mxu0 0.0
      %907 = vmatprep.subr.mxu0 0.0
      %908 = vmatpush1.msra.mxu0 0.0
      %909 = vmatprep.subr.mxu0 0.0
      %910 = vmatpush1.msra.mxu0 0.0
      %911 = vmatprep.subr.mxu0 0.0
      %912 = vmatpush1.msra.mxu0 0.0
      %913 = vmatprep.subr.mxu0 0.0
      %914 = vmatpush1.msra.mxu0 0.0
      %915 = vmatprep.subr.mxu0 0.0
      %916 = vmatpush1.msra.mxu0 0.0
      %917 = vmatprep.subr.mxu0 0.0
      %918 = vmatpush1.msra.mxu0 0.0
      %919 = vmatprep.subr.mxu0 0.0
      %920 = vmatpush1.msra.mxu0 0.0
      %921 = vmatprep.subr.mxu0 0.0
      %922 = vmatpush1.msra.mxu0 0.0
      %923 = vmatprep.subr.mxu0 0.0
      %924 = vmatpush1.msra.mxu0 0.0
      %925 = vmatprep.subr.mxu0 0.0
      %926 = vmatpush1.msra.mxu0 0.0
      %927 = vmatprep.subr.mxu0 0.0
      %928 = vmatpush1.msra.mxu0 0.0
      %929 = vmatprep.mubr.f32.mxu0 0.0
      %930 = vmatmul.mubr.f32.gmra.mrb[0].mxu0 %v860
      %v931 = vpop.f32.mrb[0].mxu0
      %v932 = vadd.f32 %v856, %v931
      %v933 = vpop.f32.mrb[0].mxu0
      %934 = vmatprep.mubr.f32.mxu0 0.0
      %935 = vmatmul.mubr.f32.gmra.mrb[0].mxu0 %v863
      %v936 = vpop.f32.mrb[0].mxu0
      %v937 = vadd.f32 %v856, %v936
      %v938 = vpop.f32.mrb[0].mxu0
      %939 = vdwg.mxu0
      %v940 = vmul.f32 %v932, 0.35355338
      %v941 = vmul.f32 %v937, 0.35355338
      %943 = vrot.lane.b32.xlu0 %v932, 96
      %v944 = vpop.permute.xlu0 %943
      %vm945 = vcmask 64512
      %v947 = vsel %vm945, %v940, 0
      %v949 = vsel %vm945, %v944, 0
      %951 = vmatprep.subr.mxu0 0.0
      %952 = vmatpush1.xpose.msra.mxu0 %v949
      %953 = vmatprep.subr.mxu0 0.0
      %954 = vmatpush1.xpose.msra.mxu0 0.0
      %955 = vmatprep.subr.mxu0 0.0
      %956 = vmatpush1.xpose.msra.mxu0 0.0
      %957 = vmatprep.subr.mxu0 0.0
      %958 = vmatpush1.xpose.msra.mxu0 0.0
      %959 = vmatprep.subr.mxu0 0.0
      %960 = vmatpush1.xpose.msra.mxu0 0.0
      %961 = vmatprep.subr.mxu0 0.0
      %962 = vmatpush1.xpose.msra.mxu0 0.0
      %963 = vmatprep.subr.mxu0 0.0
      %964 = vmatpush1.xpose.msra.mxu0 0.0
      %965 = vmatprep.subr.mxu0 0.0
      %966 = vmatpush1.xpose.msra.mxu0 0.0
      %967 = vmatprep.subr.mxu0 0.0
      %968 = vmatpush1.xpose.msra.mxu0 0.0
      %969 = vmatprep.subr.mxu0 0.0
      %970 = vmatpush1.xpose.msra.mxu0 0.0
      %971 = vmatprep.subr.mxu0 0.0
      %972 = vmatpush1.xpose.msra.mxu0 0.0
      %973 = vmatprep.subr.mxu0 0.0
      %974 = vmatpush1.xpose.msra.mxu0 0.0
      %975 = vmatprep.subr.mxu0 0.0
      %976 = vmatpush1.xpose.msra.mxu0 0.0
      %977 = vmatprep.subr.mxu0 0.0
      %978 = vmatpush1.xpose.msra.mxu0 0.0
      %979 = vmatprep.subr.mxu0 0.0
      %980 = vmatpush1.xpose.msra.mxu0 0.0
      %981 = vmatprep.subr.mxu0 0.0
      %982 = vmatpush1.xpose.msra.mxu0 0.0
      %983 = vmatprep.subr.mxu0 0.0
      %984 = vmatpush1.xpose.msra.mxu0 0.0
      %985 = vmatprep.subr.mxu0 0.0
      %986 = vmatpush1.xpose.msra.mxu0 0.0
      %987 = vmatprep.subr.mxu0 0.0
      %988 = vmatpush1.xpose.msra.mxu0 0.0
      %989 = vmatprep.subr.mxu0 0.0
      %990 = vmatpush1.xpose.msra.mxu0 0.0
      %991 = vmatprep.subr.mxu0 0.0
      %992 = vmatpush1.xpose.msra.mxu0 0.0
      %993 = vmatprep.subr.mxu0 0.0
      %994 = vmatpush1.xpose.msra.mxu0 0.0
      %995 = vmatprep.subr.mxu0 0.0
      %996 = vmatpush1.xpose.msra.mxu0 0.0
      %997 = vmatprep.subr.mxu0 0.0
      %998 = vmatpush1.xpose.msra.mxu0 0.0
      %999 = vmatprep.subr.mxu0 0.0
      %1000 = vmatpush1.xpose.msra.mxu0 0.0
      %1001 = vmatprep.subr.mxu0 0.0
      %1002 = vmatpush1.xpose.msra.mxu0 0.0
      %1003 = vmatprep.subr.mxu0 0.0
      %1004 = vmatpush1.xpose.msra.mxu0 0.0
      %1005 = vmatprep.subr.mxu0 0.0
      %1006 = vmatpush1.xpose.msra.mxu0 0.0
      %1007 = vmatprep.subr.mxu0 0.0
      %1008 = vmatpush1.xpose.msra.mxu0 0.0
      %1009 = vmatprep.subr.mxu0 0.0
      %1010 = vmatpush1.xpose.msra.mxu0 0.0
      %1011 = vmatprep.subr.mxu0 0.0
      %1012 = vmatpush1.xpose.msra.mxu0 0.0
      %1013 = vmatprep.subr.mxu0 0.0
      %1014 = vmatpush1.xpose.msra.mxu0 0.0
      %1015 = vmatprep.mubr.f32.mxu0 0.0
      %1016 = vmatmul.mubr.f32.gmra.mrb[0].mxu0 %v947
      %v1017 = vpop.f32.mrb[0].mxu0
      %v1018 = vadd.f32 0.0, %v1017
      %v1019 = vpop.f32.mrb[0].mxu0
      %1020 = vdwg.mxu0
      %1022 = vrot.lane.b32.xlu0 %v937, 96
      %v1023 = vpop.permute.xlu0 %1022
      %v1025 = vsel %vm945, %v941, 0
      %v1027 = vsel %vm945, %v1023, 0
      %1029 = vmatprep.subr.mxu0 0.0
      %1030 = vmatpush1.xpose.msra.mxu0 %v1027
      %1031 = vmatprep.subr.mxu0 0.0
      %1032 = vmatpush1.xpose.msra.mxu0 0.0
      %1033 = vmatprep.subr.mxu0 0.0
      %1034 = vmatpush1.xpose.msra.mxu0 0.0
      %1035 = vmatprep.subr.mxu0 0.0
      %1036 = vmatpush1.xpose.msra.mxu0 0.0
      %1037 = vmatprep.subr.mxu0 0.0
      %1038 = vmatpush1.xpose.msra.mxu0 0.0
      %1039 = vmatprep.subr.mxu0 0.0
      %1040 = vmatpush1.xpose.msra.mxu0 0.0
      %1041 = vmatprep.subr.mxu0 0.0
      %1042 = vmatpush1.xpose.msra.mxu0 0.0
      %1043 = vmatprep.subr.mxu0 0.0
      %1044 = vmatpush1.xpose.msra.mxu0 0.0
      %1045 = vmatprep.subr.mxu0 0.0
      %1046 = vmatpush1.xpose.msra.mxu0 0.0
      %1047 = vmatprep.subr.mxu0 0.0
      %1048 = vmatpush1.xpose.msra.mxu0 0.0
      %1049 = vmatprep.subr.mxu0 0.0
      %1050 = vmatpush1.xpose.msra.mxu0 0.0
      %1051 = vmatprep.subr.mxu0 0.0
      %1052 = vmatpush1.xpose.msra.mxu0 0.0
      %1053 = vmatprep.subr.mxu0 0.0
      %1054 = vmatpush1.xpose.msra.mxu0 0.0
      %1055 = vmatprep.subr.mxu0 0.0
      %1056 = vmatpush1.xpose.msra.mxu0 0.0
      %1057 = vmatprep.subr.mxu0 0.0
      %1058 = vmatpush1.xpose.msra.mxu0 0.0
      %1059 = vmatprep.subr.mxu0 0.0
      %1060 = vmatpush1.xpose.msra.mxu0 0.0
      %1061 = vmatprep.subr.mxu0 0.0
      %1062 = vmatpush1.xpose.msra.mxu0 0.0
      %1063 = vmatprep.subr.mxu0 0.0
      %1064 = vmatpush1.xpose.msra.mxu0 0.0
      %1065 = vmatprep.subr.mxu0 0.0
      %1066 = vmatpush1.xpose.msra.mxu0 0.0
      %1067 = vmatprep.subr.mxu0 0.0
      %1068 = vmatpush1.xpose.msra.mxu0 0.0
      %1069 = vmatprep.subr.mxu0 0.0
      %1070 = vmatpush1.xpose.msra.mxu0 0.0
      %1071 = vmatprep.subr.mxu0 0.0
      %1072 = vmatpush1.xpose.msra.mxu0 0.0
      %1073 = vmatprep.subr.mxu0 0.0
      %1074 = vmatpush1.xpose.msra.mxu0 0.0
      %1075 = vmatprep.subr.mxu0 0.0
      %1076 = vmatpush1.xpose.msra.mxu0 0.0
      %1077 = vmatprep.subr.mxu0 0.0
      %1078 = vmatpush1.xpose.msra.mxu0 0.0
      %1079 = vmatprep.subr.mxu0 0.0
      %1080 = vmatpush1.xpose.msra.mxu0 0.0
      %1081 = vmatprep.subr.mxu0 0.0
      %1082 = vmatpush1.xpose.msra.mxu0 0.0
      %1083 = vmatprep.subr.mxu0 0.0
      %1084 = vmatpush1.xpose.msra.mxu0 0.0
      %1085 = vmatprep.subr.mxu0 0.0
      %1086 = vmatpush1.xpose.msra.mxu0 0.0
      %1087 = vmatprep.subr.mxu0 0.0
      %1088 = vmatpush1.xpose.msra.mxu0 0.0
      %1089 = vmatprep.subr.mxu0 0.0
      %1090 = vmatpush1.xpose.msra.mxu0 0.0
      %1091 = vmatprep.subr.mxu0 0.0
      %1092 = vmatpush1.xpose.msra.mxu0 0.0
      %1093 = vmatprep.mubr.f32.mxu0 0.0
      %1094 = vmatmul.mubr.f32.gmra.mrb[0].mxu0 %v1025
      %v1095 = vpop.f32.mrb[0].mxu0
      %v1096 = vadd.f32 0.0, %v1095
      %v1097 = vpop.f32.mrb[0].mxu0
      %1098 = vdwg.mxu0
      %v1099 = vsel %vm945, %v1018, -inf
      %1100 = vmax.xlane.f32.xlu0 %v1099
      %v1101 = vpop.xlane.xlu0 %1100
      %v1102 = vsel %vm945, %v1096, -inf
      %1103 = vmax.xlane.f32.xlu0 %v1102
      %v1104 = vpop.xlane.xlu0 %1103
      %v1105 = vsub.f32 %v1018, %v1101
      %v1106 = vsub.f32 %v1096, %v1104
      %v1107 = vmul.f32 %v1105, 1.442695
      %v1108 = vpow.pop %v1107
      %v1109 = vmul.f32 %v1106, 1.442695
      %v1110 = vpow.pop %v1109
      %v1111 = vsel %vm945, %v1108, 0.0
      %1112 = vadd.xlane.f32.xlu0 %v1111
      %v1113 = vpop.xlane.xlu0 %1112
      %v1114 = vsel %vm945, %v1110, 0.0
      %1115 = vadd.xlane.f32.xlu0 %v1114
      %v1116 = vpop.xlane.xlu0 %1115
      %v1117 = vrcp.pop %v1113
      %v1118 = vrcp.pop %v1116
      %v1119 = vmul.f32 %v1108, %v1117
      %v1120 = vmul.f32 %v1110, %v1118
      %1121 = vrot.lane.b32.xlu0 %v932, 64
      %v1122 = vpop.permute.xlu0 %1121
      %v1125 = vsel %vm945, %v1119, 0
      %1127 = vmatprep.subr.mxu0 0.0
      %1128 = vmatpush1.msra.mxu0 %v1122
      %1129 = vmatprep.subr.mxu0 0.0
      %1130 = vmatpush1.msra.mxu0 0.0
      %1131 = vmatprep.subr.mxu0 0.0
      %1132 = vmatpush1.msra.mxu0 0.0
      %1133 = vmatprep.subr.mxu0 0.0
      %1134 = vmatpush1.msra.mxu0 0.0
      %1135 = vmatprep.subr.mxu0 0.0
      %1136 = vmatpush1.msra.mxu0 0.0
      %1137 = vmatprep.subr.mxu0 0.0
      %1138 = vmatpush1.msra.mxu0 0.0
      %1139 = vmatprep.subr.mxu0 0.0
      %1140 = vmatpush1.msra.mxu0 0.0
      %1141 = vmatprep.subr.mxu0 0.0
      %1142 = vmatpush1.msra.mxu0 0.0
      %1143 = vmatprep.subr.mxu0 0.0
      %1144 = vmatpush1.msra.mxu0 0.0
      %1145 = vmatprep.subr.mxu0 0.0
      %1146 = vmatpush1.msra.mxu0 0.0
      %1147 = vmatprep.subr.mxu0 0.0
      %1148 = vmatpush1.msra.mxu0 0.0
      %1149 = vmatprep.subr.mxu0 0.0
      %1150 = vmatpush1.msra.mxu0 0.0
      %1151 = vmatprep.subr.mxu0 0.0
      %1152 = vmatpush1.msra.mxu0 0.0
      %1153 = vmatprep.subr.mxu0 0.0
      %1154 = vmatpush1.msra.mxu0 0.0
      %1155 = vmatprep.subr.mxu0 0.0
      %1156 = vmatpush1.msra.mxu0 0.0
      %1157 = vmatprep.subr.mxu0 0.0
      %1158 = vmatpush1.msra.mxu0 0.0
      %1159 = vmatprep.subr.mxu0 0.0
      %1160 = vmatpush1.msra.mxu0 0.0
      %1161 = vmatprep.subr.mxu0 0.0
      %1162 = vmatpush1.msra.mxu0 0.0
      %1163 = vmatprep.subr.mxu0 0.0
      %1164 = vmatpush1.msra.mxu0 0.0
      %1165 = vmatprep.subr.mxu0 0.0
      %1166 = vmatpush1.msra.mxu0 0.0
      %1167 = vmatprep.subr.mxu0 0.0
      %1168 = vmatpush1.msra.mxu0 0.0
      %1169 = vmatprep.subr.mxu0 0.0
      %1170 = vmatpush1.msra.mxu0 0.0
      %1171 = vmatprep.subr.mxu0 0.0
      %1172 = vmatpush1.msra.mxu0 0.0
      %1173 = vmatprep.subr.mxu0 0.0
      %1174 = vmatpush1.msra.mxu0 0.0
      %1175 = vmatprep.subr.mxu0 0.0
      %1176 = vmatpush1.msra.mxu0 0.0
      %1177 = vmatprep.subr.mxu0 0.0
      %1178 = vmatpush1.msra.mxu0 0.0
      %1179 = vmatprep.subr.mxu0 0.0
      %1180 = vmatpush1.msra.mxu0 0.0
      %1181 = vmatprep.subr.mxu0 0.0
      %1182 = vmatpush1.msra.mxu0 0.0
      %1183 = vmatprep.subr.mxu0 0.0
      %1184 = vmatpush1.msra.mxu0 0.0
      %1185 = vmatprep.subr.mxu0 0.0
      %1186 = vmatpush1.msra.mxu0 0.0
      %1187 = vmatprep.subr.mxu0 0.0
      %1188 = vmatpush1.msra.mxu0 0.0
      %1189 = vmatprep.subr.mxu0 0.0
      %1190 = vmatpush1.msra.mxu0 0.0
      %1191 = vmatprep.mubr.f32.mxu0 0.0
      %1192 = vmatmul.mubr.f32.gmra.mrb[0].mxu0 %v1125
      %v1193 = vpop.f32.mrb[0].mxu0
      %v1194 = vadd.f32 0.0, %v1193
      %v1195 = vpop.f32.mrb[0].mxu0
      %1196 = vdwg.mxu0
      %1197 = vrot.lane.b32.xlu0 %v937, 64
      %v1198 = vpop.permute.xlu0 %1197
      %v1201 = vsel %vm945, %v1120, 0
      %1203 = vmatprep.subr.mxu0 0.0
      %1204 = vmatpush1.msra.mxu0 %v1198
      %1205 = vmatprep.subr.mxu0 0.0
      %1206 = vmatpush1.msra.mxu0 0.0
      %1207 = vmatprep.subr.mxu0 0.0
      %1208 = vmatpush1.msra.mxu0 0.0
      %1209 = vmatprep.subr.mxu0 0.0
      %1210 = vmatpush1.msra.mxu0 0.0
      %1211 = vmatprep.subr.mxu0 0.0
      %1212 = vmatpush1.msra.mxu0 0.0
      %1213 = vmatprep.subr.mxu0 0.0
      %1214 = vmatpush1.msra.mxu0 0.0
      %1215 = vmatprep.subr.mxu0 0.0
      %1216 = vmatpush1.msra.mxu0 0.0
      %1217 = vmatprep.subr.mxu0 0.0
      %1218 = vmatpush1.msra.mxu0 0.0
      %1219 = vmatprep.subr.mxu0 0.0
      %1220 = vmatpush1.msra.mxu0 0.0
      %1221 = vmatprep.subr.mxu0 0.0
      %1222 = vmatpush1.msra.mxu0 0.0
      %1223 = vmatprep.subr.mxu0 0.0
      %1224 = vmatpush1.msra.mxu0 0.0
      %1225 = vmatprep.subr.mxu0 0.0
      %1226 = vmatpush1.msra.mxu0 0.0
      %1227 = vmatprep.subr.mxu0 0.0
      %1228 = vmatpush1.msra.mxu0 0.0
      %1229 = vmatprep.subr.mxu0 0.0
      %1230 = vmatpush1.msra.mxu0 0.0
      %1231 = vmatprep.subr.mxu0 0.0
      %1232 = vmatpush1.msra.mxu0 0.0
      %1233 = vmatprep.subr.mxu0 0.0
      %1234 = vmatpush1.msra.mxu0 0.0
      %1235 = vmatprep.subr.mxu0 0.0
      %1236 = vmatpush1.msra.mxu0 0.0
      %1237 = vmatprep.subr.mxu0 0.0
      %1238 = vmatpush1.msra.mxu0 0.0
      %1239 = vmatprep.subr.mxu0 0.0
      %1240 = vmatpush1.msra.mxu0 0.0
      %1241 = vmatprep.subr.mxu0 0.0
      %1242 = vmatpush1.msra.mxu0 0.0
      %1243 = vmatprep.subr.mxu0 0.0
      %1244 = vmatpush1.msra.mxu0 0.0
      %1245 = vmatprep.subr.mxu0 0.0
      %1246 = vmatpush1.msra.mxu0 0.0
      %1247 = vmatprep.subr.mxu0 0.0
      %1248 = vmatpush1.msra.mxu0 0.0
      %1249 = vmatprep.subr.mxu0 0.0
      %1250 = vmatpush1.msra.mxu0 0.0
      %1251 = vmatprep.subr.mxu0 0.0
      %1252 = vmatpush1.msra.mxu0 0.0
      %1253 = vmatprep.subr.mxu0 0.0
      %1254 = vmatpush1.msra.mxu0 0.0
      %1255 = vmatprep.subr.mxu0 0.0
      %1256 = vmatpush1.msra.mxu0 0.0
      %1257 = vmatprep.subr.mxu0 0.0
      %1258 = vmatpush1.msra.mxu0 0.0
      %1259 = vmatprep.subr.mxu0 0.0
      %1260 = vmatpush1.msra.mxu0 0.0
      %1261 = vmatprep.subr.mxu0 0.0
      %1262 = vmatpush1.msra.mxu0 0.0
      %1263 = vmatprep.subr.mxu0 0.0
      %1264 = vmatpush1.msra.mxu0 0.0
      %1265 = vmatprep.subr.mxu0 0.0
      %1266 = vmatpush1.msra.mxu0 0.0
      %1267 = vmatprep.mubr.f32.mxu0 0.0
      %1268 = vmatmul.mubr.f32.gmra.mrb[0].mxu0 %v1201
      %v1269 = vpop.f32.mrb[0].mxu0
      %v1270 = vadd.f32 0.0, %v1269
      %v1271 = vpop.f32.mrb[0].mxu0
      %1272 = vdwg.mxu0
      %1273 = vrot.lane.b32.xlu0 %v940, 120
      %v1274 = vpop.permute.xlu0 %1273
      %1275 = vrot.lane.b32.xlu0 %v932, 88
      %v1276 = vpop.permute.xlu0 %1275
      %v1277 = vsel %vm945, %v1274, 0
      %v1279 = vsel %vm945, %v1276, 0
      %1281 = vmatprep.subr.mxu0 0.0
      %1282 = vmatpush1.xpose.msra.mxu0 %v1279
      %1283 = vmatprep.subr.mxu0 0.0
      %1284 = vmatpush1.xpose.msra.mxu0 0.0
      %1285 = vmatprep.subr.mxu0 0.0
      %1286 = vmatpush1.xpose.msra.mxu0 0.0
      %1287 = vmatprep.subr.mxu0 0.0
      %1288 = vmatpush1.xpose.msra.mxu0 0.0
      %1289 = vmatprep.subr.mxu0 0.0
      %1290 = vmatpush1.xpose.msra.mxu0 0.0
      %1291 = vmatprep.subr.mxu0 0.0
      %1292 = vmatpush1.xpose.msra.mxu0 0.0
      %1293 = vmatprep.subr.mxu0 0.0
      %1294 = vmatpush1.xpose.msra.mxu0 0.0
      %1295 = vmatprep.subr.mxu0 0.0
      %1296 = vmatpush1.xpose.msra.mxu0 0.0
      %1297 = vmatprep.subr.mxu0 0.0
      %1298 = vmatpush1.xpose.msra.mxu0 0.0
      %1299 = vmatprep.subr.mxu0 0.0
      %1300 = vmatpush1.xpose.msra.mxu0 0.0
      %1301 = vmatprep.subr.mxu0 0.0
      %1302 = vmatpush1.xpose.msra.mxu0 0.0
      %1303 = vmatprep.subr.mxu0 0.0
      %1304 = vmatpush1.xpose.msra.mxu0 0.0
      %1305 = vmatprep.subr.mxu0 0.0
      %1306 = vmatpush1.xpose.msra.mxu0 0.0
      %1307 = vmatprep.subr.mxu0 0.0
      %1308 = vmatpush1.xpose.msra.mxu0 0.0
      %1309 = vmatprep.subr.mxu0 0.0
      %1310 = vmatpush1.xpose.msra.mxu0 0.0
      %1311 = vmatprep.subr.mxu0 0.0
      %1312 = vmatpush1.xpose.msra.mxu0 0.0
      %1313 = vmatprep.subr.mxu0 0.0
      %1314 = vmatpush1.xpose.msra.mxu0 0.0
      %1315 = vmatprep.subr.mxu0 0.0
      %1316 = vmatpush1.xpose.msra.mxu0 0.0
      %1317 = vmatprep.subr.mxu0 0.0
      %1318 = vmatpush1.xpose.msra.mxu0 0.0
      %1319 = vmatprep.subr.mxu0 0.0
      %1320 = vmatpush1.xpose.msra.mxu0 0.0
      %1321 = vmatprep.subr.mxu0 0.0
      %1322 = vmatpush1.xpose.msra.mxu0 0.0
      %1323 = vmatprep.subr.mxu0 0.0
      %1324 = vmatpush1.xpose.msra.mxu0 0.0
      %1325 = vmatprep.subr.mxu0 0.0
      %1326 = vmatpush1.xpose.msra.mxu0 0.0
      %1327 = vmatprep.subr.mxu0 0.0
      %1328 = vmatpush1.xpose.msra.mxu0 0.0
      %1329 = vmatprep.subr.mxu0 0.0
      %1330 = vmatpush1.xpose.msra.mxu0 0.0
      %1331 = vmatprep.subr.mxu0 0.0
      %1332 = vmatpush1.xpose.msra.mxu0 0.0
      %1333 = vmatprep.subr.mxu0 0.0
      %1334 = vmatpush1.xpose.msra.mxu0 0.0
      %1335 = vmatprep.subr.mxu0 0.0
      %1336 = vmatpush1.xpose.msra.mxu0 0.0
      %1337 = vmatprep.subr.mxu0 0.0
      %1338 = vmatpush1.xpose.msra.mxu0 0.0
      %1339 = vmatprep.subr.mxu0 0.0
      %1340 = vmatpush1.xpose.msra.mxu0 0.0
      %1341 = vmatprep.subr.mxu0 0.0
      %1342 = vmatpush1.xpose.msra.mxu0 0.0
      %1343 = vmatprep.subr.mxu0 0.0
      %1344 = vmatpush1.xpose.msra.mxu0 0.0
      %1345 = vmatprep.mubr.f32.mxu0 0.0
      %1346 = vmatmul.mubr.f32.gmra.mrb[0].mxu0 %v1277
      %v1347 = vpop.f32.mrb[0].mxu0
      %v1348 = vadd.f32 0.0, %v1347
      %v1349 = vpop.f32.mrb[0].mxu0
      %1350 = vdwg.mxu0
      %1351 = vrot.lane.b32.xlu0 %v941, 120
      %v1352 = vpop.permute.xlu0 %1351
      %1353 = vrot.lane.b32.xlu0 %v937, 88
      %v1354 = vpop.permute.xlu0 %1353
      %v1355 = vsel %vm945, %v1352, 0
      %v1357 = vsel %vm945, %v1354, 0
      %1359 = vmatprep.subr.mxu0 0.0
      %1360 = vmatpush1.xpose.msra.mxu0 %v1357
      %1361 = vmatprep.subr.mxu0 0.0
      %1362 = vmatpush1.xpose.msra.mxu0 0.0
      %1363 = vmatprep.subr.mxu0 0.0
      %1364 = vmatpush1.xpose.msra.mxu0 0.0
      %1365 = vmatprep.subr.mxu0 0.0
      %1366 = vmatpush1.xpose.msra.mxu0 0.0
      %1367 = vmatprep.subr.mxu0 0.0
      %1368 = vmatpush1.xpose.msra.mxu0 0.0
      %1369 = vmatprep.subr.mxu0 0.0
      %1370 = vmatpush1.xpose.msra.mxu0 0.0
      %1371 = vmatprep.subr.mxu0 0.0
      %1372 = vmatpush1.xpose.msra.mxu0 0.0
      %1373 = vmatprep.subr.mxu0 0.0
      %1374 = vmatpush1.xpose.msra.mxu0 0.0
      %1375 = vmatprep.subr.mxu0 0.0
      %1376 = vmatpush1.xpose.msra.mxu0 0.0
      %1377 = vmatprep.subr.mxu0 0.0
      %1378 = vmatpush1.xpose.msra.mxu0 0.0
      %1379 = vmatprep.subr.mxu0 0.0
      %1380 = vmatpush1.xpose.msra.mxu0 0.0
      %1381 = vmatprep.subr.mxu0 0.0
      %1382 = vmatpush1.xpose.msra.mxu0 0.0
      %1383 = vmatprep.subr.mxu0 0.0
      %1384 = vmatpush1.xpose.msra.mxu0 0.0
      %1385 = vmatprep.subr.mxu0 0.0
      %1386 = vmatpush1.xpose.msra.mxu0 0.0
      %1387 = vmatprep.subr.mxu0 0.0
      %1388 = vmatpush1.xpose.msra.mxu0 0.0
      %1389 = vmatprep.subr.mxu0 0.0
      %1390 = vmatpush1.xpose.msra.mxu0 0.0
      %1391 = vmatprep.subr.mxu0 0.0
      %1392 = vmatpush1.xpose.msra.mxu0 0.0
      %1393 = vmatprep.subr.mxu0 0.0
      %1394 = vmatpush1.xpose.msra.mxu0 0.0
      %1395 = vmatprep.subr.mxu0 0.0
      %1396 = vmatpush1.xpose.msra.mxu0 0.0
      %1397 = vmatprep.subr.mxu0 0.0
      %1398 = vmatpush1.xpose.msra.mxu0 0.0
      %1399 = vmatprep.subr.mxu0 0.0
      %1400 = vmatpush1.xpose.msra.mxu0 0.0
      %1401 = vmatprep.subr.mxu0 0.0
      %1402 = vmatpush1.xpose.msra.mxu0 0.0
      %1403 = vmatprep.subr.mxu0 0.0
      %1404 = vmatpush1.xpose.msra.mxu0 0.0
      %1405 = vmatprep.subr.mxu0 0.0
      %1406 = vmatpush1.xpose.msra.mxu0 0.0
      %1407 = vmatprep.subr.mxu0 0.0
      %1408 = vmatpush1.xpose.msra.mxu0 0.0
      %1409 = vmatprep.subr.mxu0 0.0
      %1410 = vmatpush1.xpose.msra.mxu0 0.0
      %1411 = vmatprep.subr.mxu0 0.0
      %1412 = vmatpush1.xpose.msra.mxu0 0.0
      %1413 = vmatprep.subr.mxu0 0.0
      %1414 = vmatpush1.xpose.msra.mxu0 0.0
      %1415 = vmatprep.subr.mxu0 0.0
      %1416 = vmatpush1.xpose.msra.mxu0 0.0
      %1417 = vmatprep.subr.mxu0 0.0
      %1418 = vmatpush1.xpose.msra.mxu0 0.0
      %1419 = vmatprep.subr.mxu0 0.0
      %1420 = vmatpush1.xpose.msra.mxu0 0.0
      %1421 = vmatprep.subr.mxu0 0.0
      %1422 = vmatpush1.xpose.msra.mxu0 0.0
      %1423 = vmatprep.mubr.f32.mxu0 0.0
      %1424 = vmatmul.mubr.f32.gmra.mrb[0].mxu0 %v1355
      %v1425 = vpop.f32.mrb[0].mxu0
      %v1426 = vadd.f32 0.0, %v1425
      %v1427 = vpop.f32.mrb[0].mxu0
      %1428 = vdwg.mxu0
      %v1429 = vsel %vm945, %v1348, -inf
      %1430 = vmax.xlane.f32.xlu0 %v1429
      %v1431 = vpop.xlane.xlu0 %1430
      %v1432 = vsel %vm945, %v1426, -inf
      %1433 = vmax.xlane.f32.xlu0 %v1432
      %v1434 = vpop.xlane.xlu0 %1433
      %v1435 = vsub.f32 %v1348, %v1431
      %v1436 = vsub.f32 %v1426, %v1434
      %v1437 = vmul.f32 %v1435, 1.442695
      %v1438 = vpow.pop %v1437
      %v1439 = vmul.f32 %v1436, 1.442695
      %v1440 = vpow.pop %v1439
      %v1441 = vsel %vm945, %v1438, 0.0
      %1442 = vadd.xlane.f32.xlu0 %v1441
      %v1443 = vpop.xlane.xlu0 %1442
      %v1444 = vsel %vm945, %v1440, 0.0
      %1445 = vadd.xlane.f32.xlu0 %v1444
      %v1446 = vpop.xlane.xlu0 %1445
      %v1447 = vrcp.pop %v1443
      %v1448 = vrcp.pop %v1446
      %v1449 = vmul.f32 %v1438, %v1447
      %v1450 = vmul.f32 %v1440, %v1448
      %1451 = vrot.lane.b32.xlu0 %v932, 56
      %v1452 = vpop.permute.xlu0 %1451
      %v1455 = vsel %vm945, %v1449, 0
      %1457 = vmatprep.subr.mxu0 0.0
      %1458 = vmatpush1.msra.mxu0 %v1452
      %1459 = vmatprep.subr.mxu0 0.0
      %1460 = vmatpush1.msra.mxu0 0.0
      %1461 = vmatprep.subr.mxu0 0.0
      %1462 = vmatpush1.msra.mxu0 0.0
      %1463 = vmatprep.subr.mxu0 0.0
      %1464 = vmatpush1.msra.mxu0 0.0
      %1465 = vmatprep.subr.mxu0 0.0
      %1466 = vmatpush1.msra.mxu0 0.0
      %1467 = vmatprep.subr.mxu0 0.0
      %1468 = vmatpush1.msra.mxu0 0.0
      %1469 = vmatprep.subr.mxu0 0.0
      %1470 = vmatpush1.msra.mxu0 0.0
      %1471 = vmatprep.subr.mxu0 0.0
      %1472 = vmatpush1.msra.mxu0 0.0
      %1473 = vmatprep.subr.mxu0 0.0
      %1474 = vmatpush1.msra.mxu0 0.0
      %1475 = vmatprep.subr.mxu0 0.0
      %1476 = vmatpush1.msra.mxu0 0.0
      %1477 = vmatprep.subr.mxu0 0.0
      %1478 = vmatpush1.msra.mxu0 0.0
      %1479 = vmatprep.subr.mxu0 0.0
      %1480 = vmatpush1.msra.mxu0 0.0
      %1481 = vmatprep.subr.mxu0 0.0
      %1482 = vmatpush1.msra.mxu0 0.0
      %1483 = vmatprep.subr.mxu0 0.0
      %1484 = vmatpush1.msra.mxu0 0.0
      %1485 = vmatprep.subr.mxu0 0.0
      %1486 = vmatpush1.msra.mxu0 0.0
      %1487 = vmatprep.subr.mxu0 0.0
      %1488 = vmatpush1.msra.mxu0 0.0
      %1489 = vmatprep.subr.mxu0 0.0
      %1490 = vmatpush1.msra.mxu0 0.0
      %1491 = vmatprep.subr.mxu0 0.0
      %1492 = vmatpush1.msra.mxu0 0.0
      %1493 = vmatprep.subr.mxu0 0.0
      %1494 = vmatpush1.msra.mxu0 0.0
      %1495 = vmatprep.subr.mxu0 0.0
      %1496 = vmatpush1.msra.mxu0 0.0
      %1497 = vmatprep.subr.mxu0 0.0
      %1498 = vmatpush1.msra.mxu0 0.0
      %1499 = vmatprep.subr.mxu0 0.0
      %1500 = vmatpush1.msra.mxu0 0.0
      %1501 = vmatprep.subr.mxu0 0.0
      %1502 = vmatpush1.msra.mxu0 0.0
      %1503 = vmatprep.subr.mxu0 0.0
      %1504 = vmatpush1.msra.mxu0 0.0
      %1505 = vmatprep.subr.mxu0 0.0
      %1506 = vmatpush1.msra.mxu0 0.0
      %1507 = vmatprep.subr.mxu0 0.0
      %1508 = vmatpush1.msra.mxu0 0.0
      %1509 = vmatprep.subr.mxu0 0.0
      %1510 = vmatpush1.msra.mxu0 0.0
      %1511 = vmatprep.subr.mxu0 0.0
      %1512 = vmatpush1.msra.mxu0 0.0
      %1513 = vmatprep.subr.mxu0 0.0
      %1514 = vmatpush1.msra.mxu0 0.0
      %1515 = vmatprep.subr.mxu0 0.0
      %1516 = vmatpush1.msra.mxu0 0.0
      %1517 = vmatprep.subr.mxu0 0.0
      %1518 = vmatpush1.msra.mxu0 0.0
      %1519 = vmatprep.subr.mxu0 0.0
      %1520 = vmatpush1.msra.mxu0 0.0
      %1521 = vmatprep.mubr.f32.mxu0 0.0
      %1522 = vmatmul.mubr.f32.gmra.mrb[0].mxu0 %v1455
      %v1523 = vpop.f32.mrb[0].mxu0
      %v1524 = vadd.f32 0.0, %v1523
      %v1525 = vpop.f32.mrb[0].mxu0
      %1526 = vdwg.mxu0
      %1527 = vrot.lane.b32.xlu0 %v937, 56
      %v1528 = vpop.permute.xlu0 %1527
      %v1531 = vsel %vm945, %v1450, 0
      %1533 = vmatprep.subr.mxu0 0.0
      %1534 = vmatpush1.msra.mxu0 %v1528
      %1535 = vmatprep.subr.mxu0 0.0
      %1536 = vmatpush1.msra.mxu0 0.0
      %1537 = vmatprep.subr.mxu0 0.0
      %1538 = vmatpush1.msra.mxu0 0.0
      %1539 = vmatprep.subr.mxu0 0.0
      %1540 = vmatpush1.msra.mxu0 0.0
      %1541 = vmatprep.subr.mxu0 0.0
      %1542 = vmatpush1.msra.mxu0 0.0
      %1543 = vmatprep.subr.mxu0 0.0
      %1544 = vmatpush1.msra.mxu0 0.0
      %1545 = vmatprep.subr.mxu0 0.0
      %1546 = vmatpush1.msra.mxu0 0.0
      %1547 = vmatprep.subr.mxu0 0.0
      %1548 = vmatpush1.msra.mxu0 0.0
      %1549 = vmatprep.subr.mxu0 0.0
      %1550 = vmatpush1.msra.mxu0 0.0
      %1551 = vmatprep.subr.mxu0 0.0
      %1552 = vmatpush1.msra.mxu0 0.0
      %1553 = vmatprep.subr.mxu0 0.0
      %1554 = vmatpush1.msra.mxu0 0.0
      %1555 = vmatprep.subr.mxu0 0.0
      %1556 = vmatpush1.msra.mxu0 0.0
      %1557 = vmatprep.subr.mxu0 0.0
      %1558 = vmatpush1.msra.mxu0 0.0
      %1559 = vmatprep.subr.mxu0 0.0
      %1560 = vmatpush1.msra.mxu0 0.0
      %1561 = vmatprep.subr.mxu0 0.0
      %1562 = vmatpush1.msra.mxu0 0.0
      %1563 = vmatprep.subr.mxu0 0.0
      %1564 = vmatpush1.msra.mxu0 0.0
      %1565 = vmatprep.subr.mxu0 0.0
      %1566 = vmatpush1.msra.mxu0 0.0
      %1567 = vmatprep.subr.mxu0 0.0
      %1568 = vmatpush1.msra.mxu0 0.0
      %1569 = vmatprep.subr.mxu0 0.0
      %1570 = vmatpush1.msra.mxu0 0.0
      %1571 = vmatprep.subr.mxu0 0.0
      %1572 = vmatpush1.msra.mxu0 0.0
      %1573 = vmatprep.subr.mxu0 0.0
      %1574 = vmatpush1.msra.mxu0 0.0
      %1575 = vmatprep.subr.mxu0 0.0
      %1576 = vmatpush1.msra.mxu0 0.0
      %1577 = vmatprep.subr.mxu0 0.0
      %1578 = vmatpush1.msra.mxu0 0.0
      %1579 = vmatprep.subr.mxu0 0.0
      %1580 = vmatpush1.msra.mxu0 0.0
      %1581 = vmatprep.subr.mxu0 0.0
      %1582 = vmatpush1.msra.mxu0 0.0
      %1583 = vmatprep.subr.mxu0 0.0
      %1584 = vmatpush1.msra.mxu0 0.0
      %1585 = vmatprep.subr.mxu0 0.0
      %1586 = vmatpush1.msra.mxu0 0.0
      %1587 = vmatprep.subr.mxu0 0.0
      %1588 = vmatpush1.msra.mxu0 0.0
      %1589 = vmatprep.subr.mxu0 0.0
      %1590 = vmatpush1.msra.mxu0 0.0
      %1591 = vmatprep.subr.mxu0 0.0
      %1592 = vmatpush1.msra.mxu0 0.0
      %1593 = vmatprep.subr.mxu0 0.0
      %1594 = vmatpush1.msra.mxu0 0.0
      %1595 = vmatprep.subr.mxu0 0.0
      %1596 = vmatpush1.msra.mxu0 0.0
      %1597 = vmatprep.mubr.f32.mxu0 0.0
      %1598 = vmatmul.mubr.f32.gmra.mrb[0].mxu0 %v1531
      %v1599 = vpop.f32.mrb[0].mxu0
      %v1600 = vadd.f32 0.0, %v1599
      %v1601 = vpop.f32.mrb[0].mxu0
      %1602 = vdwg.mxu0
      %1603 = vrot.lane.b32.xlu0 %v940, 112
      %v1604 = vpop.permute.xlu0 %1603
      %1605 = vrot.lane.b32.xlu0 %v932, 80
      %v1606 = vpop.permute.xlu0 %1605
      %v1607 = vsel %vm945, %v1604, 0
      %v1609 = vsel %vm945, %v1606, 0
      %1611 = vmatprep.subr.mxu0 0.0
      %1612 = vmatpush1.xpose.msra.mxu0 %v1609
      %1613 = vmatprep.subr.mxu0 0.0
      %1614 = vmatpush1.xpose.msra.mxu0 0.0
      %1615 = vmatprep.subr.mxu0 0.0
      %1616 = vmatpush1.xpose.msra.mxu0 0.0
      %1617 = vmatprep.subr.mxu0 0.0
      %1618 = vmatpush1.xpose.msra.mxu0 0.0
      %1619 = vmatprep.subr.mxu0 0.0
      %1620 = vmatpush1.xpose.msra.mxu0 0.0
      %1621 = vmatprep.subr.mxu0 0.0
      %1622 = vmatpush1.xpose.msra.mxu0 0.0
      %1623 = vmatprep.subr.mxu0 0.0
      %1624 = vmatpush1.xpose.msra.mxu0 0.0
      %1625 = vmatprep.subr.mxu0 0.0
      %1626 = vmatpush1.xpose.msra.mxu0 0.0
      %1627 = vmatprep.subr.mxu0 0.0
      %1628 = vmatpush1.xpose.msra.mxu0 0.0
      %1629 = vmatprep.subr.mxu0 0.0
      %1630 = vmatpush1.xpose.msra.mxu0 0.0
      %1631 = vmatprep.subr.mxu0 0.0
      %1632 = vmatpush1.xpose.msra.mxu0 0.0
      %1633 = vmatprep.subr.mxu0 0.0
      %1634 = vmatpush1.xpose.msra.mxu0 0.0
      %1635 = vmatprep.subr.mxu0 0.0
      %1636 = vmatpush1.xpose.msra.mxu0 0.0
      %1637 = vmatprep.subr.mxu0 0.0
      %1638 = vmatpush1.xpose.msra.mxu0 0.0
      %1639 = vmatprep.subr.mxu0 0.0
      %1640 = vmatpush1.xpose.msra.mxu0 0.0
      %1641 = vmatprep.subr.mxu0 0.0
      %1642 = vmatpush1.xpose.msra.mxu0 0.0
      %1643 = vmatprep.subr.mxu0 0.0
      %1644 = vmatpush1.xpose.msra.mxu0 0.0
      %1645 = vmatprep.subr.mxu0 0.0
      %1646 = vmatpush1.xpose.msra.mxu0 0.0
      %1647 = vmatprep.subr.mxu0 0.0
      %1648 = vmatpush1.xpose.msra.mxu0 0.0
      %1649 = vmatprep.subr.mxu0 0.0
      %1650 = vmatpush1.xpose.msra.mxu0 0.0
      %1651 = vmatprep.subr.mxu0 0.0
      %1652 = vmatpush1.xpose.msra.mxu0 0.0
      %1653 = vmatprep.subr.mxu0 0.0
      %1654 = vmatpush1.xpose.msra.mxu0 0.0
      %1655 = vmatprep.subr.mxu0 0.0
      %1656 = vmatpush1.xpose.msra.mxu0 0.0
      %1657 = vmatprep.subr.mxu0 0.0
      %1658 = vmatpush1.xpose.msra.mxu0 0.0
      %1659 = vmatprep.subr.mxu0 0.0
      %1660 = vmatpush1.xpose.msra.mxu0 0.0
      %1661 = vmatprep.subr.mxu0 0.0
      %1662 = vmatpush1.xpose.msra.mxu0 0.0
      %1663 = vmatprep.subr.mxu0 0.0
      %1664 = vmatpush1.xpose.msra.mxu0 0.0
      %1665 = vmatprep.subr.mxu0 0.0
      %1666 = vmatpush1.xpose.msra.mxu0 0.0
      %1667 = vmatprep.subr.mxu0 0.0
      %1668 = vmatpush1.xpose.msra.mxu0 0.0
      %1669 = vmatprep.subr.mxu0 0.0
      %1670 = vmatpush1.xpose.msra.mxu0 0.0
      %1671 = vmatprep.subr.mxu0 0.0
      %1672 = vmatpush1.xpose.msra.mxu0 0.0
      %1673 = vmatprep.subr.mxu0 0.0
      %1674 = vmatpush1.xpose.msra.mxu0 0.0
      %1675 = vmatprep.mubr.f32.mxu0 0.0
      %1676 = vmatmul.mubr.f32.gmra.mrb[0].mxu0 %v1607
      %v1677 = vpop.f32.mrb[0].mxu0
      %v1678 = vadd.f32 0.0, %v1677
      %v1679 = vpop.f32.mrb[0].mxu0
      %1680 = vdwg.mxu0
      %1681 = vrot.lane.b32.xlu0 %v941, 112
      %v1682 = vpop.permute.xlu0 %1681
      %1683 = vrot.lane.b32.xlu0 %v937, 80
      %v1684 = vpop.permute.xlu0 %1683
      %v1685 = vsel %vm945, %v1682, 0
      %v1687 = vsel %vm945, %v1684, 0
      %1689 = vmatprep.subr.mxu0 0.0
      %1690 = vmatpush1.xpose.msra.mxu0 %v1687
      %1691 = vmatprep.subr.mxu0 0.0
      %1692 = vmatpush1.xpose.msra.mxu0 0.0
      %1693 = vmatprep.subr.mxu0 0.0
      %1694 = vmatpush1.xpose.msra.mxu0 0.0
      %1695 = vmatprep.subr.mxu0 0.0
      %1696 = vmatpush1.xpose.msra.mxu0 0.0
      %1697 = vmatprep.subr.mxu0 0.0
      %1698 = vmatpush1.xpose.msra.mxu0 0.0
      %1699 = vmatprep.subr.mxu0 0.0
      %1700 = vmatpush1.xpose.msra.mxu0 0.0
      %1701 = vmatprep.subr.mxu0 0.0
      %1702 = vmatpush1.xpose.msra.mxu0 0.0
      %1703 = vmatprep.subr.mxu0 0.0
      %1704 = vmatpush1.xpose.msra.mxu0 0.0
      %1705 = vmatprep.subr.mxu0 0.0
      %1706 = vmatpush1.xpose.msra.mxu0 0.0
      %1707 = vmatprep.subr.mxu0 0.0
      %1708 = vmatpush1.xpose.msra.mxu0 0.0
      %1709 = vmatprep.subr.mxu0 0.0
      %1710 = vmatpush1.xpose.msra.mxu0 0.0
      %1711 = vmatprep.subr.mxu0 0.0
      %1712 = vmatpush1.xpose.msra.mxu0 0.0
      %1713 = vmatprep.subr.mxu0 0.0
      %1714 = vmatpush1.xpose.msra.mxu0 0.0
      %1715 = vmatprep.subr.mxu0 0.0
      %1716 = vmatpush1.xpose.msra.mxu0 0.0
      %1717 = vmatprep.subr.mxu0 0.0
      %1718 = vmatpush1.xpose.msra.mxu0 0.0
      %1719 = vmatprep.subr.mxu0 0.0
      %1720 = vmatpush1.xpose.msra.mxu0 0.0
      %1721 = vmatprep.subr.mxu0 0.0
      %1722 = vmatpush1.xpose.msra.mxu0 0.0
      %1723 = vmatprep.subr.mxu0 0.0
      %1724 = vmatpush1.xpose.msra.mxu0 0.0
      %1725 = vmatprep.subr.mxu0 0.0
      %1726 = vmatpush1.xpose.msra.mxu0 0.0
      %1727 = vmatprep.subr.mxu0 0.0
      %1728 = vmatpush1.xpose.msra.mxu0 0.0
      %1729 = vmatprep.subr.mxu0 0.0
      %1730 = vmatpush1.xpose.msra.mxu0 0.0
      %1731 = vmatprep.subr.mxu0 0.0
      %1732 = vmatpush1.xpose.msra.mxu0 0.0
      %1733 = vmatprep.subr.mxu0 0.0
      %1734 = vmatpush1.xpose.msra.mxu0 0.0
      %1735 = vmatprep.subr.mxu0 0.0
      %1736 = vmatpush1.xpose.msra.mxu0 0.0
      %1737 = vmatprep.subr.mxu0 0.0
      %1738 = vmatpush1.xpose.msra.mxu0 0.0
      %1739 = vmatprep.subr.mxu0 0.0
      %1740 = vmatpush1.xpose.msra.mxu0 0.0
      %1741 = vmatprep.subr.mxu0 0.0
      %1742 = vmatpush1.xpose.msra.mxu0 0.0
      %1743 = vmatprep.subr.mxu0 0.0
      %1744 = vmatpush1.xpose.msra.mxu0 0.0
      %1745 = vmatprep.subr.mxu0 0.0
      %1746 = vmatpush1.xpose.msra.mxu0 0.0
      %1747 = vmatprep.subr.mxu0 0.0
      %1748 = vmatpush1.xpose.msra.mxu0 0.0
      %1749 = vmatprep.subr.mxu0 0.0
      %1750 = vmatpush1.xpose.msra.mxu0 0.0
      %1751 = vmatprep.subr.mxu0 0.0
      %1752 = vmatpush1.xpose.msra.mxu0 0.0
      %1753 = vmatprep.mubr.f32.mxu0 0.0
      %1754 = vmatmul.mubr.f32.gmra.mrb[0].mxu0 %v1685
      %v1755 = vpop.f32.mrb[0].mxu0
      %v1756 = vadd.f32 0.0, %v1755
      %v1757 = vpop.f32.mrb[0].mxu0
      %1758 = vdwg.mxu0
      %v1759 = vsel %vm945, %v1678, -inf
      %1760 = vmax.xlane.f32.xlu0 %v1759
      %v1761 = vpop.xlane.xlu0 %1760
      %v1762 = vsel %vm945, %v1756, -inf
      %1763 = vmax.xlane.f32.xlu0 %v1762
      %v1764 = vpop.xlane.xlu0 %1763
      %v1765 = vsub.f32 %v1678, %v1761
      %v1766 = vsub.f32 %v1756, %v1764
      %v1767 = vmul.f32 %v1765, 1.442695
      %v1768 = vpow.pop %v1767
      %v1769 = vmul.f32 %v1766, 1.442695
      %v1770 = vpow.pop %v1769
      %v1771 = vsel %vm945, %v1768, 0.0
      %1772 = vadd.xlane.f32.xlu0 %v1771
      %v1773 = vpop.xlane.xlu0 %1772
      %v1774 = vsel %vm945, %v1770, 0.0
      %1775 = vadd.xlane.f32.xlu0 %v1774
      %v1776 = vpop.xlane.xlu0 %1775
      %v1777 = vrcp.pop %v1773
      %v1778 = vrcp.pop %v1776
      %v1779 = vmul.f32 %v1768, %v1777
      %v1780 = vmul.f32 %v1770, %v1778
      %1781 = vrot.lane.b32.xlu0 %v932, 48
      %v1782 = vpop.permute.xlu0 %1781
      %v1785 = vsel %vm945, %v1779, 0
      %1787 = vmatprep.subr.mxu0 0.0
      %1788 = vmatpush1.msra.mxu0 %v1782
      %1789 = vmatprep.subr.mxu0 0.0
      %1790 = vmatpush1.msra.mxu0 0.0
      %1791 = vmatprep.subr.mxu0 0.0
      %1792 = vmatpush1.msra.mxu0 0.0
      %1793 = vmatprep.subr.mxu0 0.0
      %1794 = vmatpush1.msra.mxu0 0.0
      %1795 = vmatprep.subr.mxu0 0.0
      %1796 = vmatpush1.msra.mxu0 0.0
      %1797 = vmatprep.subr.mxu0 0.0
      %1798 = vmatpush1.msra.mxu0 0.0
      %1799 = vmatprep.subr.mxu0 0.0
      %1800 = vmatpush1.msra.mxu0 0.0
      %1801 = vmatprep.subr.mxu0 0.0
      %1802 = vmatpush1.msra.mxu0 0.0
      %1803 = vmatprep.subr.mxu0 0.0
      %1804 = vmatpush1.msra.mxu0 0.0
      %1805 = vmatprep.subr.mxu0 0.0
      %1806 = vmatpush1.msra.mxu0 0.0
      %1807 = vmatprep.subr.mxu0 0.0
      %1808 = vmatpush1.msra.mxu0 0.0
      %1809 = vmatprep.subr.mxu0 0.0
      %1810 = vmatpush1.msra.mxu0 0.0
      %1811 = vmatprep.subr.mxu0 0.0
      %1812 = vmatpush1.msra.mxu0 0.0
      %1813 = vmatprep.subr.mxu0 0.0
      %1814 = vmatpush1.msra.mxu0 0.0
      %1815 = vmatprep.subr.mxu0 0.0
      %1816 = vmatpush1.msra.mxu0 0.0
      %1817 = vmatprep.subr.mxu0 0.0
      %1818 = vmatpush1.msra.mxu0 0.0
      %1819 = vmatprep.subr.mxu0 0.0
      %1820 = vmatpush1.msra.mxu0 0.0
      %1821 = vmatprep.subr.mxu0 0.0
      %1822 = vmatpush1.msra.mxu0 0.0
      %1823 = vmatprep.subr.mxu0 0.0
      %1824 = vmatpush1.msra.mxu0 0.0
      %1825 = vmatprep.subr.mxu0 0.0
      %1826 = vmatpush1.msra.mxu0 0.0
      %1827 = vmatprep.subr.mxu0 0.0
      %1828 = vmatpush1.msra.mxu0 0.0
      %1829 = vmatprep.subr.mxu0 0.0
      %1830 = vmatpush1.msra.mxu0 0.0
      %1831 = vmatprep.subr.mxu0 0.0
      %1832 = vmatpush1.msra.mxu0 0.0
      %1833 = vmatprep.subr.mxu0 0.0
      %1834 = vmatpush1.msra.mxu0 0.0
      %1835 = vmatprep.subr.mxu0 0.0
      %1836 = vmatpush1.msra.mxu0 0.0
      %1837 = vmatprep.subr.mxu0 0.0
      %1838 = vmatpush1.msra.mxu0 0.0
      %1839 = vmatprep.subr.mxu0 0.0
      %1840 = vmatpush1.msra.mxu0 0.0
      %1841 = vmatprep.subr.mxu0 0.0
      %1842 = vmatpush1.msra.mxu0 0.0
      %1843 = vmatprep.subr.mxu0 0.0
      %1844 = vmatpush1.msra.mxu0 0.0
      %1845 = vmatprep.subr.mxu0 0.0
      %1846 = vmatpush1.msra.mxu0 0.0
      %1847 = vmatprep.subr.mxu0 0.0
      %1848 = vmatpush1.msra.mxu0 0.0
      %1849 = vmatprep.subr.mxu0 0.0
      %1850 = vmatpush1.msra.mxu0 0.0
      %1851 = vmatprep.mubr.f32.mxu0 0.0
      %1852 = vmatmul.mubr.f32.gmra.mrb[0].mxu0 %v1785
      %v1853 = vpop.f32.mrb[0].mxu0
      %v1854 = vadd.f32 0.0, %v1853
      %v1855 = vpop.f32.mrb[0].mxu0
      %1856 = vdwg.mxu0
      %1857 = vrot.lane.b32.xlu0 %v937, 48
      %v1858 = vpop.permute.xlu0 %1857
      %v1861 = vsel %vm945, %v1780, 0
      %1863 = vmatprep.subr.mxu0 0.0
      %1864 = vmatpush1.msra.mxu0 %v1858
      %1865 = vmatprep.subr.mxu0 0.0
      %1866 = vmatpush1.msra.mxu0 0.0
      %1867 = vmatprep.subr.mxu0 0.0
      %1868 = vmatpush1.msra.mxu0 0.0
      %1869 = vmatprep.subr.mxu0 0.0
      %1870 = vmatpush1.msra.mxu0 0.0
      %1871 = vmatprep.subr.mxu0 0.0
      %1872 = vmatpush1.msra.mxu0 0.0
      %1873 = vmatprep.subr.mxu0 0.0
      %1874 = vmatpush1.msra.mxu0 0.0
      %1875 = vmatprep.subr.mxu0 0.0
      %1876 = vmatpush1.msra.mxu0 0.0
      %1877 = vmatprep.subr.mxu0 0.0
      %1878 = vmatpush1.msra.mxu0 0.0
      %1879 = vmatprep.subr.mxu0 0.0
      %1880 = vmatpush1.msra.mxu0 0.0
      %1881 = vmatprep.subr.mxu0 0.0
      %1882 = vmatpush1.msra.mxu0 0.0
      %1883 = vmatprep.subr.mxu0 0.0
      %1884 = vmatpush1.msra.mxu0 0.0
      %1885 = vmatprep.subr.mxu0 0.0
      %1886 = vmatpush1.msra.mxu0 0.0
      %1887 = vmatprep.subr.mxu0 0.0
      %1888 = vmatpush1.msra.mxu0 0.0
      %1889 = vmatprep.subr.mxu0 0.0
      %1890 = vmatpush1.msra.mxu0 0.0
      %1891 = vmatprep.subr.mxu0 0.0
      %1892 = vmatpush1.msra.mxu0 0.0
      %1893 = vmatprep.subr.mxu0 0.0
      %1894 = vmatpush1.msra.mxu0 0.0
      %1895 = vmatprep.subr.mxu0 0.0
      %1896 = vmatpush1.msra.mxu0 0.0
      %1897 = vmatprep.subr.mxu0 0.0
      %1898 = vmatpush1.msra.mxu0 0.0
      %1899 = vmatprep.subr.mxu0 0.0
      %1900 = vmatpush1.msra.mxu0 0.0
      %1901 = vmatprep.subr.mxu0 0.0
      %1902 = vmatpush1.msra.mxu0 0.0
      %1903 = vmatprep.subr.mxu0 0.0
      %1904 = vmatpush1.msra.mxu0 0.0
      %1905 = vmatprep.subr.mxu0 0.0
      %1906 = vmatpush1.msra.mxu0 0.0
      %1907 = vmatprep.subr.mxu0 0.0
      %1908 = vmatpush1.msra.mxu0 0.0
      %1909 = vmatprep.subr.mxu0 0.0
      %1910 = vmatpush1.msra.mxu0 0.0
      %1911 = vmatprep.subr.mxu0 0.0
      %1912 = vmatpush1.msra.mxu0 0.0
      %1913 = vmatprep.subr.mxu0 0.0
      %1914 = vmatpush1.msra.mxu0 0.0
      %1915 = vmatprep.subr.mxu0 0.0
      %1916 = vmatpush1.msra.mxu0 0.0
      %1917 = vmatprep.subr.mxu0 0.0
      %1918 = vmatpush1.msra.mxu0 0.0
      %1919 = vmatprep.subr.mxu0 0.0
      %1920 = vmatpush1.msra.mxu0 0.0
      %1921 = vmatprep.subr.mxu0 0.0
      %1922 = vmatpush1.msra.mxu0 0.0
      %1923 = vmatprep.subr.mxu0 0.0
      %1924 = vmatpush1.msra.mxu0 0.0
      %1925 = vmatprep.subr.mxu0 0.0
      %1926 = vmatpush1.msra.mxu0 0.0
      %1927 = vmatprep.mubr.f32.mxu0 0.0
      %1928 = vmatmul.mubr.f32.gmra.mrb[0].mxu0 %v1861
      %v1929 = vpop.f32.mrb[0].mxu0
      %v1930 = vadd.f32 0.0, %v1929
      %v1931 = vpop.f32.mrb[0].mxu0
      %1932 = vdwg.mxu0
      %1933 = vrot.lane.b32.xlu0 %v940, 104
      %v1934 = vpop.permute.xlu0 %1933
      %1935 = vrot.lane.b32.xlu0 %v932, 72
      %v1936 = vpop.permute.xlu0 %1935
      %v1937 = vsel %vm945, %v1934, 0
      %v1939 = vsel %vm945, %v1936, 0
      %1941 = vmatprep.subr.mxu0 0.0
      %1942 = vmatpush1.xpose.msra.mxu0 %v1939
      %1943 = vmatprep.subr.mxu0 0.0
      %1944 = vmatpush1.xpose.msra.mxu0 0.0
      %1945 = vmatprep.subr.mxu0 0.0
      %1946 = vmatpush1.xpose.msra.mxu0 0.0
      %1947 = vmatprep.subr.mxu0 0.0
      %1948 = vmatpush1.xpose.msra.mxu0 0.0
      %1949 = vmatprep.subr.mxu0 0.0
      %1950 = vmatpush1.xpose.msra.mxu0 0.0
      %1951 = vmatprep.subr.mxu0 0.0
      %1952 = vmatpush1.xpose.msra.mxu0 0.0
      %1953 = vmatprep.subr.mxu0 0.0
      %1954 = vmatpush1.xpose.msra.mxu0 0.0
      %1955 = vmatprep.subr.mxu0 0.0
      %1956 = vmatpush1.xpose.msra.mxu0 0.0
      %1957 = vmatprep.subr.mxu0 0.0
      %1958 = vmatpush1.xpose.msra.mxu0 0.0
      %1959 = vmatprep.subr.mxu0 0.0
      %1960 = vmatpush1.xpose.msra.mxu0 0.0
      %1961 = vmatprep.subr.mxu0 0.0
      %1962 = vmatpush1.xpose.msra.mxu0 0.0
      %1963 = vmatprep.subr.mxu0 0.0
      %1964 = vmatpush1.xpose.msra.mxu0 0.0
      %1965 = vmatprep.subr.mxu0 0.0
      %1966 = vmatpush1.xpose.msra.mxu0 0.0
      %1967 = vmatprep.subr.mxu0 0.0
      %1968 = vmatpush1.xpose.msra.mxu0 0.0
      %1969 = vmatprep.subr.mxu0 0.0
      %1970 = vmatpush1.xpose.msra.mxu0 0.0
      %1971 = vmatprep.subr.mxu0 0.0
      %1972 = vmatpush1.xpose.msra.mxu0 0.0
      %1973 = vmatprep.subr.mxu0 0.0
      %1974 = vmatpush1.xpose.msra.mxu0 0.0
      %1975 = vmatprep.subr.mxu0 0.0
      %1976 = vmatpush1.xpose.msra.mxu0 0.0
      %1977 = vmatprep.subr.mxu0 0.0
      %1978 = vmatpush1.xpose.msra.mxu0 0.0
      %1979 = vmatprep.subr.mxu0 0.0
      %1980 = vmatpush1.xpose.msra.mxu0 0.0
      %1981 = vmatprep.subr.mxu0 0.0
      %1982 = vmatpush1.xpose.msra.mxu0 0.0
      %1983 = vmatprep.subr.mxu0 0.0
      %1984 = vmatpush1.xpose.msra.mxu0 0.0
      %1985 = vmatprep.subr.mxu0 0.0
      %1986 = vmatpush1.xpose.msra.mxu0 0.0
      %1987 = vmatprep.subr.mxu0 0.0
      %1988 = vmatpush1.xpose.msra.mxu0 0.0
      %1989 = vmatprep.subr.mxu0 0.0
      %1990 = vmatpush1.xpose.msra.mxu0 0.0
      %1991 = vmatprep.subr.mxu0 0.0
      %1992 = vmatpush1.xpose.msra.mxu0 0.0
      %1993 = vmatprep.subr.mxu0 0.0
      %1994 = vmatpush1.xpose.msra.mxu0 0.0
      %1995 = vmatprep.subr.mxu0 0.0
      %1996 = vmatpush1.xpose.msra.mxu0 0.0
      %1997 = vmatprep.subr.mxu0 0.0
      %1998 = vmatpush1.xpose.msra.mxu0 0.0
      %1999 = vmatprep.subr.mxu0 0.0
      %2000 = vmatpush1.xpose.msra.mxu0 0.0
      %2001 = vmatprep.subr.mxu0 0.0
      %2002 = vmatpush1.xpose.msra.mxu0 0.0
      %2003 = vmatprep.subr.mxu0 0.0
      %2004 = vmatpush1.xpose.msra.mxu0 0.0
      %2005 = vmatprep.mubr.f32.mxu0 0.0
      %2006 = vmatmul.mubr.f32.gmra.mrb[0].mxu0 %v1937
      %v2007 = vpop.f32.mrb[0].mxu0
      %v2008 = vadd.f32 0.0, %v2007
      %v2009 = vpop.f32.mrb[0].mxu0
      %2010 = vdwg.mxu0
      %2011 = vrot.lane.b32.xlu0 %v941, 104
      %v2012 = vpop.permute.xlu0 %2011
      %2013 = vrot.lane.b32.xlu0 %v937, 72
      %v2014 = vpop.permute.xlu0 %2013
      %v2015 = vsel %vm945, %v2012, 0
      %v2017 = vsel %vm945, %v2014, 0
      %2019 = vmatprep.subr.mxu0 0.0
      %2020 = vmatpush1.xpose.msra.mxu0 %v2017
      %2021 = vmatprep.subr.mxu0 0.0
      %2022 = vmatpush1.xpose.msra.mxu0 0.0
      %2023 = vmatprep.subr.mxu0 0.0
      %2024 = vmatpush1.xpose.msra.mxu0 0.0
      %2025 = vmatprep.subr.mxu0 0.0
      %2026 = vmatpush1.xpose.msra.mxu0 0.0
      %2027 = vmatprep.subr.mxu0 0.0
      %2028 = vmatpush1.xpose.msra.mxu0 0.0
      %2029 = vmatprep.subr.mxu0 0.0
      %2030 = vmatpush1.xpose.msra.mxu0 0.0
      %2031 = vmatprep.subr.mxu0 0.0
      %2032 = vmatpush1.xpose.msra.mxu0 0.0
      %2033 = vmatprep.subr.mxu0 0.0
      %2034 = vmatpush1.xpose.msra.mxu0 0.0
      %2035 = vmatprep.subr.mxu0 0.0
      %2036 = vmatpush1.xpose.msra.mxu0 0.0
      %2037 = vmatprep.subr.mxu0 0.0
      %2038 = vmatpush1.xpose.msra.mxu0 0.0
      %2039 = vmatprep.subr.mxu0 0.0
      %2040 = vmatpush1.xpose.msra.mxu0 0.0
      %2041 = vmatprep.subr.mxu0 0.0
      %2042 = vmatpush1.xpose.msra.mxu0 0.0
      %2043 = vmatprep.subr.mxu0 0.0
      %2044 = vmatpush1.xpose.msra.mxu0 0.0
      %2045 = vmatprep.subr.mxu0 0.0
      %2046 = vmatpush1.xpose.msra.mxu0 0.0
      %2047 = vmatprep.subr.mxu0 0.0
      %2048 = vmatpush1.xpose.msra.mxu0 0.0
      %2049 = vmatprep.subr.mxu0 0.0
      %2050 = vmatpush1.xpose.msra.mxu0 0.0
      %2051 = vmatprep.subr.mxu0 0.0
      %2052 = vmatpush1.xpose.msra.mxu0 0.0
      %2053 = vmatprep.subr.mxu0 0.0
      %2054 = vmatpush1.xpose.msra.mxu0 0.0
      %2055 = vmatprep.subr.mxu0 0.0
      %2056 = vmatpush1.xpose.msra.mxu0 0.0
      %2057 = vmatprep.subr.mxu0 0.0
      %2058 = vmatpush1.xpose.msra.mxu0 0.0
      %2059 = vmatprep.subr.mxu0 0.0
      %2060 = vmatpush1.xpose.msra.mxu0 0.0
      %2061 = vmatprep.subr.mxu0 0.0
      %2062 = vmatpush1.xpose.msra.mxu0 0.0
      %2063 = vmatprep.subr.mxu0 0.0
      %2064 = vmatpush1.xpose.msra.mxu0 0.0
      %2065 = vmatprep.subr.mxu0 0.0
      %2066 = vmatpush1.xpose.msra.mxu0 0.0
      %2067 = vmatprep.subr.mxu0 0.0
      %2068 = vmatpush1.xpose.msra.mxu0 0.0
      %2069 = vmatprep.subr.mxu0 0.0
      %2070 = vmatpush1.xpose.msra.mxu0 0.0
      %2071 = vmatprep.subr.mxu0 0.0
      %2072 = vmatpush1.xpose.msra.mxu0 0.0
      %2073 = vmatprep.subr.mxu0 0.0
      %2074 = vmatpush1.xpose.msra.mxu0 0.0
      %2075 = vmatprep.subr.mxu0 0.0
      %2076 = vmatpush1.xpose.msra.mxu0 0.0
      %2077 = vmatprep.subr.mxu0 0.0
      %2078 = vmatpush1.xpose.msra.mxu0 0.0
      %2079 = vmatprep.subr.mxu0 0.0
      %2080 = vmatpush1.xpose.msra.mxu0 0.0
      %2081 = vmatprep.subr.mxu0 0.0
      %2082 = vmatpush1.xpose.msra.mxu0 0.0
      %2083 = vmatprep.mubr.f32.mxu0 0.0
      %2084 = vmatmul.mubr.f32.gmra.mrb[0].mxu0 %v2015
      %v2085 = vpop.f32.mrb[0].mxu0
      %v2086 = vadd.f32 0.0, %v2085
      %v2087 = vpop.f32.mrb[0].mxu0
      %2088 = vdwg.mxu0
      %v2089 = vsel %vm945, %v2008, -inf
      %2090 = vmax.xlane.f32.xlu0 %v2089
      %v2091 = vpop.xlane.xlu0 %2090
      %v2092 = vsel %vm945, %v2086, -inf
      %2093 = vmax.xlane.f32.xlu0 %v2092
      %v2094 = vpop.xlane.xlu0 %2093
      %v2095 = vsub.f32 %v2008, %v2091
      %v2096 = vsub.f32 %v2086, %v2094
      %v2097 = vmul.f32 %v2095, 1.442695
      %v2098 = vpow.pop %v2097
      %v2099 = vmul.f32 %v2096, 1.442695
      %v2100 = vpow.pop %v2099
      %v2101 = vsel %vm945, %v2098, 0.0
      %2102 = vadd.xlane.f32.xlu0 %v2101
      %v2103 = vpop.xlane.xlu0 %2102
      %v2104 = vsel %vm945, %v2100, 0.0
      %2105 = vadd.xlane.f32.xlu0 %v2104
      %v2106 = vpop.xlane.xlu0 %2105
      %v2107 = vrcp.pop %v2103
      %v2108 = vrcp.pop %v2106
      %v2109 = vmul.f32 %v2098, %v2107
      %v2110 = vmul.f32 %v2100, %v2108
      %2111 = vrot.lane.b32.xlu0 %v932, 40
      %v2112 = vpop.permute.xlu0 %2111
      %v2115 = vsel %vm945, %v2109, 0
      %2117 = vmatprep.subr.mxu0 0.0
      %2118 = vmatpush1.msra.mxu0 %v2112
      %2119 = vmatprep.subr.mxu0 0.0
      %2120 = vmatpush1.msra.mxu0 0.0
      %2121 = vmatprep.subr.mxu0 0.0
      %2122 = vmatpush1.msra.mxu0 0.0
      %2123 = vmatprep.subr.mxu0 0.0
      %2124 = vmatpush1.msra.mxu0 0.0
      %2125 = vmatprep.subr.mxu0 0.0
      %2126 = vmatpush1.msra.mxu0 0.0
      %2127 = vmatprep.subr.mxu0 0.0
      %2128 = vmatpush1.msra.mxu0 0.0
      %2129 = vmatprep.subr.mxu0 0.0
      %2130 = vmatpush1.msra.mxu0 0.0
      %2131 = vmatprep.subr.mxu0 0.0
      %2132 = vmatpush1.msra.mxu0 0.0
      %2133 = vmatprep.subr.mxu0 0.0
      %2134 = vmatpush1.msra.mxu0 0.0
      %2135 = vmatprep.subr.mxu0 0.0
      %2136 = vmatpush1.msra.mxu0 0.0
      %2137 = vmatprep.subr.mxu0 0.0
      %2138 = vmatpush1.msra.mxu0 0.0
      %2139 = vmatprep.subr.mxu0 0.0
      %2140 = vmatpush1.msra.mxu0 0.0
      %2141 = vmatprep.subr.mxu0 0.0
      %2142 = vmatpush1.msra.mxu0 0.0
      %2143 = vmatprep.subr.mxu0 0.0
      %2144 = vmatpush1.msra.mxu0 0.0
      %2145 = vmatprep.subr.mxu0 0.0
      %2146 = vmatpush1.msra.mxu0 0.0
      %2147 = vmatprep.subr.mxu0 0.0
      %2148 = vmatpush1.msra.mxu0 0.0
      %2149 = vmatprep.subr.mxu0 0.0
      %2150 = vmatpush1.msra.mxu0 0.0
      %2151 = vmatprep.subr.mxu0 0.0
      %2152 = vmatpush1.msra.mxu0 0.0
      %2153 = vmatprep.subr.mxu0 0.0
      %2154 = vmatpush1.msra.mxu0 0.0
      %2155 = vmatprep.subr.mxu0 0.0
      %2156 = vmatpush1.msra.mxu0 0.0
      %2157 = vmatprep.subr.mxu0 0.0
      %2158 = vmatpush1.msra.mxu0 0.0
      %2159 = vmatprep.subr.mxu0 0.0
      %2160 = vmatpush1.msra.mxu0 0.0
      %2161 = vmatprep.subr.mxu0 0.0
      %2162 = vmatpush1.msra.mxu0 0.0
      %2163 = vmatprep.subr.mxu0 0.0
      %2164 = vmatpush1.msra.mxu0 0.0
      %2165 = vmatprep.subr.mxu0 0.0
      %2166 = vmatpush1.msra.mxu0 0.0
      %2167 = vmatprep.subr.mxu0 0.0
      %2168 = vmatpush1.msra.mxu0 0.0
      %2169 = vmatprep.subr.mxu0 0.0
      %2170 = vmatpush1.msra.mxu0 0.0
      %2171 = vmatprep.subr.mxu0 0.0
      %2172 = vmatpush1.msra.mxu0 0.0
      %2173 = vmatprep.subr.mxu0 0.0
      %2174 = vmatpush1.msra.mxu0 0.0
      %2175 = vmatprep.subr.mxu0 0.0
      %2176 = vmatpush1.msra.mxu0 0.0
      %2177 = vmatprep.subr.mxu0 0.0
      %2178 = vmatpush1.msra.mxu0 0.0
      %2179 = vmatprep.subr.mxu0 0.0
      %2180 = vmatpush1.msra.mxu0 0.0
      %2181 = vmatprep.mubr.f32.mxu0 0.0
      %2182 = vmatmul.mubr.f32.gmra.mrb[0].mxu0 %v2115
      %v2183 = vpop.f32.mrb[0].mxu0
      %v2184 = vadd.f32 0.0, %v2183
      %v2185 = vpop.f32.mrb[0].mxu0
      %2186 = vdwg.mxu0
      %2187 = vrot.lane.b32.xlu0 %v937, 40
      %v2188 = vpop.permute.xlu0 %2187
      %v2191 = vsel %vm945, %v2110, 0
      %2193 = vmatprep.subr.mxu0 0.0
      %2194 = vmatpush1.msra.mxu0 %v2188
      %2195 = vmatprep.subr.mxu0 0.0
      %2196 = vmatpush1.msra.mxu0 0.0
      %2197 = vmatprep.subr.mxu0 0.0
      %2198 = vmatpush1.msra.mxu0 0.0
      %2199 = vmatprep.subr.mxu0 0.0
      %2200 = vmatpush1.msra.mxu0 0.0
      %2201 = vmatprep.subr.mxu0 0.0
      %2202 = vmatpush1.msra.mxu0 0.0
      %2203 = vmatprep.subr.mxu0 0.0
      %2204 = vmatpush1.msra.mxu0 0.0
      %2205 = vmatprep.subr.mxu0 0.0
      %2206 = vmatpush1.msra.mxu0 0.0
      %2207 = vmatprep.subr.mxu0 0.0
      %2208 = vmatpush1.msra.mxu0 0.0
      %2209 = vmatprep.subr.mxu0 0.0
      %2210 = vmatpush1.msra.mxu0 0.0
      %2211 = vmatprep.subr.mxu0 0.0
      %2212 = vmatpush1.msra.mxu0 0.0
      %2213 = vmatprep.subr.mxu0 0.0
      %2214 = vmatpush1.msra.mxu0 0.0
      %2215 = vmatprep.subr.mxu0 0.0
      %2216 = vmatpush1.msra.mxu0 0.0
      %2217 = vmatprep.subr.mxu0 0.0
      %2218 = vmatpush1.msra.mxu0 0.0
      %2219 = vmatprep.subr.mxu0 0.0
      %2220 = vmatpush1.msra.mxu0 0.0
      %2221 = vmatprep.subr.mxu0 0.0
      %2222 = vmatpush1.msra.mxu0 0.0
      %2223 = vmatprep.subr.mxu0 0.0
      %2224 = vmatpush1.msra.mxu0 0.0
      %2225 = vmatprep.subr.mxu0 0.0
      %2226 = vmatpush1.msra.mxu0 0.0
      %2227 = vmatprep.subr.mxu0 0.0
      %2228 = vmatpush1.msra.mxu0 0.0
      %2229 = vmatprep.subr.mxu0 0.0
      %2230 = vmatpush1.msra.mxu0 0.0
      %2231 = vmatprep.subr.mxu0 0.0
      %2232 = vmatpush1.msra.mxu0 0.0
      %2233 = vmatprep.subr.mxu0 0.0
      %2234 = vmatpush1.msra.mxu0 0.0
      %2235 = vmatprep.subr.mxu0 0.0
      %2236 = vmatpush1.msra.mxu0 0.0
      %2237 = vmatprep.subr.mxu0 0.0
      %2238 = vmatpush1.msra.mxu0 0.0
      %2239 = vmatprep.subr.mxu0 0.0
      %2240 = vmatpush1.msra.mxu0 0.0
      %2241 = vmatprep.subr.mxu0 0.0
      %2242 = vmatpush1.msra.mxu0 0.0
      %2243 = vmatprep.subr.mxu0 0.0
      %2244 = vmatpush1.msra.mxu0 0.0
      %2245 = vmatprep.subr.mxu0 0.0
      %2246 = vmatpush1.msra.mxu0 0.0
      %2247 = vmatprep.subr.mxu0 0.0
      %2248 = vmatpush1.msra.mxu0 0.0
      %2249 = vmatprep.subr.mxu0 0.0
      %2250 = vmatpush1.msra.mxu0 0.0
      %2251 = vmatprep.subr.mxu0 0.0
      %2252 = vmatpush1.msra.mxu0 0.0
      %2253 = vmatprep.subr.mxu0 0.0
      %2254 = vmatpush1.msra.mxu0 0.0
      %2255 = vmatprep.subr.mxu0 0.0
      %2256 = vmatpush1.msra.mxu0 0.0
      %2257 = vmatprep.mubr.f32.mxu0 0.0
      %2258 = vmatmul.mubr.f32.gmra.mrb[0].mxu0 %v2191
      %v2259 = vpop.f32.mrb[0].mxu0
      %v2260 = vadd.f32 0.0, %v2259
      %v2261 = vpop.f32.mrb[0].mxu0
      %2262 = vdwg.mxu0
      %2265 = vrot.lane.b32.xlu0 %v1524, 8
      %v2266 = vpop.permute.xlu0 %2265
      %2267 = vrot.lane.b32.xlu0 %v1600, 8
      %v2268 = vpop.permute.xlu0 %2267
      %2273 = vrot.lane.b32.xlu0 %v1854, 16
      %v2274 = vpop.permute.xlu0 %2273
      %2275 = vrot.lane.b32.xlu0 %v1930, 16
      %v2276 = vpop.permute.xlu0 %2275
      %2281 = vrot.lane.b32.xlu0 %v2184, 24
      %v2282 = vpop.permute.xlu0 %2281
      %2283 = vrot.lane.b32.xlu0 %v2260, 24
      %v2284 = vpop.permute.xlu0 %2283
      %v2287 = vsel %vm945, %v1194, %v2266
      %v2288 = vsel %vm945, %v1270, %v2268
      %vm2289 = vcmask 130048
      %v2290 = vsel %vm2289, %v2287, %v2274
      %v2291 = vsel %vm2289, %v2288, %v2276
      %vm2292 = vcmask 195584
      %v2293 = vsel %vm2292, %v2290, %v2282
      %v2294 = vsel %vm2292, %v2291, %v2284
      %v2295 = vld [vmem:[%s705] sm:$0xff]
      %v2296 = vld [vmem:[%s705 + $0x8] sm:$0xff]
      %v2297 = vld [vmem:[%s705 + $0x10] sm:$0xff]
      %v2298 = vld [vmem:[%s705 + $0x18] sm:$0xff]
      %v2299 = vld [vmem:[%s708] sm:$0x1]
      %v2301 = vlaneseq
      %v2302 = vshrl.u32 %v2301, 7
      %v2303 = vsub.s32 0, %v2302
      %v2304 = vrot.slane %v2299, %v2303
      %v2307 = vsel %vm858, %v2293, 0
      %v2310 = vsel %vm858, %v2294, 0
      %2312 = vmatprep.subr.mxu0 0.0
      %2313 = vmatpush1.msra.mxu0 %v2295
      %2314 = vmatprep.subr.mxu0 0.0
      %2315 = vmatpush1.msra.mxu0 %v2296
      %2316 = vmatprep.subr.mxu0 0.0
      %2317 = vmatpush1.msra.mxu0 %v2297
      %2318 = vmatprep.subr.mxu0 0.0
      %2319 = vmatpush1.msra.mxu0 %v2298
      %2320 = vmatprep.subr.mxu0 0.0
      %2321 = vmatpush1.msra.mxu0 0.0
      %2322 = vmatprep.subr.mxu0 0.0
      %2323 = vmatpush1.msra.mxu0 0.0
      %2324 = vmatprep.subr.mxu0 0.0
      %2325 = vmatpush1.msra.mxu0 0.0
      %2326 = vmatprep.subr.mxu0 0.0
      %2327 = vmatpush1.msra.mxu0 0.0
      %2328 = vmatprep.subr.mxu0 0.0
      %2329 = vmatpush1.msra.mxu0 0.0
      %2330 = vmatprep.subr.mxu0 0.0
      %2331 = vmatpush1.msra.mxu0 0.0
      %2332 = vmatprep.subr.mxu0 0.0
      %2333 = vmatpush1.msra.mxu0 0.0
      %2334 = vmatprep.subr.mxu0 0.0
      %2335 = vmatpush1.msra.mxu0 0.0
      %2336 = vmatprep.subr.mxu0 0.0
      %2337 = vmatpush1.msra.mxu0 0.0
      %2338 = vmatprep.subr.mxu0 0.0
      %2339 = vmatpush1.msra.mxu0 0.0
      %2340 = vmatprep.subr.mxu0 0.0
      %2341 = vmatpush1.msra.mxu0 0.0
      %2342 = vmatprep.subr.mxu0 0.0
      %2343 = vmatpush1.msra.mxu0 0.0
      %2344 = vmatprep.subr.mxu0 0.0
      %2345 = vmatpush1.msra.mxu0 0.0
      %2346 = vmatprep.subr.mxu0 0.0
      %2347 = vmatpush1.msra.mxu0 0.0
      %2348 = vmatprep.subr.mxu0 0.0
      %2349 = vmatpush1.msra.mxu0 0.0
      %2350 = vmatprep.subr.mxu0 0.0
      %2351 = vmatpush1.msra.mxu0 0.0
      %2352 = vmatprep.subr.mxu0 0.0
      %2353 = vmatpush1.msra.mxu0 0.0
      %2354 = vmatprep.subr.mxu0 0.0
      %2355 = vmatpush1.msra.mxu0 0.0
      %2356 = vmatprep.subr.mxu0 0.0
      %2357 = vmatpush1.msra.mxu0 0.0
      %2358 = vmatprep.subr.mxu0 0.0
      %2359 = vmatpush1.msra.mxu0 0.0
      %2360 = vmatprep.subr.mxu0 0.0
      %2361 = vmatpush1.msra.mxu0 0.0
      %2362 = vmatprep.subr.mxu0 0.0
      %2363 = vmatpush1.msra.mxu0 0.0
      %2364 = vmatprep.subr.mxu0 0.0
      %2365 = vmatpush1.msra.mxu0 0.0
      %2366 = vmatprep.subr.mxu0 0.0
      %2367 = vmatpush1.msra.mxu0 0.0
      %2368 = vmatprep.subr.mxu0 0.0
      %2369 = vmatpush1.msra.mxu0 0.0
      %2370 = vmatprep.subr.mxu0 0.0
      %2371 = vmatpush1.msra.mxu0 0.0
      %2372 = vmatprep.subr.mxu0 0.0
      %2373 = vmatpush1.msra.mxu0 0.0
      %2374 = vmatprep.subr.mxu0 0.0
      %2375 = vmatpush1.msra.mxu0 0.0
      %2376 = vmatprep.mubr.f32.mxu0 0.0
      %2377 = vmatmul.mubr.f32.gmra.mrb[0].mxu0 %v2307
      %v2378 = vpop.f32.mrb[0].mxu0
      %v2379 = vadd.f32 %v2304, %v2378
      %v2380 = vpop.f32.mrb[0].mxu0
      %2381 = vmatprep.mubr.f32.mxu0 0.0
      %2382 = vmatmul.mubr.f32.gmra.mrb[0].mxu0 %v2310
      %v2383 = vpop.f32.mrb[0].mxu0
      %v2384 = vadd.f32 %v2304, %v2383
      %v2385 = vpop.f32.mrb[0].mxu0
      %2386 = vdwg.mxu0
      %v2387 = vadd.f32 %v845, %v2379
      %v2388 = vadd.f32 %v846, %v2384
      %v2389 = vsel %vm858, %v2387, 0.0
      %2390 = vadd.xlane.f32.xlu0 %v2389
      %v2391 = vpop.xlane.xlu0 %2390
      %v2392 = vsel %vm858, %v2388, 0.0
      %2393 = vadd.xlane.f32.xlu0 %v2392
      %v2394 = vpop.xlane.xlu0 %2393
      %v2395 = vrcp.pop 32.0
      %v2396 = vmul.f32 %v2391, %v2395
      %v2397 = vmul.f32 %v2394, %v2395
      %v2398 = vsub.f32 %v2387, %v2396
      %v2399 = vsub.f32 %v2388, %v2397
      %v2400 = vmul.f32 %v2398, %v2398
      %v2401 = vmul.f32 %v2399, %v2399
      %v2402 = vsel %vm858, %v2400, 0.0
      %2403 = vadd.xlane.f32.xlu0 %v2402
      %v2404 = vpop.xlane.xlu0 %2403
      %v2405 = vsel %vm858, %v2401, 0.0
      %2406 = vadd.xlane.f32.xlu0 %v2405
      %v2407 = vpop.xlane.xlu0 %2406
      %v2408 = vmul.f32 %v2404, %v2395
      %v2409 = vmul.f32 %v2407, %v2395
      %v2410 = vadd.f32 %v2408, 1e-05
      %v2411 = vadd.f32 %v2409, 1e-05
      %v2412 = vrsqrt.pop %v2410
      %v2413 = vrsqrt.pop %v2411
      %v2414 = vmul.f32 %v2398, %v2412
      %v2415 = vmul.f32 %v2399, %v2413
      %v2416 = vld [vmem:[%s711] sm:$0x1]
      %v2418 = vlaneseq
      %v2419 = vshrl.u32 %v2418, 7
      %v2420 = vsub.s32 0, %v2419
      %v2421 = vrot.slane %v2416, %v2420
      %v2423 = vmul.f32 %v2414, %v2421
      %v2424 = vmul.f32 %v2415, %v2421
      %v2425 = vld [vmem:[%s714] sm:$0x1]
      %v2427 = vlaneseq
      %v2428 = vshrl.u32 %v2427, 7
      %v2429 = vsub.s32 0, %v2428
      %v2430 = vrot.slane %v2425, %v2429
      %v2432 = vadd.f32 %v2423, %v2430
      %v2433 = vadd.f32 %v2424, %v2430
      %v2434 = vld [vmem:[%s719] sm:$0xff]
      %v2435 = vld [vmem:[%s719 + $0x8] sm:$0xff]
      %v2436 = vld [vmem:[%s719 + $0x10] sm:$0xff]
      %v2437 = vld [vmem:[%s719 + $0x18] sm:$0xff]
      %v2438 = vld [vmem:[%s719 + $0x20] sm:$0xff]
      %v2439 = vld [vmem:[%s719 + $0x28] sm:$0xff]
      %v2440 = vld [vmem:[%s719 + $0x30] sm:$0xff]
      %v2441 = vld [vmem:[%s719 + $0x38] sm:$0xff]
      %v2442 = vld [vmem:[%s719 + $0x40] sm:$0xff]
      %v2443 = vld [vmem:[%s719 + $0x48] sm:$0xff]
      %v2444 = vld [vmem:[%s719 + $0x50] sm:$0xff]
      %v2445 = vld [vmem:[%s719 + $0x58] sm:$0xff]
      %v2446 = vld [vmem:[%s719 + $0x60] sm:$0xff]
      %v2447 = vld [vmem:[%s719 + $0x68] sm:$0xff]
      %v2448 = vld [vmem:[%s719 + $0x70] sm:$0xff]
      %v2449 = vld [vmem:[%s719 + $0x78] sm:$0xff]
      %v2450 = vld [vmem:[%s719 + $0x80] sm:$0xff]
      %v2451 = vld [vmem:[%s719 + $0x88] sm:$0xff]
      %v2452 = vld [vmem:[%s719 + $0x90] sm:$0xff]
      %v2453 = vld [vmem:[%s719 + $0x98] sm:$0xff]
      %v2454 = vld [vmem:[%s719 + $0xa0] sm:$0xff]
      %v2455 = vld [vmem:[%s719 + $0xa8] sm:$0xff]
      %v2456 = vld [vmem:[%s719 + $0xb0] sm:$0xff]
      %v2457 = vld [vmem:[%s719 + $0xb8] sm:$0xff]
      %v2458 = vld [vmem:[%s719 + $0xc0] sm:$0xff]
      %v2459 = vld [vmem:[%s719 + $0xc8] sm:$0xff]
      %v2460 = vld [vmem:[%s719 + $0xd0] sm:$0xff]
      %v2461 = vld [vmem:[%s719 + $0xd8] sm:$0xff]
      %v2462 = vld [vmem:[%s719 + $0xe0] sm:$0xff]
      %v2463 = vld [vmem:[%s719 + $0xe8] sm:$0xff]
      %v2464 = vld [vmem:[%s719 + $0xf0] sm:$0xff]
      %v2465 = vld [vmem:[%s719 + $0xf8] sm:$0xff]
      %v2466 = vld [vmem:[%s719 + $0x100] sm:$0xff]
      %v2467 = vld [vmem:[%s719 + $0x108] sm:$0xff]
      %v2468 = vld [vmem:[%s719 + $0x110] sm:$0xff]
      %v2469 = vld [vmem:[%s719 + $0x118] sm:$0xff]
      %v2470 = vld [vmem:[%s719 + $0x120] sm:$0xff]
      %v2471 = vld [vmem:[%s719 + $0x128] sm:$0xff]
      %v2472 = vld [vmem:[%s719 + $0x130] sm:$0xff]
      %v2473 = vld [vmem:[%s719 + $0x138] sm:$0xff]
      %v2474 = vld [vmem:[%s719 + $0x140] sm:$0xff]
      %v2475 = vld [vmem:[%s719 + $0x148] sm:$0xff]
      %v2476 = vld [vmem:[%s719 + $0x150] sm:$0xff]
      %v2477 = vld [vmem:[%s719 + $0x158] sm:$0xff]
      %v2478 = vld [vmem:[%s719 + $0x160] sm:$0xff]
      %v2479 = vld [vmem:[%s719 + $0x168] sm:$0xff]
      %v2480 = vld [vmem:[%s719 + $0x170] sm:$0xff]
      %v2481 = vld [vmem:[%s719 + $0x178] sm:$0xff]
      %v2482 = vld [vmem:[%s719 + $0x180] sm:$0xff]
      %v2483 = vld [vmem:[%s719 + $0x188] sm:$0xff]
      %v2484 = vld [vmem:[%s719 + $0x190] sm:$0xff]
      %v2485 = vld [vmem:[%s719 + $0x198] sm:$0xff]
      %v2486 = vld [vmem:[%s719 + $0x1a0] sm:$0xff]
      %v2487 = vld [vmem:[%s719 + $0x1a8] sm:$0xff]
      %v2488 = vld [vmem:[%s719 + $0x1b0] sm:$0xff]
      %v2489 = vld [vmem:[%s719 + $0x1b8] sm:$0xff]
      %v2490 = vld [vmem:[%s719 + $0x1c0] sm:$0xff]
      %v2491 = vld [vmem:[%s719 + $0x1c8] sm:$0xff]
      %v2492 = vld [vmem:[%s719 + $0x1d0] sm:$0xff]
      %v2493 = vld [vmem:[%s719 + $0x1d8] sm:$0xff]
      %v2494 = vld [vmem:[%s719 + $0x1e0] sm:$0xff]
      %v2495 = vld [vmem:[%s719 + $0x1e8] sm:$0xff]
      %v2496 = vld [vmem:[%s719 + $0x1f0] sm:$0xff]
      %v2497 = vld [vmem:[%s719 + $0x1f8] sm:$0xff]
      %v2498 = vld [vmem:[%s723] sm:$0xff]
      %v2499 = vld [vmem:[%s723 + $0x8] sm:$0xff]
      %v2502 = vlaneseq
      %v2503 = vshrl.u32 %v2502, 7
      %v2504 = vsub.s32 0, %v2503
      %v2505 = vrot.slane %v2498, %v2504
      %v2506 = vlaneseq
      %v2507 = vshrl.u32 %v2506, 7
      %v2508 = vsub.s32 1, %v2507
      %v2509 = vrot.slane %v2498, %v2508
      %v2510 = vlaneseq
      %v2511 = vshrl.u32 %v2510, 7
      %v2512 = vsub.s32 2, %v2511
      %v2513 = vrot.slane %v2498, %v2512
      %v2514 = vlaneseq
      %v2515 = vshrl.u32 %v2514, 7
      %v2516 = vsub.s32 3, %v2515
      %v2517 = vrot.slane %v2498, %v2516
      %v2518 = vlaneseq
      %v2519 = vshrl.u32 %v2518, 7
      %v2520 = vsub.s32 4, %v2519
      %v2521 = vrot.slane %v2498, %v2520
      %v2522 = vlaneseq
      %v2523 = vshrl.u32 %v2522, 7
      %v2524 = vsub.s32 5, %v2523
      %v2525 = vrot.slane %v2498, %v2524
      %v2526 = vlaneseq
      %v2527 = vshrl.u32 %v2526, 7
      %v2528 = vsub.s32 6, %v2527
      %v2529 = vrot.slane %v2498, %v2528
      %v2530 = vlaneseq
      %v2531 = vshrl.u32 %v2530, 7
      %v2532 = vsub.s32 7, %v2531
      %v2533 = vrot.slane %v2498, %v2532
      %v2534 = vlaneseq
      %v2535 = vshrl.u32 %v2534, 7
      %v2536 = vsub.s32 0, %v2535
      %v2537 = vrot.slane %v2499, %v2536
      %v2538 = vlaneseq
      %v2539 = vshrl.u32 %v2538, 7
      %v2540 = vsub.s32 1, %v2539
      %v2541 = vrot.slane %v2499, %v2540
      %v2542 = vlaneseq
      %v2543 = vshrl.u32 %v2542, 7
      %v2544 = vsub.s32 2, %v2543
      %v2545 = vrot.slane %v2499, %v2544
      %v2546 = vlaneseq
      %v2547 = vshrl.u32 %v2546, 7
      %v2548 = vsub.s32 3, %v2547
      %v2549 = vrot.slane %v2499, %v2548
      %v2550 = vlaneseq
      %v2551 = vshrl.u32 %v2550, 7
      %v2552 = vsub.s32 4, %v2551
      %v2553 = vrot.slane %v2499, %v2552
      %v2554 = vlaneseq
      %v2555 = vshrl.u32 %v2554, 7
      %v2556 = vsub.s32 5, %v2555
      %v2557 = vrot.slane %v2499, %v2556
      %v2558 = vlaneseq
      %v2559 = vshrl.u32 %v2558, 7
      %v2560 = vsub.s32 6, %v2559
      %v2561 = vrot.slane %v2499, %v2560
      %v2562 = vlaneseq
      %v2563 = vshrl.u32 %v2562, 7
      %v2564 = vsub.s32 7, %v2563
      %v2565 = vrot.slane %v2499, %v2564
      %v2583 = vsel %vm858, %v2432, 0
      %v2586 = vsel %vm858, %v2433, 0
      %2588 = vmatprep.subr.mxu0 %v2435
      %2589 = vmatpush1.msra.mxu0 %v2434
      %2590 = vmatprep.subr.mxu0 %v2451
      %2591 = vmatpush1.msra.mxu0 %v2450
      %2592 = vmatprep.subr.mxu0 %v2467
      %2593 = vmatpush1.msra.mxu0 %v2466
      %2594 = vmatprep.subr.mxu0 %v2483
      %2595 = vmatpush1.msra.mxu0 %v2482
      %2596 = vmatprep.subr.mxu0 0.0
      %2597 = vmatpush1.msra.mxu0 0.0
      %2598 = vmatprep.subr.mxu0 0.0
      %2599 = vmatpush1.msra.mxu0 0.0
      %2600 = vmatprep.subr.mxu0 0.0
      %2601 = vmatpush1.msra.mxu0 0.0
      %2602 = vmatprep.subr.mxu0 0.0
      %2603 = vmatpush1.msra.mxu0 0.0
      %2604 = vmatprep.subr.mxu0 0.0
      %2605 = vmatpush1.msra.mxu0 0.0
      %2606 = vmatprep.subr.mxu0 0.0
      %2607 = vmatpush1.msra.mxu0 0.0
      %2608 = vmatprep.subr.mxu0 0.0
      %2609 = vmatpush1.msra.mxu0 0.0
      %2610 = vmatprep.subr.mxu0 0.0
      %2611 = vmatpush1.msra.mxu0 0.0
      %2612 = vmatprep.subr.mxu0 0.0
      %2613 = vmatpush1.msra.mxu0 0.0
      %2614 = vmatprep.subr.mxu0 0.0
      %2615 = vmatpush1.msra.mxu0 0.0
      %2616 = vmatprep.subr.mxu0 0.0
      %2617 = vmatpush1.msra.mxu0 0.0
      %2618 = vmatprep.subr.mxu0 0.0
      %2619 = vmatpush1.msra.mxu0 0.0
      %2620 = vmatprep.subr.mxu0 0.0
      %2621 = vmatpush1.msra.mxu0 0.0
      %2622 = vmatprep.subr.mxu0 0.0
      %2623 = vmatpush1.msra.mxu0 0.0
      %2624 = vmatprep.subr.mxu0 0.0
      %2625 = vmatpush1.msra.mxu0 0.0
      %2626 = vmatprep.subr.mxu0 0.0
      %2627 = vmatpush1.msra.mxu0 0.0
      %2628 = vmatprep.subr.mxu0 0.0
      %2629 = vmatpush1.msra.mxu0 0.0
      %2630 = vmatprep.subr.mxu0 0.0
      %2631 = vmatpush1.msra.mxu0 0.0
      %2632 = vmatprep.subr.mxu0 0.0
      %2633 = vmatpush1.msra.mxu0 0.0
      %2634 = vmatprep.subr.mxu0 0.0
      %2635 = vmatpush1.msra.mxu0 0.0
      %2636 = vmatprep.subr.mxu0 0.0
      %2637 = vmatpush1.msra.mxu0 0.0
      %2638 = vmatprep.subr.mxu0 0.0
      %2639 = vmatpush1.msra.mxu0 0.0
      %2640 = vmatprep.subr.mxu0 0.0
      %2641 = vmatpush1.msra.mxu0 0.0
      %2642 = vmatprep.subr.mxu0 0.0
      %2643 = vmatpush1.msra.mxu0 0.0
      %2644 = vmatprep.subr.mxu0 0.0
      %2645 = vmatpush1.msra.mxu0 0.0
      %2646 = vmatprep.subr.mxu0 0.0
      %2647 = vmatpush1.msra.mxu0 0.0
      %2648 = vmatprep.subr.mxu0 0.0
      %2649 = vmatpush1.msra.mxu0 0.0
      %2650 = vmatprep.subr.mxu0 0.0
      %2651 = vmatpush1.msra.mxu0 0.0
      %2652 = vmatprep.mubr.f32.mxu0 0.0
      %2653 = vmatmul.mubr.f32.gmra.mrb[0].mxu0 %v2583
      %v2654 = vpop.f32.mrb[0].mxu0
      %v2655 = vadd.f32 %v2505, %v2654
      %v2656 = vpop.f32.mrb[0].mxu0
      %v2657 = vadd.f32 %v2509, %v2656
      %2658 = vmatprep.mubr.f32.mxu0 0.0
      %2659 = vmatmul.mubr.f32.gmra.mrb[0].mxu0 %v2586
      %v2660 = vpop.f32.mrb[0].mxu0
      %v2661 = vadd.f32 %v2505, %v2660
      %v2662 = vpop.f32.mrb[0].mxu0
      %v2663 = vadd.f32 %v2509, %v2662
      %2664 = vdwg.mxu0
      %2665 = vmatprep.subr.mxu0 %v2437
      %2666 = vmatpush1.msra.mxu0 %v2436
      %2667 = vmatprep.subr.mxu0 %v2453
      %2668 = vmatpush1.msra.mxu0 %v2452
      %2669 = vmatprep.subr.mxu0 %v2469
      %2670 = vmatpush1.msra.mxu0 %v2468
      %2671 = vmatprep.subr.mxu0 %v2485
      %2672 = vmatpush1.msra.mxu0 %v2484
      %2673 = vmatprep.subr.mxu0 0.0
      %2674 = vmatpush1.msra.mxu0 0.0
      %2675 = vmatprep.subr.mxu0 0.0
      %2676 = vmatpush1.msra.mxu0 0.0
      %2677 = vmatprep.subr.mxu0 0.0
      %2678 = vmatpush1.msra.mxu0 0.0
      %2679 = vmatprep.subr.mxu0 0.0
      %2680 = vmatpush1.msra.mxu0 0.0
      %2681 = vmatprep.subr.mxu0 0.0
      %2682 = vmatpush1.msra.mxu0 0.0
      %2683 = vmatprep.subr.mxu0 0.0
      %2684 = vmatpush1.msra.mxu0 0.0
      %2685 = vmatprep.subr.mxu0 0.0
      %2686 = vmatpush1.msra.mxu0 0.0
      %2687 = vmatprep.subr.mxu0 0.0
      %2688 = vmatpush1.msra.mxu0 0.0
      %2689 = vmatprep.subr.mxu0 0.0
      %2690 = vmatpush1.msra.mxu0 0.0
      %2691 = vmatprep.subr.mxu0 0.0
      %2692 = vmatpush1.msra.mxu0 0.0
      %2693 = vmatprep.subr.mxu0 0.0
      %2694 = vmatpush1.msra.mxu0 0.0
      %2695 = vmatprep.subr.mxu0 0.0
      %2696 = vmatpush1.msra.mxu0 0.0
      %2697 = vmatprep.subr.mxu0 0.0
      %2698 = vmatpush1.msra.mxu0 0.0
      %2699 = vmatprep.subr.mxu0 0.0
      %2700 = vmatpush1.msra.mxu0 0.0
      %2701 = vmatprep.subr.mxu0 0.0
      %2702 = vmatpush1.msra.mxu0 0.0
      %2703 = vmatprep.subr.mxu0 0.0
      %2704 = vmatpush1.msra.mxu0 0.0
      %2705 = vmatprep.subr.mxu0 0.0
      %2706 = vmatpush1.msra.mxu0 0.0
      %2707 = vmatprep.subr.mxu0 0.0
      %2708 = vmatpush1.msra.mxu0 0.0
      %2709 = vmatprep.subr.mxu0 0.0
      %2710 = vmatpush1.msra.mxu0 0.0
      %2711 = vmatprep.subr.mxu0 0.0
      %2712 = vmatpush1.msra.mxu0 0.0
      %2713 = vmatprep.subr.mxu0 0.0
      %2714 = vmatpush1.msra.mxu0 0.0
      %2715 = vmatprep.subr.mxu0 0.0
      %2716 = vmatpush1.msra.mxu0 0.0
      %2717 = vmatprep.subr.mxu0 0.0
      %2718 = vmatpush1.msra.mxu0 0.0
      %2719 = vmatprep.subr.mxu0 0.0
      %2720 = vmatpush1.msra.mxu0 0.0
      %2721 = vmatprep.subr.mxu0 0.0
      %2722 = vmatpush1.msra.mxu0 0.0
      %2723 = vmatprep.subr.mxu0 0.0
      %2724 = vmatpush1.msra.mxu0 0.0
      %2725 = vmatprep.subr.mxu0 0.0
      %2726 = vmatpush1.msra.mxu0 0.0
      %2727 = vmatprep.subr.mxu0 0.0
      %2728 = vmatpush1.msra.mxu0 0.0
      %2729 = vmatprep.mubr.f32.mxu0 0.0
      %2730 = vmatmul.mubr.f32.gmra.mrb[0].mxu0 %v2583
      %v2731 = vpop.f32.mrb[0].mxu0
      %v2732 = vadd.f32 %v2513, %v2731
      %v2733 = vpop.f32.mrb[0].mxu0
      %v2734 = vadd.f32 %v2517, %v2733
      %2735 = vmatprep.mubr.f32.mxu0 0.0
      %2736 = vmatmul.mubr.f32.gmra.mrb[0].mxu0 %v2586
      %v2737 = vpop.f32.mrb[0].mxu0
      %v2738 = vadd.f32 %v2513, %v2737
      %v2739 = vpop.f32.mrb[0].mxu0
      %v2740 = vadd.f32 %v2517, %v2739
      %2741 = vdwg.mxu0
      %2742 = vmatprep.subr.mxu0 %v2439
      %2743 = vmatpush1.msra.mxu0 %v2438
      %2744 = vmatprep.subr.mxu0 %v2455
      %2745 = vmatpush1.msra.mxu0 %v2454
      %2746 = vmatprep.subr.mxu0 %v2471
      %2747 = vmatpush1.msra.mxu0 %v2470
      %2748 = vmatprep.subr.mxu0 %v2487
      %2749 = vmatpush1.msra.mxu0 %v2486
      %2750 = vmatprep.subr.mxu0 0.0
      %2751 = vmatpush1.msra.mxu0 0.0
      %2752 = vmatprep.subr.mxu0 0.0
      %2753 = vmatpush1.msra.mxu0 0.0
      %2754 = vmatprep.subr.mxu0 0.0
      %2755 = vmatpush1.msra.mxu0 0.0
      %2756 = vmatprep.subr.mxu0 0.0
      %2757 = vmatpush1.msra.mxu0 0.0
      %2758 = vmatprep.subr.mxu0 0.0
      %2759 = vmatpush1.msra.mxu0 0.0
      %2760 = vmatprep.subr.mxu0 0.0
      %2761 = vmatpush1.msra.mxu0 0.0
      %2762 = vmatprep.subr.mxu0 0.0
      %2763 = vmatpush1.msra.mxu0 0.0
      %2764 = vmatprep.subr.mxu0 0.0
      %2765 = vmatpush1.msra.mxu0 0.0
      %2766 = vmatprep.subr.mxu0 0.0
      %2767 = vmatpush1.msra.mxu0 0.0
      %2768 = vmatprep.subr.mxu0 0.0
      %2769 = vmatpush1.msra.mxu0 0.0
      %2770 = vmatprep.subr.mxu0 0.0
      %2771 = vmatpush1.msra.mxu0 0.0
      %2772 = vmatprep.subr.mxu0 0.0
      %2773 = vmatpush1.msra.mxu0 0.0
      %2774 = vmatprep.subr.mxu0 0.0
      %2775 = vmatpush1.msra.mxu0 0.0
      %2776 = vmatprep.subr.mxu0 0.0
      %2777 = vmatpush1.msra.mxu0 0.0
      %2778 = vmatprep.subr.mxu0 0.0
      %2779 = vmatpush1.msra.mxu0 0.0
      %2780 = vmatprep.subr.mxu0 0.0
      %2781 = vmatpush1.msra.mxu0 0.0
      %2782 = vmatprep.subr.mxu0 0.0
      %2783 = vmatpush1.msra.mxu0 0.0
      %2784 = vmatprep.subr.mxu0 0.0
      %2785 = vmatpush1.msra.mxu0 0.0
      %2786 = vmatprep.subr.mxu0 0.0
      %2787 = vmatpush1.msra.mxu0 0.0
      %2788 = vmatprep.subr.mxu0 0.0
      %2789 = vmatpush1.msra.mxu0 0.0
      %2790 = vmatprep.subr.mxu0 0.0
      %2791 = vmatpush1.msra.mxu0 0.0
      %2792 = vmatprep.subr.mxu0 0.0
      %2793 = vmatpush1.msra.mxu0 0.0
      %2794 = vmatprep.subr.mxu0 0.0
      %2795 = vmatpush1.msra.mxu0 0.0
      %2796 = vmatprep.subr.mxu0 0.0
      %2797 = vmatpush1.msra.mxu0 0.0
      %2798 = vmatprep.subr.mxu0 0.0
      %2799 = vmatpush1.msra.mxu0 0.0
      %2800 = vmatprep.subr.mxu0 0.0
      %2801 = vmatpush1.msra.mxu0 0.0
      %2802 = vmatprep.subr.mxu0 0.0
      %2803 = vmatpush1.msra.mxu0 0.0
      %2804 = vmatprep.subr.mxu0 0.0
      %2805 = vmatpush1.msra.mxu0 0.0
      %2806 = vmatprep.mubr.f32.mxu0 0.0
      %2807 = vmatmul.mubr.f32.gmra.mrb[0].mxu0 %v2583
      %v2808 = vpop.f32.mrb[0].mxu0
      %v2809 = vadd.f32 %v2521, %v2808
      %v2810 = vpop.f32.mrb[0].mxu0
      %v2811 = vadd.f32 %v2525, %v2810
      %2812 = vmatprep.mubr.f32.mxu0 0.0
      %2813 = vmatmul.mubr.f32.gmra.mrb[0].mxu0 %v2586
      %v2814 = vpop.f32.mrb[0].mxu0
      %v2815 = vadd.f32 %v2521, %v2814
      %v2816 = vpop.f32.mrb[0].mxu0
      %v2817 = vadd.f32 %v2525, %v2816
      %2818 = vdwg.mxu0
      %2819 = vmatprep.subr.mxu0 %v2441
      %2820 = vmatpush1.msra.mxu0 %v2440
      %2821 = vmatprep.subr.mxu0 %v2457
      %2822 = vmatpush1.msra.mxu0 %v2456
      %2823 = vmatprep.subr.mxu0 %v2473
      %2824 = vmatpush1.msra.mxu0 %v2472
      %2825 = vmatprep.subr.mxu0 %v2489
      %2826 = vmatpush1.msra.mxu0 %v2488
      %2827 = vmatprep.subr.mxu0 0.0
      %2828 = vmatpush1.msra.mxu0 0.0
      %2829 = vmatprep.subr.mxu0 0.0
      %2830 = vmatpush1.msra.mxu0 0.0
      %2831 = vmatprep.subr.mxu0 0.0
      %2832 = vmatpush1.msra.mxu0 0.0
      %2833 = vmatprep.subr.mxu0 0.0
      %2834 = vmatpush1.msra.mxu0 0.0
      %2835 = vmatprep.subr.mxu0 0.0
      %2836 = vmatpush1.msra.mxu0 0.0
      %2837 = vmatprep.subr.mxu0 0.0
      %2838 = vmatpush1.msra.mxu0 0.0
      %2839 = vmatprep.subr.mxu0 0.0
      %2840 = vmatpush1.msra.mxu0 0.0
      %2841 = vmatprep.subr.mxu0 0.0
      %2842 = vmatpush1.msra.mxu0 0.0
      %2843 = vmatprep.subr.mxu0 0.0
      %2844 = vmatpush1.msra.mxu0 0.0
      %2845 = vmatprep.subr.mxu0 0.0
      %2846 = vmatpush1.msra.mxu0 0.0
      %2847 = vmatprep.subr.mxu0 0.0
      %2848 = vmatpush1.msra.mxu0 0.0
      %2849 = vmatprep.subr.mxu0 0.0
      %2850 = vmatpush1.msra.mxu0 0.0
      %2851 = vmatprep.subr.mxu0 0.0
      %2852 = vmatpush1.msra.mxu0 0.0
      %2853 = vmatprep.subr.mxu0 0.0
      %2854 = vmatpush1.msra.mxu0 0.0
      %2855 = vmatprep.subr.mxu0 0.0
      %2856 = vmatpush1.msra.mxu0 0.0
      %2857 = vmatprep.subr.mxu0 0.0
      %2858 = vmatpush1.msra.mxu0 0.0
      %2859 = vmatprep.subr.mxu0 0.0
      %2860 = vmatpush1.msra.mxu0 0.0
      %2861 = vmatprep.subr.mxu0 0.0
      %2862 = vmatpush1.msra.mxu0 0.0
      %2863 = vmatprep.subr.mxu0 0.0
      %2864 = vmatpush1.msra.mxu0 0.0
      %2865 = vmatprep.subr.mxu0 0.0
      %2866 = vmatpush1.msra.mxu0 0.0
      %2867 = vmatprep.subr.mxu0 0.0
      %2868 = vmatpush1.msra.mxu0 0.0
      %2869 = vmatprep.subr.mxu0 0.0
      %2870 = vmatpush1.msra.mxu0 0.0
      %2871 = vmatprep.subr.mxu0 0.0
      %2872 = vmatpush1.msra.mxu0 0.0
      %2873 = vmatprep.subr.mxu0 0.0
      %2874 = vmatpush1.msra.mxu0 0.0
      %2875 = vmatprep.subr.mxu0 0.0
      %2876 = vmatpush1.msra.mxu0 0.0
      %2877 = vmatprep.subr.mxu0 0.0
      %2878 = vmatpush1.msra.mxu0 0.0
      %2879 = vmatprep.subr.mxu0 0.0
      %2880 = vmatpush1.msra.mxu0 0.0
      %2881 = vmatprep.subr.mxu0 0.0
      %2882 = vmatpush1.msra.mxu0 0.0
      %2883 = vmatprep.mubr.f32.mxu0 0.0
      %2884 = vmatmul.mubr.f32.gmra.mrb[0].mxu0 %v2583
      %v2885 = vpop.f32.mrb[0].mxu0
      %v2886 = vadd.f32 %v2529, %v2885
      %v2887 = vpop.f32.mrb[0].mxu0
      %v2888 = vadd.f32 %v2533, %v2887
      %2889 = vmatprep.mubr.f32.mxu0 0.0
      %2890 = vmatmul.mubr.f32.gmra.mrb[0].mxu0 %v2586
      %v2891 = vpop.f32.mrb[0].mxu0
      %v2892 = vadd.f32 %v2529, %v2891
      %v2893 = vpop.f32.mrb[0].mxu0
      %v2894 = vadd.f32 %v2533, %v2893
      %2895 = vdwg.mxu0
      %2896 = vmatprep.subr.mxu0 %v2443
      %2897 = vmatpush1.msra.mxu0 %v2442
      %2898 = vmatprep.subr.mxu0 %v2459
      %2899 = vmatpush1.msra.mxu0 %v2458
      %2900 = vmatprep.subr.mxu0 %v2475
      %2901 = vmatpush1.msra.mxu0 %v2474
      %2902 = vmatprep.subr.mxu0 %v2491
      %2903 = vmatpush1.msra.mxu0 %v2490
      %2904 = vmatprep.subr.mxu0 0.0
      %2905 = vmatpush1.msra.mxu0 0.0
      %2906 = vmatprep.subr.mxu0 0.0
      %2907 = vmatpush1.msra.mxu0 0.0
      %2908 = vmatprep.subr.mxu0 0.0
      %2909 = vmatpush1.msra.mxu0 0.0
      %2910 = vmatprep.subr.mxu0 0.0
      %2911 = vmatpush1.msra.mxu0 0.0
      %2912 = vmatprep.subr.mxu0 0.0
      %2913 = vmatpush1.msra.mxu0 0.0
      %2914 = vmatprep.subr.mxu0 0.0
      %2915 = vmatpush1.msra.mxu0 0.0
      %2916 = vmatprep.subr.mxu0 0.0
      %2917 = vmatpush1.msra.mxu0 0.0
      %2918 = vmatprep.subr.mxu0 0.0
      %2919 = vmatpush1.msra.mxu0 0.0
      %2920 = vmatprep.subr.mxu0 0.0
      %2921 = vmatpush1.msra.mxu0 0.0
      %2922 = vmatprep.subr.mxu0 0.0
      %2923 = vmatpush1.msra.mxu0 0.0
      %2924 = vmatprep.subr.mxu0 0.0
      %2925 = vmatpush1.msra.mxu0 0.0
      %2926 = vmatprep.subr.mxu0 0.0
      %2927 = vmatpush1.msra.mxu0 0.0
      %2928 = vmatprep.subr.mxu0 0.0
      %2929 = vmatpush1.msra.mxu0 0.0
      %2930 = vmatprep.subr.mxu0 0.0
      %2931 = vmatpush1.msra.mxu0 0.0
      %2932 = vmatprep.subr.mxu0 0.0
      %2933 = vmatpush1.msra.mxu0 0.0
      %2934 = vmatprep.subr.mxu0 0.0
      %2935 = vmatpush1.msra.mxu0 0.0
      %2936 = vmatprep.subr.mxu0 0.0
      %2937 = vmatpush1.msra.mxu0 0.0
      %2938 = vmatprep.subr.mxu0 0.0
      %2939 = vmatpush1.msra.mxu0 0.0
      %2940 = vmatprep.subr.mxu0 0.0
      %2941 = vmatpush1.msra.mxu0 0.0
      %2942 = vmatprep.subr.mxu0 0.0
      %2943 = vmatpush1.msra.mxu0 0.0
      %2944 = vmatprep.subr.mxu0 0.0
      %2945 = vmatpush1.msra.mxu0 0.0
      %2946 = vmatprep.subr.mxu0 0.0
      %2947 = vmatpush1.msra.mxu0 0.0
      %2948 = vmatprep.subr.mxu0 0.0
      %2949 = vmatpush1.msra.mxu0 0.0
      %2950 = vmatprep.subr.mxu0 0.0
      %2951 = vmatpush1.msra.mxu0 0.0
      %2952 = vmatprep.subr.mxu0 0.0
      %2953 = vmatpush1.msra.mxu0 0.0
      %2954 = vmatprep.subr.mxu0 0.0
      %2955 = vmatpush1.msra.mxu0 0.0
      %2956 = vmatprep.subr.mxu0 0.0
      %2957 = vmatpush1.msra.mxu0 0.0
      %2958 = vmatprep.subr.mxu0 0.0
      %2959 = vmatpush1.msra.mxu0 0.0
      %2960 = vmatprep.mubr.f32.mxu0 0.0
      %2961 = vmatmul.mubr.f32.gmra.mrb[0].mxu0 %v2583
      %v2962 = vpop.f32.mrb[0].mxu0
      %v2963 = vadd.f32 %v2537, %v2962
      %v2964 = vpop.f32.mrb[0].mxu0
      %v2965 = vadd.f32 %v2541, %v2964
      %2966 = vmatprep.mubr.f32.mxu0 0.0
      %2967 = vmatmul.mubr.f32.gmra.mrb[0].mxu0 %v2586
      %v2968 = vpop.f32.mrb[0].mxu0
      %v2969 = vadd.f32 %v2537, %v2968
      %v2970 = vpop.f32.mrb[0].mxu0
      %v2971 = vadd.f32 %v2541, %v2970
      %2972 = vdwg.mxu0
      %2973 = vmatprep.subr.mxu0 %v2445
      %2974 = vmatpush1.msra.mxu0 %v2444
      %2975 = vmatprep.subr.mxu0 %v2461
      %2976 = vmatpush1.msra.mxu0 %v2460
      %2977 = vmatprep.subr.mxu0 %v2477
      %2978 = vmatpush1.msra.mxu0 %v2476
      %2979 = vmatprep.subr.mxu0 %v2493
      %2980 = vmatpush1.msra.mxu0 %v2492
      %2981 = vmatprep.subr.mxu0 0.0
      %2982 = vmatpush1.msra.mxu0 0.0
      %2983 = vmatprep.subr.mxu0 0.0
      %2984 = vmatpush1.msra.mxu0 0.0
      %2985 = vmatprep.subr.mxu0 0.0
      %2986 = vmatpush1.msra.mxu0 0.0
      %2987 = vmatprep.subr.mxu0 0.0
      %2988 = vmatpush1.msra.mxu0 0.0
      %2989 = vmatprep.subr.mxu0 0.0
      %2990 = vmatpush1.msra.mxu0 0.0
      %2991 = vmatprep.subr.mxu0 0.0
      %2992 = vmatpush1.msra.mxu0 0.0
      %2993 = vmatprep.subr.mxu0 0.0
      %2994 = vmatpush1.msra.mxu0 0.0
      %2995 = vmatprep.subr.mxu0 0.0
      %2996 = vmatpush1.msra.mxu0 0.0
      %2997 = vmatprep.subr.mxu0 0.0
      %2998 = vmatpush1.msra.mxu0 0.0
      %2999 = vmatprep.subr.mxu0 0.0
      %3000 = vmatpush1.msra.mxu0 0.0
      %3001 = vmatprep.subr.mxu0 0.0
      %3002 = vmatpush1.msra.mxu0 0.0
      %3003 = vmatprep.subr.mxu0 0.0
      %3004 = vmatpush1.msra.mxu0 0.0
      %3005 = vmatprep.subr.mxu0 0.0
      %3006 = vmatpush1.msra.mxu0 0.0
      %3007 = vmatprep.subr.mxu0 0.0
      %3008 = vmatpush1.msra.mxu0 0.0
      %3009 = vmatprep.subr.mxu0 0.0
      %3010 = vmatpush1.msra.mxu0 0.0
      %3011 = vmatprep.subr.mxu0 0.0
      %3012 = vmatpush1.msra.mxu0 0.0
      %3013 = vmatprep.subr.mxu0 0.0
      %3014 = vmatpush1.msra.mxu0 0.0
      %3015 = vmatprep.subr.mxu0 0.0
      %3016 = vmatpush1.msra.mxu0 0.0
      %3017 = vmatprep.subr.mxu0 0.0
      %3018 = vmatpush1.msra.mxu0 0.0
      %3019 = vmatprep.subr.mxu0 0.0
      %3020 = vmatpush1.msra.mxu0 0.0
      %3021 = vmatprep.subr.mxu0 0.0
      %3022 = vmatpush1.msra.mxu0 0.0
      %3023 = vmatprep.subr.mxu0 0.0
      %3024 = vmatpush1.msra.mxu0 0.0
      %3025 = vmatprep.subr.mxu0 0.0
      %3026 = vmatpush1.msra.mxu0 0.0
      %3027 = vmatprep.subr.mxu0 0.0
      %3028 = vmatpush1.msra.mxu0 0.0
      %3029 = vmatprep.subr.mxu0 0.0
      %3030 = vmatpush1.msra.mxu0 0.0
      %3031 = vmatprep.subr.mxu0 0.0
      %3032 = vmatpush1.msra.mxu0 0.0
      %3033 = vmatprep.subr.mxu0 0.0
      %3034 = vmatpush1.msra.mxu0 0.0
      %3035 = vmatprep.subr.mxu0 0.0
      %3036 = vmatpush1.msra.mxu0 0.0
      %3037 = vmatprep.mubr.f32.mxu0 0.0
      %3038 = vmatmul.mubr.f32.gmra.mrb[0].mxu0 %v2583
      %v3039 = vpop.f32.mrb[0].mxu0
      %v3040 = vadd.f32 %v2545, %v3039
      %v3041 = vpop.f32.mrb[0].mxu0
      %v3042 = vadd.f32 %v2549, %v3041
      %3043 = vmatprep.mubr.f32.mxu0 0.0
      %3044 = vmatmul.mubr.f32.gmra.mrb[0].mxu0 %v2586
      %v3045 = vpop.f32.mrb[0].mxu0
      %v3046 = vadd.f32 %v2545, %v3045
      %v3047 = vpop.f32.mrb[0].mxu0
      %v3048 = vadd.f32 %v2549, %v3047
      %3049 = vdwg.mxu0
      %3050 = vmatprep.subr.mxu0 %v2447
      %3051 = vmatpush1.msra.mxu0 %v2446
      %3052 = vmatprep.subr.mxu0 %v2463
      %3053 = vmatpush1.msra.mxu0 %v2462
      %3054 = vmatprep.subr.mxu0 %v2479
      %3055 = vmatpush1.msra.mxu0 %v2478
      %3056 = vmatprep.subr.mxu0 %v2495
      %3057 = vmatpush1.msra.mxu0 %v2494
      %3058 = vmatprep.subr.mxu0 0.0
      %3059 = vmatpush1.msra.mxu0 0.0
      %3060 = vmatprep.subr.mxu0 0.0
      %3061 = vmatpush1.msra.mxu0 0.0
      %3062 = vmatprep.subr.mxu0 0.0
      %3063 = vmatpush1.msra.mxu0 0.0
      %3064 = vmatprep.subr.mxu0 0.0
      %3065 = vmatpush1.msra.mxu0 0.0
      %3066 = vmatprep.subr.mxu0 0.0
      %3067 = vmatpush1.msra.mxu0 0.0
      %3068 = vmatprep.subr.mxu0 0.0
      %3069 = vmatpush1.msra.mxu0 0.0
      %3070 = vmatprep.subr.mxu0 0.0
      %3071 = vmatpush1.msra.mxu0 0.0
      %3072 = vmatprep.subr.mxu0 0.0
      %3073 = vmatpush1.msra.mxu0 0.0
      %3074 = vmatprep.subr.mxu0 0.0
      %3075 = vmatpush1.msra.mxu0 0.0
      %3076 = vmatprep.subr.mxu0 0.0
      %3077 = vmatpush1.msra.mxu0 0.0
      %3078 = vmatprep.subr.mxu0 0.0
      %3079 = vmatpush1.msra.mxu0 0.0
      %3080 = vmatprep.subr.mxu0 0.0
      %3081 = vmatpush1.msra.mxu0 0.0
      %3082 = vmatprep.subr.mxu0 0.0
      %3083 = vmatpush1.msra.mxu0 0.0
      %3084 = vmatprep.subr.mxu0 0.0
      %3085 = vmatpush1.msra.mxu0 0.0
      %3086 = vmatprep.subr.mxu0 0.0
      %3087 = vmatpush1.msra.mxu0 0.0
      %3088 = vmatprep.subr.mxu0 0.0
      %3089 = vmatpush1.msra.mxu0 0.0
      %3090 = vmatprep.subr.mxu0 0.0
      %3091 = vmatpush1.msra.mxu0 0.0
      %3092 = vmatprep.subr.mxu0 0.0
      %3093 = vmatpush1.msra.mxu0 0.0
      %3094 = vmatprep.subr.mxu0 0.0
      %3095 = vmatpush1.msra.mxu0 0.0
      %3096 = vmatprep.subr.mxu0 0.0
      %3097 = vmatpush1.msra.mxu0 0.0
      %3098 = vmatprep.subr.mxu0 0.0
      %3099 = vmatpush1.msra.mxu0 0.0
      %3100 = vmatprep.subr.mxu0 0.0
      %3101 = vmatpush1.msra.mxu0 0.0
      %3102 = vmatprep.subr.mxu0 0.0
      %3103 = vmatpush1.msra.mxu0 0.0
      %3104 = vmatprep.subr.mxu0 0.0
      %3105 = vmatpush1.msra.mxu0 0.0
      %3106 = vmatprep.subr.mxu0 0.0
      %3107 = vmatpush1.msra.mxu0 0.0
      %3108 = vmatprep.subr.mxu0 0.0
      %3109 = vmatpush1.msra.mxu0 0.0
      %3110 = vmatprep.subr.mxu0 0.0
      %3111 = vmatpush1.msra.mxu0 0.0
      %3112 = vmatprep.subr.mxu0 0.0
      %3113 = vmatpush1.msra.mxu0 0.0
      %3114 = vmatprep.mubr.f32.mxu0 0.0
      %3115 = vmatmul.mubr.f32.gmra.mrb[0].mxu0 %v2583
      %v3116 = vpop.f32.mrb[0].mxu0
      %v3117 = vadd.f32 %v2553, %v3116
      %v3118 = vpop.f32.mrb[0].mxu0
      %v3119 = vadd.f32 %v2557, %v3118
      %3120 = vmatprep.mubr.f32.mxu0 0.0
      %3121 = vmatmul.mubr.f32.gmra.mrb[0].mxu0 %v2586
      %v3122 = vpop.f32.mrb[0].mxu0
      %v3123 = vadd.f32 %v2553, %v3122
      %v3124 = vpop.f32.mrb[0].mxu0
      %v3125 = vadd.f32 %v2557, %v3124
      %3126 = vdwg.mxu0
      %3127 = vmatprep.subr.mxu0 %v2449
      %3128 = vmatpush1.msra.mxu0 %v2448
      %3129 = vmatprep.subr.mxu0 %v2465
      %3130 = vmatpush1.msra.mxu0 %v2464
      %3131 = vmatprep.subr.mxu0 %v2481
      %3132 = vmatpush1.msra.mxu0 %v2480
      %3133 = vmatprep.subr.mxu0 %v2497
      %3134 = vmatpush1.msra.mxu0 %v2496
      %3135 = vmatprep.subr.mxu0 0.0
      %3136 = vmatpush1.msra.mxu0 0.0
      %3137 = vmatprep.subr.mxu0 0.0
      %3138 = vmatpush1.msra.mxu0 0.0
      %3139 = vmatprep.subr.mxu0 0.0
      %3140 = vmatpush1.msra.mxu0 0.0
      %3141 = vmatprep.subr.mxu0 0.0
      %3142 = vmatpush1.msra.mxu0 0.0
      %3143 = vmatprep.subr.mxu0 0.0
      %3144 = vmatpush1.msra.mxu0 0.0
      %3145 = vmatprep.subr.mxu0 0.0
      %3146 = vmatpush1.msra.mxu0 0.0
      %3147 = vmatprep.subr.mxu0 0.0
      %3148 = vmatpush1.msra.mxu0 0.0
      %3149 = vmatprep.subr.mxu0 0.0
      %3150 = vmatpush1.msra.mxu0 0.0
      %3151 = vmatprep.subr.mxu0 0.0
      %3152 = vmatpush1.msra.mxu0 0.0
      %3153 = vmatprep.subr.mxu0 0.0
      %3154 = vmatpush1.msra.mxu0 0.0
      %3155 = vmatprep.subr.mxu0 0.0
      %3156 = vmatpush1.msra.mxu0 0.0
      %3157 = vmatprep.subr.mxu0 0.0
      %3158 = vmatpush1.msra.mxu0 0.0
      %3159 = vmatprep.subr.mxu0 0.0
      %3160 = vmatpush1.msra.mxu0 0.0
      %3161 = vmatprep.subr.mxu0 0.0
      %3162 = vmatpush1.msra.mxu0 0.0
      %3163 = vmatprep.subr.mxu0 0.0
      %3164 = vmatpush1.msra.mxu0 0.0
      %3165 = vmatprep.subr.mxu0 0.0
      %3166 = vmatpush1.msra.mxu0 0.0
      %3167 = vmatprep.subr.mxu0 0.0
      %3168 = vmatpush1.msra.mxu0 0.0
      %3169 = vmatprep.subr.mxu0 0.0
      %3170 = vmatpush1.msra.mxu0 0.0
      %3171 = vmatprep.subr.mxu0 0.0
      %3172 = vmatpush1.msra.mxu0 0.0
      %3173 = vmatprep.subr.mxu0 0.0
      %3174 = vmatpush1.msra.mxu0 0.0
      %3175 = vmatprep.subr.mxu0 0.0
      %3176 = vmatpush1.msra.mxu0 0.0
      %3177 = vmatprep.subr.mxu0 0.0
      %3178 = vmatpush1.msra.mxu0 0.0
      %3179 = vmatprep.subr.mxu0 0.0
      %3180 = vmatpush1.msra.mxu0 0.0
      %3181 = vmatprep.subr.mxu0 0.0
      %3182 = vmatpush1.msra.mxu0 0.0
      %3183 = vmatprep.subr.mxu0 0.0
      %3184 = vmatpush1.msra.mxu0 0.0
      %3185 = vmatprep.subr.mxu0 0.0
      %3186 = vmatpush1.msra.mxu0 0.0
      %3187 = vmatprep.subr.mxu0 0.0
      %3188 = vmatpush1.msra.mxu0 0.0
      %3189 = vmatprep.subr.mxu0 0.0
      %3190 = vmatpush1.msra.mxu0 0.0
      %3191 = vmatprep.mubr.f32.mxu0 0.0
      %3192 = vmatmul.mubr.f32.gmra.mrb[0].mxu0 %v2583
      %v3193 = vpop.f32.mrb[0].mxu0
      %v3194 = vadd.f32 %v2561, %v3193
      %v3195 = vpop.f32.mrb[0].mxu0
      %v3196 = vadd.f32 %v2565, %v3195
      %3197 = vmatprep.mubr.f32.mxu0 0.0
      %3198 = vmatmul.mubr.f32.gmra.mrb[0].mxu0 %v2586
      %v3199 = vpop.f32.mrb[0].mxu0
      %v3200 = vadd.f32 %v2561, %v3199
      %v3201 = vpop.f32.mrb[0].mxu0
      %v3202 = vadd.f32 %v2565, %v3201
      %3203 = vdwg.mxu0
      %v3204 = vmax.f32 %v2655, 0.0
      %v3205 = vmax.f32 %v2657, 0.0
      %v3206 = vmax.f32 %v2732, 0.0
      %v3207 = vmax.f32 %v2734, 0.0
      %v3208 = vmax.f32 %v2809, 0.0
      %v3209 = vmax.f32 %v2811, 0.0
      %v3210 = vmax.f32 %v2886, 0.0
      %v3211 = vmax.f32 %v2888, 0.0
      %v3212 = vmax.f32 %v2963, 0.0
      %v3213 = vmax.f32 %v2965, 0.0
      %v3214 = vmax.f32 %v3040, 0.0
      %v3215 = vmax.f32 %v3042, 0.0
      %v3216 = vmax.f32 %v3117, 0.0
      %v3217 = vmax.f32 %v3119, 0.0
      %v3218 = vmax.f32 %v3194, 0.0
      %v3219 = vmax.f32 %v3196, 0.0
      %v3220 = vmax.f32 %v2661, 0.0
      %v3221 = vmax.f32 %v2663, 0.0
      %v3222 = vmax.f32 %v2738, 0.0
      %v3223 = vmax.f32 %v2740, 0.0
      %v3224 = vmax.f32 %v2815, 0.0
      %v3225 = vmax.f32 %v2817, 0.0
      %v3226 = vmax.f32 %v2892, 0.0
      %v3227 = vmax.f32 %v2894, 0.0
      %v3228 = vmax.f32 %v2969, 0.0
      %v3229 = vmax.f32 %v2971, 0.0
      %v3230 = vmax.f32 %v3046, 0.0
      %v3231 = vmax.f32 %v3048, 0.0
      %v3232 = vmax.f32 %v3123, 0.0
      %v3233 = vmax.f32 %v3125, 0.0
      %v3234 = vmax.f32 %v3200, 0.0
      %v3235 = vmax.f32 %v3202, 0.0
      %v3236 = vld [vmem:[%s728] sm:$0xff]
      %v3237 = vld [vmem:[%s728 + $0x8] sm:$0xff]
      %v3238 = vld [vmem:[%s728 + $0x10] sm:$0xff]
      %v3239 = vld [vmem:[%s728 + $0x18] sm:$0xff]
      %v3240 = vld [vmem:[%s728 + $0x20] sm:$0xff]
      %v3241 = vld [vmem:[%s728 + $0x28] sm:$0xff]
      %v3242 = vld [vmem:[%s728 + $0x30] sm:$0xff]
      %v3243 = vld [vmem:[%s728 + $0x38] sm:$0xff]
      %v3244 = vld [vmem:[%s728 + $0x40] sm:$0xff]
      %v3245 = vld [vmem:[%s728 + $0x48] sm:$0xff]
      %v3246 = vld [vmem:[%s728 + $0x50] sm:$0xff]
      %v3247 = vld [vmem:[%s728 + $0x58] sm:$0xff]
      %v3248 = vld [vmem:[%s728 + $0x60] sm:$0xff]
      %v3249 = vld [vmem:[%s728 + $0x68] sm:$0xff]
      %v3250 = vld [vmem:[%s728 + $0x70] sm:$0xff]
      %v3251 = vld [vmem:[%s728 + $0x78] sm:$0xff]
      %v3252 = vld [vmem:[%s728 + $0x80] sm:$0xff]
      %v3253 = vld [vmem:[%s728 + $0x88] sm:$0xff]
      %v3254 = vld [vmem:[%s728 + $0x90] sm:$0xff]
      %v3255 = vld [vmem:[%s728 + $0x98] sm:$0xff]
      %v3256 = vld [vmem:[%s728 + $0xa0] sm:$0xff]
      %v3257 = vld [vmem:[%s728 + $0xa8] sm:$0xff]
      %v3258 = vld [vmem:[%s728 + $0xb0] sm:$0xff]
      %v3259 = vld [vmem:[%s728 + $0xb8] sm:$0xff]
      %v3260 = vld [vmem:[%s728 + $0xc0] sm:$0xff]
      %v3261 = vld [vmem:[%s728 + $0xc8] sm:$0xff]
      %v3262 = vld [vmem:[%s728 + $0xd0] sm:$0xff]
      %v3263 = vld [vmem:[%s728 + $0xd8] sm:$0xff]
      %v3264 = vld [vmem:[%s728 + $0xe0] sm:$0xff]
      %v3265 = vld [vmem:[%s728 + $0xe8] sm:$0xff]
      %v3266 = vld [vmem:[%s728 + $0xf0] sm:$0xff]
      %v3267 = vld [vmem:[%s728 + $0xf8] sm:$0xff]
      %v3268 = vld [vmem:[%s728 + $0x100] sm:$0xff]
      %v3269 = vld [vmem:[%s728 + $0x108] sm:$0xff]
      %v3270 = vld [vmem:[%s728 + $0x110] sm:$0xff]
      %v3271 = vld [vmem:[%s728 + $0x118] sm:$0xff]
      %v3272 = vld [vmem:[%s728 + $0x120] sm:$0xff]
      %v3273 = vld [vmem:[%s728 + $0x128] sm:$0xff]
      %v3274 = vld [vmem:[%s728 + $0x130] sm:$0xff]
      %v3275 = vld [vmem:[%s728 + $0x138] sm:$0xff]
      %v3276 = vld [vmem:[%s728 + $0x140] sm:$0xff]
      %v3277 = vld [vmem:[%s728 + $0x148] sm:$0xff]
      %v3278 = vld [vmem:[%s728 + $0x150] sm:$0xff]
      %v3279 = vld [vmem:[%s728 + $0x158] sm:$0xff]
      %v3280 = vld [vmem:[%s728 + $0x160] sm:$0xff]
      %v3281 = vld [vmem:[%s728 + $0x168] sm:$0xff]
      %v3282 = vld [vmem:[%s728 + $0x170] sm:$0xff]
      %v3283 = vld [vmem:[%s728 + $0x178] sm:$0xff]
      %v3284 = vld [vmem:[%s728 + $0x180] sm:$0xff]
      %v3285 = vld [vmem:[%s728 + $0x188] sm:$0xff]
      %v3286 = vld [vmem:[%s728 + $0x190] sm:$0xff]
      %v3287 = vld [vmem:[%s728 + $0x198] sm:$0xff]
      %v3288 = vld [vmem:[%s728 + $0x1a0] sm:$0xff]
      %v3289 = vld [vmem:[%s728 + $0x1a8] sm:$0xff]
      %v3290 = vld [vmem:[%s728 + $0x1b0] sm:$0xff]
      %v3291 = vld [vmem:[%s728 + $0x1b8] sm:$0xff]
      %v3292 = vld [vmem:[%s728 + $0x1c0] sm:$0xff]
      %v3293 = vld [vmem:[%s728 + $0x1c8] sm:$0xff]
      %v3294 = vld [vmem:[%s728 + $0x1d0] sm:$0xff]
      %v3295 = vld [vmem:[%s728 + $0x1d8] sm:$0xff]
      %v3296 = vld [vmem:[%s728 + $0x1e0] sm:$0xff]
      %v3297 = vld [vmem:[%s728 + $0x1e8] sm:$0xff]
      %v3298 = vld [vmem:[%s728 + $0x1f0] sm:$0xff]
      %v3299 = vld [vmem:[%s728 + $0x1f8] sm:$0xff]
      %v3300 = vld [vmem:[%s728 + $0x200] sm:$0xff]
      %v3301 = vld [vmem:[%s728 + $0x208] sm:$0xff]
      %v3302 = vld [vmem:[%s728 + $0x210] sm:$0xff]
      %v3303 = vld [vmem:[%s728 + $0x218] sm:$0xff]
      %v3304 = vld [vmem:[%s728 + $0x220] sm:$0xff]
      %v3305 = vld [vmem:[%s728 + $0x228] sm:$0xff]
      %v3306 = vld [vmem:[%s728 + $0x230] sm:$0xff]
      %v3307 = vld [vmem:[%s728 + $0x238] sm:$0xff]
      %v3308 = vld [vmem:[%s728 + $0x240] sm:$0xff]
      %v3309 = vld [vmem:[%s728 + $0x248] sm:$0xff]
      %v3310 = vld [vmem:[%s728 + $0x250] sm:$0xff]
      %v3311 = vld [vmem:[%s728 + $0x258] sm:$0xff]
      %v3312 = vld [vmem:[%s728 + $0x260] sm:$0xff]
      %v3313 = vld [vmem:[%s728 + $0x268] sm:$0xff]
      %v3314 = vld [vmem:[%s728 + $0x270] sm:$0xff]
      %v3315 = vld [vmem:[%s728 + $0x278] sm:$0xff]
      %v3316 = vld [vmem:[%s728 + $0x280] sm:$0xff]
      %v3317 = vld [vmem:[%s728 + $0x288] sm:$0xff]
      %v3318 = vld [vmem:[%s728 + $0x290] sm:$0xff]
      %v3319 = vld [vmem:[%s728 + $0x298] sm:$0xff]
      %v3320 = vld [vmem:[%s728 + $0x2a0] sm:$0xff]
      %v3321 = vld [vmem:[%s728 + $0x2a8] sm:$0xff]
      %v3322 = vld [vmem:[%s728 + $0x2b0] sm:$0xff]
      %v3323 = vld [vmem:[%s728 + $0x2b8] sm:$0xff]
      %v3324 = vld [vmem:[%s728 + $0x2c0] sm:$0xff]
      %v3325 = vld [vmem:[%s728 + $0x2c8] sm:$0xff]
      %v3326 = vld [vmem:[%s728 + $0x2d0] sm:$0xff]
      %v3327 = vld [vmem:[%s728 + $0x2d8] sm:$0xff]
      %v3328 = vld [vmem:[%s728 + $0x2e0] sm:$0xff]
      %v3329 = vld [vmem:[%s728 + $0x2e8] sm:$0xff]
      %v3330 = vld [vmem:[%s728 + $0x2f0] sm:$0xff]
      %v3331 = vld [vmem:[%s728 + $0x2f8] sm:$0xff]
      %v3332 = vld [vmem:[%s728 + $0x300] sm:$0xff]
      %v3333 = vld [vmem:[%s728 + $0x308] sm:$0xff]
      %v3334 = vld [vmem:[%s728 + $0x310] sm:$0xff]
      %v3335 = vld [vmem:[%s728 + $0x318] sm:$0xff]
      %v3336 = vld [vmem:[%s728 + $0x320] sm:$0xff]
      %v3337 = vld [vmem:[%s728 + $0x328] sm:$0xff]
      %v3338 = vld [vmem:[%s728 + $0x330] sm:$0xff]
      %v3339 = vld [vmem:[%s728 + $0x338] sm:$0xff]
      %v3340 = vld [vmem:[%s728 + $0x340] sm:$0xff]
      %v3341 = vld [vmem:[%s728 + $0x348] sm:$0xff]
      %v3342 = vld [vmem:[%s728 + $0x350] sm:$0xff]
      %v3343 = vld [vmem:[%s728 + $0x358] sm:$0xff]
      %v3344 = vld [vmem:[%s728 + $0x360] sm:$0xff]
      %v3345 = vld [vmem:[%s728 + $0x368] sm:$0xff]
      %v3346 = vld [vmem:[%s728 + $0x370] sm:$0xff]
      %v3347 = vld [vmem:[%s728 + $0x378] sm:$0xff]
      %v3348 = vld [vmem:[%s728 + $0x380] sm:$0xff]
      %v3349 = vld [vmem:[%s728 + $0x388] sm:$0xff]
      %v3350 = vld [vmem:[%s728 + $0x390] sm:$0xff]
      %v3351 = vld [vmem:[%s728 + $0x398] sm:$0xff]
      %v3352 = vld [vmem:[%s728 + $0x3a0] sm:$0xff]
      %v3353 = vld [vmem:[%s728 + $0x3a8] sm:$0xff]
      %v3354 = vld [vmem:[%s728 + $0x3b0] sm:$0xff]
      %v3355 = vld [vmem:[%s728 + $0x3b8] sm:$0xff]
      %v3356 = vld [vmem:[%s728 + $0x3c0] sm:$0xff]
      %v3357 = vld [vmem:[%s728 + $0x3c8] sm:$0xff]
      %v3358 = vld [vmem:[%s728 + $0x3d0] sm:$0xff]
      %v3359 = vld [vmem:[%s728 + $0x3d8] sm:$0xff]
      %v3360 = vld [vmem:[%s728 + $0x3e0] sm:$0xff]
      %v3361 = vld [vmem:[%s728 + $0x3e8] sm:$0xff]
      %v3362 = vld [vmem:[%s728 + $0x3f0] sm:$0xff]
      %v3363 = vld [vmem:[%s728 + $0x3f8] sm:$0xff]
      %v3364 = vld [vmem:[%s728 + $0x400] sm:$0xff]
      %v3365 = vld [vmem:[%s728 + $0x408] sm:$0xff]
      %v3366 = vld [vmem:[%s728 + $0x410] sm:$0xff]
      %v3367 = vld [vmem:[%s728 + $0x418] sm:$0xff]
      %v3368 = vld [vmem:[%s728 + $0x420] sm:$0xff]
      %v3369 = vld [vmem:[%s728 + $0x428] sm:$0xff]
      %v3370 = vld [vmem:[%s728 + $0x430] sm:$0xff]
      %v3371 = vld [vmem:[%s728 + $0x438] sm:$0xff]
      %v3372 = vld [vmem:[%s728 + $0x440] sm:$0xff]
      %v3373 = vld [vmem:[%s728 + $0x448] sm:$0xff]
      %v3374 = vld [vmem:[%s728 + $0x450] sm:$0xff]
      %v3375 = vld [vmem:[%s728 + $0x458] sm:$0xff]
      %v3376 = vld [vmem:[%s728 + $0x460] sm:$0xff]
      %v3377 = vld [vmem:[%s728 + $0x468] sm:$0xff]
      %v3378 = vld [vmem:[%s728 + $0x470] sm:$0xff]
      %v3379 = vld [vmem:[%s728 + $0x478] sm:$0xff]
      %v3380 = vld [vmem:[%s728 + $0x480] sm:$0xff]
      %v3381 = vld [vmem:[%s728 + $0x488] sm:$0xff]
      %v3382 = vld [vmem:[%s728 + $0x490] sm:$0xff]
      %v3383 = vld [vmem:[%s728 + $0x498] sm:$0xff]
      %v3384 = vld [vmem:[%s728 + $0x4a0] sm:$0xff]
      %v3385 = vld [vmem:[%s728 + $0x4a8] sm:$0xff]
      %v3386 = vld [vmem:[%s728 + $0x4b0] sm:$0xff]
      %v3387 = vld [vmem:[%s728 + $0x4b8] sm:$0xff]
      %v3388 = vld [vmem:[%s728 + $0x4c0] sm:$0xff]
      %v3389 = vld [vmem:[%s728 + $0x4c8] sm:$0xff]
      %v3390 = vld [vmem:[%s728 + $0x4d0] sm:$0xff]
      %v3391 = vld [vmem:[%s728 + $0x4d8] sm:$0xff]
      %v3392 = vld [vmem:[%s728 + $0x4e0] sm:$0xff]
      %v3393 = vld [vmem:[%s728 + $0x4e8] sm:$0xff]
      %v3394 = vld [vmem:[%s728 + $0x4f0] sm:$0xff]
      %v3395 = vld [vmem:[%s728 + $0x4f8] sm:$0xff]
      %v3396 = vld [vmem:[%s728 + $0x500] sm:$0xff]
      %v3397 = vld [vmem:[%s728 + $0x508] sm:$0xff]
      %v3398 = vld [vmem:[%s728 + $0x510] sm:$0xff]
      %v3399 = vld [vmem:[%s728 + $0x518] sm:$0xff]
      %v3400 = vld [vmem:[%s728 + $0x520] sm:$0xff]
      %v3401 = vld [vmem:[%s728 + $0x528] sm:$0xff]
      %v3402 = vld [vmem:[%s728 + $0x530] sm:$0xff]
      %v3403 = vld [vmem:[%s728 + $0x538] sm:$0xff]
      %v3404 = vld [vmem:[%s728 + $0x540] sm:$0xff]
      %v3405 = vld [vmem:[%s728 + $0x548] sm:$0xff]
      %v3406 = vld [vmem:[%s728 + $0x550] sm:$0xff]
      %v3407 = vld [vmem:[%s728 + $0x558] sm:$0xff]
      %v3408 = vld [vmem:[%s728 + $0x560] sm:$0xff]
      %v3409 = vld [vmem:[%s728 + $0x568] sm:$0xff]
      %v3410 = vld [vmem:[%s728 + $0x570] sm:$0xff]
      %v3411 = vld [vmem:[%s728 + $0x578] sm:$0xff]
      %v3412 = vld [vmem:[%s728 + $0x580] sm:$0xff]
      %v3413 = vld [vmem:[%s728 + $0x588] sm:$0xff]
      %v3414 = vld [vmem:[%s728 + $0x590] sm:$0xff]
      %v3415 = vld [vmem:[%s728 + $0x598] sm:$0xff]
      %v3416 = vld [vmem:[%s728 + $0x5a0] sm:$0xff]
      %v3417 = vld [vmem:[%s728 + $0x5a8] sm:$0xff]
      %v3418 = vld [vmem:[%s728 + $0x5b0] sm:$0xff]
      %v3419 = vld [vmem:[%s728 + $0x5b8] sm:$0xff]
      %v3420 = vld [vmem:[%s728 + $0x5c0] sm:$0xff]
      %v3421 = vld [vmem:[%s728 + $0x5c8] sm:$0xff]
      %v3422 = vld [vmem:[%s728 + $0x5d0] sm:$0xff]
      %v3423 = vld [vmem:[%s728 + $0x5d8] sm:$0xff]
      %v3424 = vld [vmem:[%s728 + $0x5e0] sm:$0xff]
      %v3425 = vld [vmem:[%s728 + $0x5e8] sm:$0xff]
      %v3426 = vld [vmem:[%s728 + $0x5f0] sm:$0xff]
      %v3427 = vld [vmem:[%s728 + $0x5f8] sm:$0xff]
      %v3428 = vld [vmem:[%s728 + $0x600] sm:$0xff]
      %v3429 = vld [vmem:[%s728 + $0x608] sm:$0xff]
      %v3430 = vld [vmem:[%s728 + $0x610] sm:$0xff]
      %v3431 = vld [vmem:[%s728 + $0x618] sm:$0xff]
      %v3432 = vld [vmem:[%s728 + $0x620] sm:$0xff]
      %v3433 = vld [vmem:[%s728 + $0x628] sm:$0xff]
      %v3434 = vld [vmem:[%s728 + $0x630] sm:$0xff]
      %v3435 = vld [vmem:[%s728 + $0x638] sm:$0xff]
      %v3436 = vld [vmem:[%s728 + $0x640] sm:$0xff]
      %v3437 = vld [vmem:[%s728 + $0x648] sm:$0xff]
      %v3438 = vld [vmem:[%s728 + $0x650] sm:$0xff]
      %v3439 = vld [vmem:[%s728 + $0x658] sm:$0xff]
      %v3440 = vld [vmem:[%s728 + $0x660] sm:$0xff]
      %v3441 = vld [vmem:[%s728 + $0x668] sm:$0xff]
      %v3442 = vld [vmem:[%s728 + $0x670] sm:$0xff]
      %v3443 = vld [vmem:[%s728 + $0x678] sm:$0xff]
      %v3444 = vld [vmem:[%s728 + $0x680] sm:$0xff]
      %v3445 = vld [vmem:[%s728 + $0x688] sm:$0xff]
      %v3446 = vld [vmem:[%s728 + $0x690] sm:$0xff]
      %v3447 = vld [vmem:[%s728 + $0x698] sm:$0xff]
      %v3448 = vld [vmem:[%s728 + $0x6a0] sm:$0xff]
      %v3449 = vld [vmem:[%s728 + $0x6a8] sm:$0xff]
      %v3450 = vld [vmem:[%s728 + $0x6b0] sm:$0xff]
      %v3451 = vld [vmem:[%s728 + $0x6b8] sm:$0xff]
      %v3452 = vld [vmem:[%s728 + $0x6c0] sm:$0xff]
      %v3453 = vld [vmem:[%s728 + $0x6c8] sm:$0xff]
      %v3454 = vld [vmem:[%s728 + $0x6d0] sm:$0xff]
      %v3455 = vld [vmem:[%s728 + $0x6d8] sm:$0xff]
      %v3456 = vld [vmem:[%s728 + $0x6e0] sm:$0xff]
      %v3457 = vld [vmem:[%s728 + $0x6e8] sm:$0xff]
      %v3458 = vld [vmem:[%s728 + $0x6f0] sm:$0xff]
      %v3459 = vld [vmem:[%s728 + $0x6f8] sm:$0xff]
      %v3460 = vld [vmem:[%s728 + $0x700] sm:$0xff]
      %v3461 = vld [vmem:[%s728 + $0x708] sm:$0xff]
      %v3462 = vld [vmem:[%s728 + $0x710] sm:$0xff]
      %v3463 = vld [vmem:[%s728 + $0x718] sm:$0xff]
      %v3464 = vld [vmem:[%s728 + $0x720] sm:$0xff]
      %v3465 = vld [vmem:[%s728 + $0x728] sm:$0xff]
      %v3466 = vld [vmem:[%s728 + $0x730] sm:$0xff]
      %v3467 = vld [vmem:[%s728 + $0x738] sm:$0xff]
      %v3468 = vld [vmem:[%s728 + $0x740] sm:$0xff]
      %v3469 = vld [vmem:[%s728 + $0x748] sm:$0xff]
      %v3470 = vld [vmem:[%s728 + $0x750] sm:$0xff]
      %v3471 = vld [vmem:[%s728 + $0x758] sm:$0xff]
      %v3472 = vld [vmem:[%s728 + $0x760] sm:$0xff]
      %v3473 = vld [vmem:[%s728 + $0x768] sm:$0xff]
      %v3474 = vld [vmem:[%s728 + $0x770] sm:$0xff]
      %v3475 = vld [vmem:[%s728 + $0x778] sm:$0xff]
      %v3476 = vld [vmem:[%s728 + $0x780] sm:$0xff]
      %v3477 = vld [vmem:[%s728 + $0x788] sm:$0xff]
      %v3478 = vld [vmem:[%s728 + $0x790] sm:$0xff]
      %v3479 = vld [vmem:[%s728 + $0x798] sm:$0xff]
      %v3480 = vld [vmem:[%s728 + $0x7a0] sm:$0xff]
      %v3481 = vld [vmem:[%s728 + $0x7a8] sm:$0xff]
      %v3482 = vld [vmem:[%s728 + $0x7b0] sm:$0xff]
      %v3483 = vld [vmem:[%s728 + $0x7b8] sm:$0xff]
      %v3484 = vld [vmem:[%s728 + $0x7c0] sm:$0xff]
      %v3485 = vld [vmem:[%s728 + $0x7c8] sm:$0xff]
      %v3486 = vld [vmem:[%s728 + $0x7d0] sm:$0xff]
      %v3487 = vld [vmem:[%s728 + $0x7d8] sm:$0xff]
      %v3488 = vld [vmem:[%s728 + $0x7e0] sm:$0xff]
      %v3489 = vld [vmem:[%s728 + $0x7e8] sm:$0xff]
      %v3490 = vld [vmem:[%s728 + $0x7f0] sm:$0xff]
      %v3491 = vld [vmem:[%s728 + $0x7f8] sm:$0xff]
      %v3492 = vld [vmem:[%s731] sm:$0x1]
      %v3494 = vlaneseq
      %v3495 = vshrl.u32 %v3494, 7
      %v3496 = vsub.s32 0, %v3495
      %v3497 = vrot.slane %v3492, %v3496
      %3499 = vmatprep.subr.mxu0 0.0
      %3500 = vmatpush1.msra.mxu0 %v3236
      %3501 = vmatprep.subr.mxu0 0.0
      %3502 = vmatpush1.msra.mxu0 %v3237
      %3503 = vmatprep.subr.mxu0 0.0
      %3504 = vmatpush1.msra.mxu0 %v3238
      %3505 = vmatprep.subr.mxu0 0.0
      %3506 = vmatpush1.msra.mxu0 %v3239
      %3507 = vmatprep.subr.mxu0 0.0
      %3508 = vmatpush1.msra.mxu0 %v3240
      %3509 = vmatprep.subr.mxu0 0.0
      %3510 = vmatpush1.msra.mxu0 %v3241
      %3511 = vmatprep.subr.mxu0 0.0
      %3512 = vmatpush1.msra.mxu0 %v3242
      %3513 = vmatprep.subr.mxu0 0.0
      %3514 = vmatpush1.msra.mxu0 %v3243
      %3515 = vmatprep.subr.mxu0 0.0
      %3516 = vmatpush1.msra.mxu0 %v3244
      %3517 = vmatprep.subr.mxu0 0.0
      %3518 = vmatpush1.msra.mxu0 %v3245
      %3519 = vmatprep.subr.mxu0 0.0
      %3520 = vmatpush1.msra.mxu0 %v3246
      %3521 = vmatprep.subr.mxu0 0.0
      %3522 = vmatpush1.msra.mxu0 %v3247
      %3523 = vmatprep.subr.mxu0 0.0
      %3524 = vmatpush1.msra.mxu0 %v3248
      %3525 = vmatprep.subr.mxu0 0.0
      %3526 = vmatpush1.msra.mxu0 %v3249
      %3527 = vmatprep.subr.mxu0 0.0
      %3528 = vmatpush1.msra.mxu0 %v3250
      %3529 = vmatprep.subr.mxu0 0.0
      %3530 = vmatpush1.msra.mxu0 %v3251
      %3531 = vmatprep.subr.mxu0 0.0
      %3532 = vmatpush1.msra.mxu0 %v3252
      %3533 = vmatprep.subr.mxu0 0.0
      %3534 = vmatpush1.msra.mxu0 %v3253
      %3535 = vmatprep.subr.mxu0 0.0
      %3536 = vmatpush1.msra.mxu0 %v3254
      %3537 = vmatprep.subr.mxu0 0.0
      %3538 = vmatpush1.msra.mxu0 %v3255
      %3539 = vmatprep.subr.mxu0 0.0
      %3540 = vmatpush1.msra.mxu0 %v3256
      %3541 = vmatprep.subr.mxu0 0.0
      %3542 = vmatpush1.msra.mxu0 %v3257
      %3543 = vmatprep.subr.mxu0 0.0
      %3544 = vmatpush1.msra.mxu0 %v3258
      %3545 = vmatprep.subr.mxu0 0.0
      %3546 = vmatpush1.msra.mxu0 %v3259
      %3547 = vmatprep.subr.mxu0 0.0
      %3548 = vmatpush1.msra.mxu0 %v3260
      %3549 = vmatprep.subr.mxu0 0.0
      %3550 = vmatpush1.msra.mxu0 %v3261
      %3551 = vmatprep.subr.mxu0 0.0
      %3552 = vmatpush1.msra.mxu0 %v3262
      %3553 = vmatprep.subr.mxu0 0.0
      %3554 = vmatpush1.msra.mxu0 %v3263
      %3555 = vmatprep.subr.mxu0 0.0
      %3556 = vmatpush1.msra.mxu0 %v3264
      %3557 = vmatprep.subr.mxu0 0.0
      %3558 = vmatpush1.msra.mxu0 %v3265
      %3559 = vmatprep.subr.mxu0 0.0
      %3560 = vmatpush1.msra.mxu0 %v3266
      %3561 = vmatprep.subr.mxu0 0.0
      %3562 = vmatpush1.msra.mxu0 %v3267
      %3563 = vmatprep.mubr.f32.mxu0 %v3205
      %3564 = vmatmul.mubr.f32.gmra.mrb[0].mxu0 %v3204
      %v3565 = vpop.f32.mrb[0].mxu0
      %v3566 = vadd.f32 %v3497, %v3565
      %v3567 = vpop.f32.mrb[0].mxu0
      %3568 = vmatprep.mubr.f32.mxu0 %v3221
      %3569 = vmatmul.mubr.f32.gmra.mrb[0].mxu0 %v3220
      %v3570 = vpop.f32.mrb[0].mxu0
      %v3571 = vadd.f32 %v3497, %v3570
      %v3572 = vpop.f32.mrb[0].mxu0
      %3573 = vdwg.mxu0
      %3574 = vmatprep.subr.mxu0 0.0
      %3575 = vmatpush1.msra.mxu0 %v3268
      %3576 = vmatprep.subr.mxu0 0.0
      %3577 = vmatpush1.msra.mxu0 %v3269
      %3578 = vmatprep.subr.mxu0 0.0
      %3579 = vmatpush1.msra.mxu0 %v3270
      %3580 = vmatprep.subr.mxu0 0.0
      %3581 = vmatpush1.msra.mxu0 %v3271
      %3582 = vmatprep.subr.mxu0 0.0
      %3583 = vmatpush1.msra.mxu0 %v3272
      %3584 = vmatprep.subr.mxu0 0.0
      %3585 = vmatpush1.msra.mxu0 %v3273
      %3586 = vmatprep.subr.mxu0 0.0
      %3587 = vmatpush1.msra.mxu0 %v3274
      %3588 = vmatprep.subr.mxu0 0.0
      %3589 = vmatpush1.msra.mxu0 %v3275
      %3590 = vmatprep.subr.mxu0 0.0
      %3591 = vmatpush1.msra.mxu0 %v3276
      %3592 = vmatprep.subr.mxu0 0.0
      %3593 = vmatpush1.msra.mxu0 %v3277
      %3594 = vmatprep.subr.mxu0 0.0
      %3595 = vmatpush1.msra.mxu0 %v3278
      %3596 = vmatprep.subr.mxu0 0.0
      %3597 = vmatpush1.msra.mxu0 %v3279
      %3598 = vmatprep.subr.mxu0 0.0
      %3599 = vmatpush1.msra.mxu0 %v3280
      %3600 = vmatprep.subr.mxu0 0.0
      %3601 = vmatpush1.msra.mxu0 %v3281
      %3602 = vmatprep.subr.mxu0 0.0
      %3603 = vmatpush1.msra.mxu0 %v3282
      %3604 = vmatprep.subr.mxu0 0.0
      %3605 = vmatpush1.msra.mxu0 %v3283
      %3606 = vmatprep.subr.mxu0 0.0
      %3607 = vmatpush1.msra.mxu0 %v3284
      %3608 = vmatprep.subr.mxu0 0.0
      %3609 = vmatpush1.msra.mxu0 %v3285
      %3610 = vmatprep.subr.mxu0 0.0
      %3611 = vmatpush1.msra.mxu0 %v3286
      %3612 = vmatprep.subr.mxu0 0.0
      %3613 = vmatpush1.msra.mxu0 %v3287
      %3614 = vmatprep.subr.mxu0 0.0
      %3615 = vmatpush1.msra.mxu0 %v3288
      %3616 = vmatprep.subr.mxu0 0.0
      %3617 = vmatpush1.msra.mxu0 %v3289
      %3618 = vmatprep.subr.mxu0 0.0
      %3619 = vmatpush1.msra.mxu0 %v3290
      %3620 = vmatprep.subr.mxu0 0.0
      %3621 = vmatpush1.msra.mxu0 %v3291
      %3622 = vmatprep.subr.mxu0 0.0
      %3623 = vmatpush1.msra.mxu0 %v3292
      %3624 = vmatprep.subr.mxu0 0.0
      %3625 = vmatpush1.msra.mxu0 %v3293
      %3626 = vmatprep.subr.mxu0 0.0
      %3627 = vmatpush1.msra.mxu0 %v3294
      %3628 = vmatprep.subr.mxu0 0.0
      %3629 = vmatpush1.msra.mxu0 %v3295
      %3630 = vmatprep.subr.mxu0 0.0
      %3631 = vmatpush1.msra.mxu0 %v3296
      %3632 = vmatprep.subr.mxu0 0.0
      %3633 = vmatpush1.msra.mxu0 %v3297
      %3634 = vmatprep.subr.mxu0 0.0
      %3635 = vmatpush1.msra.mxu0 %v3298
      %3636 = vmatprep.subr.mxu0 0.0
      %3637 = vmatpush1.msra.mxu0 %v3299
      %3638 = vmatprep.mubr.f32.mxu0 %v3207
      %3639 = vmatmul.mubr.f32.gmra.mrb[0].mxu0 %v3206
      %v3640 = vpop.f32.mrb[0].mxu0
      %v3641 = vadd.f32 %v3566, %v3640
      %v3642 = vpop.f32.mrb[0].mxu0
      %3643 = vmatprep.mubr.f32.mxu0 %v3223
      %3644 = vmatmul.mubr.f32.gmra.mrb[0].mxu0 %v3222
      %v3645 = vpop.f32.mrb[0].mxu0
      %v3646 = vadd.f32 %v3571, %v3645
      %v3647 = vpop.f32.mrb[0].mxu0
      %3648 = vdwg.mxu0
      %3649 = vmatprep.subr.mxu0 0.0
      %3650 = vmatpush1.msra.mxu0 %v3300
      %3651 = vmatprep.subr.mxu0 0.0
      %3652 = vmatpush1.msra.mxu0 %v3301
      %3653 = vmatprep.subr.mxu0 0.0
      %3654 = vmatpush1.msra.mxu0 %v3302
      %3655 = vmatprep.subr.mxu0 0.0
      %3656 = vmatpush1.msra.mxu0 %v3303
      %3657 = vmatprep.subr.mxu0 0.0
      %3658 = vmatpush1.msra.mxu0 %v3304
      %3659 = vmatprep.subr.mxu0 0.0
      %3660 = vmatpush1.msra.mxu0 %v3305
      %3661 = vmatprep.subr.mxu0 0.0
      %3662 = vmatpush1.msra.mxu0 %v3306
      %3663 = vmatprep.subr.mxu0 0.0
      %3664 = vmatpush1.msra.mxu0 %v3307
      %3665 = vmatprep.subr.mxu0 0.0
      %3666 = vmatpush1.msra.mxu0 %v3308
      %3667 = vmatprep.subr.mxu0 0.0
      %3668 = vmatpush1.msra.mxu0 %v3309
      %3669 = vmatprep.subr.mxu0 0.0
      %3670 = vmatpush1.msra.mxu0 %v3310
      %3671 = vmatprep.subr.mxu0 0.0
      %3672 = vmatpush1.msra.mxu0 %v3311
      %3673 = vmatprep.subr.mxu0 0.0
      %3674 = vmatpush1.msra.mxu0 %v3312
      %3675 = vmatprep.subr.mxu0 0.0
      %3676 = vmatpush1.msra.mxu0 %v3313
      %3677 = vmatprep.subr.mxu0 0.0
      %3678 = vmatpush1.msra.mxu0 %v3314
      %3679 = vmatprep.subr.mxu0 0.0
      %3680 = vmatpush1.msra.mxu0 %v3315
      %3681 = vmatprep.subr.mxu0 0.0
      %3682 = vmatpush1.msra.mxu0 %v3316
      %3683 = vmatprep.subr.mxu0 0.0
      %3684 = vmatpush1.msra.mxu0 %v3317
      %3685 = vmatprep.subr.mxu0 0.0
      %3686 = vmatpush1.msra.mxu0 %v3318
      %3687 = vmatprep.subr.mxu0 0.0
      %3688 = vmatpush1.msra.mxu0 %v3319
      %3689 = vmatprep.subr.mxu0 0.0
      %3690 = vmatpush1.msra.mxu0 %v3320
      %3691 = vmatprep.subr.mxu0 0.0
      %3692 = vmatpush1.msra.mxu0 %v3321
      %3693 = vmatprep.subr.mxu0 0.0
      %3694 = vmatpush1.msra.mxu0 %v3322
      %3695 = vmatprep.subr.mxu0 0.0
      %3696 = vmatpush1.msra.mxu0 %v3323
      %3697 = vmatprep.subr.mxu0 0.0
      %3698 = vmatpush1.msra.mxu0 %v3324
      %3699 = vmatprep.subr.mxu0 0.0
      %3700 = vmatpush1.msra.mxu0 %v3325
      %3701 = vmatprep.subr.mxu0 0.0
      %3702 = vmatpush1.msra.mxu0 %v3326
      %3703 = vmatprep.subr.mxu0 0.0
      %3704 = vmatpush1.msra.mxu0 %v3327
      %3705 = vmatprep.subr.mxu0 0.0
      %3706 = vmatpush1.msra.mxu0 %v3328
      %3707 = vmatprep.subr.mxu0 0.0
      %3708 = vmatpush1.msra.mxu0 %v3329
      %3709 = vmatprep.subr.mxu0 0.0
      %3710 = vmatpush1.msra.mxu0 %v3330
      %3711 = vmatprep.subr.mxu0 0.0
      %3712 = vmatpush1.msra.mxu0 %v3331
      %3713 = vmatprep.mubr.f32.mxu0 %v3209
      %3714 = vmatmul.mubr.f32.gmra.mrb[0].mxu0 %v3208
      %v3715 = vpop.f32.mrb[0].mxu0
      %v3716 = vadd.f32 %v3641, %v3715
      %v3717 = vpop.f32.mrb[0].mxu0
      %3718 = vmatprep.mubr.f32.mxu0 %v3225
      %3719 = vmatmul.mubr.f32.gmra.mrb[0].mxu0 %v3224
      %v3720 = vpop.f32.mrb[0].mxu0
      %v3721 = vadd.f32 %v3646, %v3720
      %v3722 = vpop.f32.mrb[0].mxu0
      %3723 = vdwg.mxu0
      %3724 = vmatprep.subr.mxu0 0.0
      %3725 = vmatpush1.msra.mxu0 %v3332
      %3726 = vmatprep.subr.mxu0 0.0
      %3727 = vmatpush1.msra.mxu0 %v3333
      %3728 = vmatprep.subr.mxu0 0.0
      %3729 = vmatpush1.msra.mxu0 %v3334
      %3730 = vmatprep.subr.mxu0 0.0
      %3731 = vmatpush1.msra.mxu0 %v3335
      %3732 = vmatprep.subr.mxu0 0.0
      %3733 = vmatpush1.msra.mxu0 %v3336
      %3734 = vmatprep.subr.mxu0 0.0
      %3735 = vmatpush1.msra.mxu0 %v3337
      %3736 = vmatprep.subr.mxu0 0.0
      %3737 = vmatpush1.msra.mxu0 %v3338
      %3738 = vmatprep.subr.mxu0 0.0
      %3739 = vmatpush1.msra.mxu0 %v3339
      %3740 = vmatprep.subr.mxu0 0.0
      %3741 = vmatpush1.msra.mxu0 %v3340
      %3742 = vmatprep.subr.mxu0 0.0
      %3743 = vmatpush1.msra.mxu0 %v3341
      %3744 = vmatprep.subr.mxu0 0.0
      %3745 = vmatpush1.msra.mxu0 %v3342
      %3746 = vmatprep.subr.mxu0 0.0
      %3747 = vmatpush1.msra.mxu0 %v3343
      %3748 = vmatprep.subr.mxu0 0.0
      %3749 = vmatpush1.msra.mxu0 %v3344
      %3750 = vmatprep.subr.mxu0 0.0
      %3751 = vmatpush1.msra.mxu0 %v3345
      %3752 = vmatprep.subr.mxu0 0.0
      %3753 = vmatpush1.msra.mxu0 %v3346
      %3754 = vmatprep.subr.mxu0 0.0
      %3755 = vmatpush1.msra.mxu0 %v3347
      %3756 = vmatprep.subr.mxu0 0.0
      %3757 = vmatpush1.msra.mxu0 %v3348
      %3758 = vmatprep.subr.mxu0 0.0
      %3759 = vmatpush1.msra.mxu0 %v3349
      %3760 = vmatprep.subr.mxu0 0.0
      %3761 = vmatpush1.msra.mxu0 %v3350
      %3762 = vmatprep.subr.mxu0 0.0
      %3763 = vmatpush1.msra.mxu0 %v3351
      %3764 = vmatprep.subr.mxu0 0.0
      %3765 = vmatpush1.msra.mxu0 %v3352
      %3766 = vmatprep.subr.mxu0 0.0
      %3767 = vmatpush1.msra.mxu0 %v3353
      %3768 = vmatprep.subr.mxu0 0.0
      %3769 = vmatpush1.msra.mxu0 %v3354
      %3770 = vmatprep.subr.mxu0 0.0
      %3771 = vmatpush1.msra.mxu0 %v3355
      %3772 = vmatprep.subr.mxu0 0.0
      %3773 = vmatpush1.msra.mxu0 %v3356
      %3774 = vmatprep.subr.mxu0 0.0
      %3775 = vmatpush1.msra.mxu0 %v3357
      %3776 = vmatprep.subr.mxu0 0.0
      %3777 = vmatpush1.msra.mxu0 %v3358
      %3778 = vmatprep.subr.mxu0 0.0
      %3779 = vmatpush1.msra.mxu0 %v3359
      %3780 = vmatprep.subr.mxu0 0.0
      %3781 = vmatpush1.msra.mxu0 %v3360
      %3782 = vmatprep.subr.mxu0 0.0
      %3783 = vmatpush1.msra.mxu0 %v3361
      %3784 = vmatprep.subr.mxu0 0.0
      %3785 = vmatpush1.msra.mxu0 %v3362
      %3786 = vmatprep.subr.mxu0 0.0
      %3787 = vmatpush1.msra.mxu0 %v3363
      %3788 = vmatprep.mubr.f32.mxu0 %v3211
      %3789 = vmatmul.mubr.f32.gmra.mrb[0].mxu0 %v3210
      %v3790 = vpop.f32.mrb[0].mxu0
      %v3791 = vadd.f32 %v3716, %v3790
      %v3792 = vpop.f32.mrb[0].mxu0
      %3793 = vmatprep.mubr.f32.mxu0 %v3227
      %3794 = vmatmul.mubr.f32.gmra.mrb[0].mxu0 %v3226
      %v3795 = vpop.f32.mrb[0].mxu0
      %v3796 = vadd.f32 %v3721, %v3795
      %v3797 = vpop.f32.mrb[0].mxu0
      %3798 = vdwg.mxu0
      %3799 = vmatprep.subr.mxu0 0.0
      %3800 = vmatpush1.msra.mxu0 %v3364
      %3801 = vmatprep.subr.mxu0 0.0
      %3802 = vmatpush1.msra.mxu0 %v3365
      %3803 = vmatprep.subr.mxu0 0.0
      %3804 = vmatpush1.msra.mxu0 %v3366
      %3805 = vmatprep.subr.mxu0 0.0
      %3806 = vmatpush1.msra.mxu0 %v3367
      %3807 = vmatprep.subr.mxu0 0.0
      %3808 = vmatpush1.msra.mxu0 %v3368
      %3809 = vmatprep.subr.mxu0 0.0
      %3810 = vmatpush1.msra.mxu0 %v3369
      %3811 = vmatprep.subr.mxu0 0.0
      %3812 = vmatpush1.msra.mxu0 %v3370
      %3813 = vmatprep.subr.mxu0 0.0
      %3814 = vmatpush1.msra.mxu0 %v3371
      %3815 = vmatprep.subr.mxu0 0.0
      %3816 = vmatpush1.msra.mxu0 %v3372
      %3817 = vmatprep.subr.mxu0 0.0
      %3818 = vmatpush1.msra.mxu0 %v3373
      %3819 = vmatprep.subr.mxu0 0.0
      %3820 = vmatpush1.msra.mxu0 %v3374
      %3821 = vmatprep.subr.mxu0 0.0
      %3822 = vmatpush1.msra.mxu0 %v3375
      %3823 = vmatprep.subr.mxu0 0.0
      %3824 = vmatpush1.msra.mxu0 %v3376
      %3825 = vmatprep.subr.mxu0 0.0
      %3826 = vmatpush1.msra.mxu0 %v3377
      %3827 = vmatprep.subr.mxu0 0.0
      %3828 = vmatpush1.msra.mxu0 %v3378
      %3829 = vmatprep.subr.mxu0 0.0
      %3830 = vmatpush1.msra.mxu0 %v3379
      %3831 = vmatprep.subr.mxu0 0.0
      %3832 = vmatpush1.msra.mxu0 %v3380
      %3833 = vmatprep.subr.mxu0 0.0
      %3834 = vmatpush1.msra.mxu0 %v3381
      %3835 = vmatprep.subr.mxu0 0.0
      %3836 = vmatpush1.msra.mxu0 %v3382
      %3837 = vmatprep.subr.mxu0 0.0
      %3838 = vmatpush1.msra.mxu0 %v3383
      %3839 = vmatprep.subr.mxu0 0.0
      %3840 = vmatpush1.msra.mxu0 %v3384
      %3841 = vmatprep.subr.mxu0 0.0
      %3842 = vmatpush1.msra.mxu0 %v3385
      %3843 = vmatprep.subr.mxu0 0.0
      %3844 = vmatpush1.msra.mxu0 %v3386
      %3845 = vmatprep.subr.mxu0 0.0
      %3846 = vmatpush1.msra.mxu0 %v3387
      %3847 = vmatprep.subr.mxu0 0.0
      %3848 = vmatpush1.msra.mxu0 %v3388
      %3849 = vmatprep.subr.mxu0 0.0
      %3850 = vmatpush1.msra.mxu0 %v3389
      %3851 = vmatprep.subr.mxu0 0.0
      %3852 = vmatpush1.msra.mxu0 %v3390
      %3853 = vmatprep.subr.mxu0 0.0
      %3854 = vmatpush1.msra.mxu0 %v3391
      %3855 = vmatprep.subr.mxu0 0.0
      %3856 = vmatpush1.msra.mxu0 %v3392
      %3857 = vmatprep.subr.mxu0 0.0
      %3858 = vmatpush1.msra.mxu0 %v3393
      %3859 = vmatprep.subr.mxu0 0.0
      %3860 = vmatpush1.msra.mxu0 %v3394
      %3861 = vmatprep.subr.mxu0 0.0
      %3862 = vmatpush1.msra.mxu0 %v3395
      %3863 = vmatprep.mubr.f32.mxu0 %v3213
      %3864 = vmatmul.mubr.f32.gmra.mrb[0].mxu0 %v3212
      %v3865 = vpop.f32.mrb[0].mxu0
      %v3866 = vadd.f32 %v3791, %v3865
      %v3867 = vpop.f32.mrb[0].mxu0
      %3868 = vmatprep.mubr.f32.mxu0 %v3229
      %3869 = vmatmul.mubr.f32.gmra.mrb[0].mxu0 %v3228
      %v3870 = vpop.f32.mrb[0].mxu0
      %v3871 = vadd.f32 %v3796, %v3870
      %v3872 = vpop.f32.mrb[0].mxu0
      %3873 = vdwg.mxu0
      %3874 = vmatprep.subr.mxu0 0.0
      %3875 = vmatpush1.msra.mxu0 %v3396
      %3876 = vmatprep.subr.mxu0 0.0
      %3877 = vmatpush1.msra.mxu0 %v3397
      %3878 = vmatprep.subr.mxu0 0.0
      %3879 = vmatpush1.msra.mxu0 %v3398
      %3880 = vmatprep.subr.mxu0 0.0
      %3881 = vmatpush1.msra.mxu0 %v3399
      %3882 = vmatprep.subr.mxu0 0.0
      %3883 = vmatpush1.msra.mxu0 %v3400
      %3884 = vmatprep.subr.mxu0 0.0
      %3885 = vmatpush1.msra.mxu0 %v3401
      %3886 = vmatprep.subr.mxu0 0.0
      %3887 = vmatpush1.msra.mxu0 %v3402
      %3888 = vmatprep.subr.mxu0 0.0
      %3889 = vmatpush1.msra.mxu0 %v3403
      %3890 = vmatprep.subr.mxu0 0.0
      %3891 = vmatpush1.msra.mxu0 %v3404
      %3892 = vmatprep.subr.mxu0 0.0
      %3893 = vmatpush1.msra.mxu0 %v3405
      %3894 = vmatprep.subr.mxu0 0.0
      %3895 = vmatpush1.msra.mxu0 %v3406
      %3896 = vmatprep.subr.mxu0 0.0
      %3897 = vmatpush1.msra.mxu0 %v3407
      %3898 = vmatprep.subr.mxu0 0.0
      %3899 = vmatpush1.msra.mxu0 %v3408
      %3900 = vmatprep.subr.mxu0 0.0
      %3901 = vmatpush1.msra.mxu0 %v3409
      %3902 = vmatprep.subr.mxu0 0.0
      %3903 = vmatpush1.msra.mxu0 %v3410
      %3904 = vmatprep.subr.mxu0 0.0
      %3905 = vmatpush1.msra.mxu0 %v3411
      %3906 = vmatprep.subr.mxu0 0.0
      %3907 = vmatpush1.msra.mxu0 %v3412
      %3908 = vmatprep.subr.mxu0 0.0
      %3909 = vmatpush1.msra.mxu0 %v3413
      %3910 = vmatprep.subr.mxu0 0.0
      %3911 = vmatpush1.msra.mxu0 %v3414
      %3912 = vmatprep.subr.mxu0 0.0
      %3913 = vmatpush1.msra.mxu0 %v3415
      %3914 = vmatprep.subr.mxu0 0.0
      %3915 = vmatpush1.msra.mxu0 %v3416
      %3916 = vmatprep.subr.mxu0 0.0
      %3917 = vmatpush1.msra.mxu0 %v3417
      %3918 = vmatprep.subr.mxu0 0.0
      %3919 = vmatpush1.msra.mxu0 %v3418
      %3920 = vmatprep.subr.mxu0 0.0
      %3921 = vmatpush1.msra.mxu0 %v3419
      %3922 = vmatprep.subr.mxu0 0.0
      %3923 = vmatpush1.msra.mxu0 %v3420
      %3924 = vmatprep.subr.mxu0 0.0
      %3925 = vmatpush1.msra.mxu0 %v3421
      %3926 = vmatprep.subr.mxu0 0.0
      %3927 = vmatpush1.msra.mxu0 %v3422
      %3928 = vmatprep.subr.mxu0 0.0
      %3929 = vmatpush1.msra.mxu0 %v3423
      %3930 = vmatprep.subr.mxu0 0.0
      %3931 = vmatpush1.msra.mxu0 %v3424
      %3932 = vmatprep.subr.mxu0 0.0
      %3933 = vmatpush1.msra.mxu0 %v3425
      %3934 = vmatprep.subr.mxu0 0.0
      %3935 = vmatpush1.msra.mxu0 %v3426
      %3936 = vmatprep.subr.mxu0 0.0
      %3937 = vmatpush1.msra.mxu0 %v3427
      %3938 = vmatprep.mubr.f32.mxu0 %v3215
      %3939 = vmatmul.mubr.f32.gmra.mrb[0].mxu0 %v3214
      %v3940 = vpop.f32.mrb[0].mxu0
      %v3941 = vadd.f32 %v3866, %v3940
      %v3942 = vpop.f32.mrb[0].mxu0
      %3943 = vmatprep.mubr.f32.mxu0 %v3231
      %3944 = vmatmul.mubr.f32.gmra.mrb[0].mxu0 %v3230
      %v3945 = vpop.f32.mrb[0].mxu0
      %v3946 = vadd.f32 %v3871, %v3945
      %v3947 = vpop.f32.mrb[0].mxu0
      %3948 = vdwg.mxu0
      %3949 = vmatprep.subr.mxu0 0.0
      %3950 = vmatpush1.msra.mxu0 %v3428
      %3951 = vmatprep.subr.mxu0 0.0
      %3952 = vmatpush1.msra.mxu0 %v3429
      %3953 = vmatprep.subr.mxu0 0.0
      %3954 = vmatpush1.msra.mxu0 %v3430
      %3955 = vmatprep.subr.mxu0 0.0
      %3956 = vmatpush1.msra.mxu0 %v3431
      %3957 = vmatprep.subr.mxu0 0.0
      %3958 = vmatpush1.msra.mxu0 %v3432
      %3959 = vmatprep.subr.mxu0 0.0
      %3960 = vmatpush1.msra.mxu0 %v3433
      %3961 = vmatprep.subr.mxu0 0.0
      %3962 = vmatpush1.msra.mxu0 %v3434
      %3963 = vmatprep.subr.mxu0 0.0
      %3964 = vmatpush1.msra.mxu0 %v3435
      %3965 = vmatprep.subr.mxu0 0.0
      %3966 = vmatpush1.msra.mxu0 %v3436
      %3967 = vmatprep.subr.mxu0 0.0
      %3968 = vmatpush1.msra.mxu0 %v3437
      %3969 = vmatprep.subr.mxu0 0.0
      %3970 = vmatpush1.msra.mxu0 %v3438
      %3971 = vmatprep.subr.mxu0 0.0
      %3972 = vmatpush1.msra.mxu0 %v3439
      %3973 = vmatprep.subr.mxu0 0.0
      %3974 = vmatpush1.msra.mxu0 %v3440
      %3975 = vmatprep.subr.mxu0 0.0
      %3976 = vmatpush1.msra.mxu0 %v3441
      %3977 = vmatprep.subr.mxu0 0.0
      %3978 = vmatpush1.msra.mxu0 %v3442
      %3979 = vmatprep.subr.mxu0 0.0
      %3980 = vmatpush1.msra.mxu0 %v3443
      %3981 = vmatprep.subr.mxu0 0.0
      %3982 = vmatpush1.msra.mxu0 %v3444
      %3983 = vmatprep.subr.mxu0 0.0
      %3984 = vmatpush1.msra.mxu0 %v3445
      %3985 = vmatprep.subr.mxu0 0.0
      %3986 = vmatpush1.msra.mxu0 %v3446
      %3987 = vmatprep.subr.mxu0 0.0
      %3988 = vmatpush1.msra.mxu0 %v3447
      %3989 = vmatprep.subr.mxu0 0.0
      %3990 = vmatpush1.msra.mxu0 %v3448
      %3991 = vmatprep.subr.mxu0 0.0
      %3992 = vmatpush1.msra.mxu0 %v3449
      %3993 = vmatprep.subr.mxu0 0.0
      %3994 = vmatpush1.msra.mxu0 %v3450
      %3995 = vmatprep.subr.mxu0 0.0
      %3996 = vmatpush1.msra.mxu0 %v3451
      %3997 = vmatprep.subr.mxu0 0.0
      %3998 = vmatpush1.msra.mxu0 %v3452
      %3999 = vmatprep.subr.mxu0 0.0
      %4000 = vmatpush1.msra.mxu0 %v3453
      %4001 = vmatprep.subr.mxu0 0.0
      %4002 = vmatpush1.msra.mxu0 %v3454
      %4003 = vmatprep.subr.mxu0 0.0
      %4004 = vmatpush1.msra.mxu0 %v3455
      %4005 = vmatprep.subr.mxu0 0.0
      %4006 = vmatpush1.msra.mxu0 %v3456
      %4007 = vmatprep.subr.mxu0 0.0
      %4008 = vmatpush1.msra.mxu0 %v3457
      %4009 = vmatprep.subr.mxu0 0.0
      %4010 = vmatpush1.msra.mxu0 %v3458
      %4011 = vmatprep.subr.mxu0 0.0
      %4012 = vmatpush1.msra.mxu0 %v3459
      %4013 = vmatprep.mubr.f32.mxu0 %v3217
      %4014 = vmatmul.mubr.f32.gmra.mrb[0].mxu0 %v3216
      %v4015 = vpop.f32.mrb[0].mxu0
      %v4016 = vadd.f32 %v3941, %v4015
      %v4017 = vpop.f32.mrb[0].mxu0
      %4018 = vmatprep.mubr.f32.mxu0 %v3233
      %4019 = vmatmul.mubr.f32.gmra.mrb[0].mxu0 %v3232
      %v4020 = vpop.f32.mrb[0].mxu0
      %v4021 = vadd.f32 %v3946, %v4020
      %v4022 = vpop.f32.mrb[0].mxu0
      %4023 = vdwg.mxu0
      %4024 = vmatprep.subr.mxu0 0.0
      %4025 = vmatpush1.msra.mxu0 %v3460
      %4026 = vmatprep.subr.mxu0 0.0
      %4027 = vmatpush1.msra.mxu0 %v3461
      %4028 = vmatprep.subr.mxu0 0.0
      %4029 = vmatpush1.msra.mxu0 %v3462
      %4030 = vmatprep.subr.mxu0 0.0
      %4031 = vmatpush1.msra.mxu0 %v3463
      %4032 = vmatprep.subr.mxu0 0.0
      %4033 = vmatpush1.msra.mxu0 %v3464
      %4034 = vmatprep.subr.mxu0 0.0
      %4035 = vmatpush1.msra.mxu0 %v3465
      %4036 = vmatprep.subr.mxu0 0.0
      %4037 = vmatpush1.msra.mxu0 %v3466
      %4038 = vmatprep.subr.mxu0 0.0
      %4039 = vmatpush1.msra.mxu0 %v3467
      %4040 = vmatprep.subr.mxu0 0.0
      %4041 = vmatpush1.msra.mxu0 %v3468
      %4042 = vmatprep.subr.mxu0 0.0
      %4043 = vmatpush1.msra.mxu0 %v3469
      %4044 = vmatprep.subr.mxu0 0.0
      %4045 = vmatpush1.msra.mxu0 %v3470
      %4046 = vmatprep.subr.mxu0 0.0
      %4047 = vmatpush1.msra.mxu0 %v3471
      %4048 = vmatprep.subr.mxu0 0.0
      %4049 = vmatpush1.msra.mxu0 %v3472
      %4050 = vmatprep.subr.mxu0 0.0
      %4051 = vmatpush1.msra.mxu0 %v3473
      %4052 = vmatprep.subr.mxu0 0.0
      %4053 = vmatpush1.msra.mxu0 %v3474
      %4054 = vmatprep.subr.mxu0 0.0
      %4055 = vmatpush1.msra.mxu0 %v3475
      %4056 = vmatprep.subr.mxu0 0.0
      %4057 = vmatpush1.msra.mxu0 %v3476
      %4058 = vmatprep.subr.mxu0 0.0
      %4059 = vmatpush1.msra.mxu0 %v3477
      %4060 = vmatprep.subr.mxu0 0.0
      %4061 = vmatpush1.msra.mxu0 %v3478
      %4062 = vmatprep.subr.mxu0 0.0
      %4063 = vmatpush1.msra.mxu0 %v3479
      %4064 = vmatprep.subr.mxu0 0.0
      %4065 = vmatpush1.msra.mxu0 %v3480
      %4066 = vmatprep.subr.mxu0 0.0
      %4067 = vmatpush1.msra.mxu0 %v3481
      %4068 = vmatprep.subr.mxu0 0.0
      %4069 = vmatpush1.msra.mxu0 %v3482
      %4070 = vmatprep.subr.mxu0 0.0
      %4071 = vmatpush1.msra.mxu0 %v3483
      %4072 = vmatprep.subr.mxu0 0.0
      %4073 = vmatpush1.msra.mxu0 %v3484
      %4074 = vmatprep.subr.mxu0 0.0
      %4075 = vmatpush1.msra.mxu0 %v3485
      %4076 = vmatprep.subr.mxu0 0.0
      %4077 = vmatpush1.msra.mxu0 %v3486
      %4078 = vmatprep.subr.mxu0 0.0
      %4079 = vmatpush1.msra.mxu0 %v3487
      %4080 = vmatprep.subr.mxu0 0.0
      %4081 = vmatpush1.msra.mxu0 %v3488
      %4082 = vmatprep.subr.mxu0 0.0
      %4083 = vmatpush1.msra.mxu0 %v3489
      %4084 = vmatprep.subr.mxu0 0.0
      %4085 = vmatpush1.msra.mxu0 %v3490
      %4086 = vmatprep.subr.mxu0 0.0
      %4087 = vmatpush1.msra.mxu0 %v3491
      %4088 = vmatprep.mubr.f32.mxu0 %v3219
      %4089 = vmatmul.mubr.f32.gmra.mrb[0].mxu0 %v3218
      %v4090 = vpop.f32.mrb[0].mxu0
      %v4091 = vadd.f32 %v4016, %v4090
      %v4092 = vpop.f32.mrb[0].mxu0
      %4093 = vmatprep.mubr.f32.mxu0 %v3235
      %4094 = vmatmul.mubr.f32.gmra.mrb[0].mxu0 %v3234
      %v4095 = vpop.f32.mrb[0].mxu0
      %v4096 = vadd.f32 %v4021, %v4095
      %v4097 = vpop.f32.mrb[0].mxu0
      %4098 = vdwg.mxu0
      %v4099 = vadd.f32 %v2432, %v4091
      %v4100 = vadd.f32 %v2433, %v4096
      %v4101 = vsel %vm858, %v4099, 0.0
      %4102 = vadd.xlane.f32.xlu0 %v4101
      %v4103 = vpop.xlane.xlu0 %4102
      %v4104 = vsel %vm858, %v4100, 0.0
      %4105 = vadd.xlane.f32.xlu0 %v4104
      %v4106 = vpop.xlane.xlu0 %4105
      %v4107 = vmul.f32 %v4103, %v2395
      %v4108 = vmul.f32 %v4106, %v2395
      %v4109 = vsub.f32 %v4099, %v4107
      %v4110 = vsub.f32 %v4100, %v4108
      %v4111 = vmul.f32 %v4109, %v4109
      %v4112 = vmul.f32 %v4110, %v4110
      %v4113 = vsel %vm858, %v4111, 0.0
      %4114 = vadd.xlane.f32.xlu0 %v4113
      %v4115 = vpop.xlane.xlu0 %4114
      %v4116 = vsel %vm858, %v4112, 0.0
      %4117 = vadd.xlane.f32.xlu0 %v4116
      %v4118 = vpop.xlane.xlu0 %4117
      %v4119 = vmul.f32 %v4115, %v2395
      %v4120 = vmul.f32 %v4118, %v2395
      %v4121 = vadd.f32 %v4119, 1e-05
      %v4122 = vadd.f32 %v4120, 1e-05
      %v4123 = vrsqrt.pop %v4121
      %v4124 = vrsqrt.pop %v4122
      %v4125 = vmul.f32 %v4109, %v4123
      %v4126 = vmul.f32 %v4110, %v4124
      %v4127 = vld [vmem:[%s734] sm:$0x1]
      %v4129 = vlaneseq
      %v4130 = vshrl.u32 %v4129, 7
      %v4131 = vsub.s32 0, %v4130
      %v4132 = vrot.slane %v4127, %v4131
      %v4134 = vmul.f32 %v4125, %v4132
      %v4135 = vmul.f32 %v4126, %v4132
      %v4136 = vld [vmem:[%s737] sm:$0x1]
      %v4138 = vlaneseq
      %v4139 = vshrl.u32 %v4138, 7
      %v4140 = vsub.s32 0, %v4139
      %v4141 = vrot.slane %v4136, %v4140
      %v4143 = vadd.f32 %v4134, %v4141
      %v4144 = vadd.f32 %v4135, %v4141
      %4145 = vst.msk [vmem:[#allocation2] sm:$0xff] %vm858, %v4143
      %4146 = vst.msk [vmem:[#allocation2 + $0x8] sm:$0xff] %vm858, %v4144
      %p4147 = scmp.eq.s32.totalorder %s31, 1
      // Predicated region
      $region97: #{tpu_custom_call.1} parent=91 // pred_check
        %p4148 = pneg %p4147
      $region98: #{tpu_custom_call.1} parent=91 // pred_check_branch
        %4150 = sbr.rel (%p4148) target = $region100
      $region99: #{tpu_custom_call.1} parent=91 // pred_region
        %v4151 = vld [vmem:[%s16] sm:$0xff]
        %v4152 = vld [vmem:[%s16 + $0x8] sm:$0xff]
        %v4153 = vld [vmem:[%s16 + $0x10] sm:$0xff]
        %v4154 = vld [vmem:[%s16 + $0x18] sm:$0xff]
        %v4155 = vld [vmem:[#allocation3] sm:$0x1]
        %v4157 = vlaneseq
        %v4158 = vshrl.u32 %v4157, 7
        %v4159 = vsub.s32 0, %v4158
        %v4160 = vrot.slane %v4155, %v4159
        %v4164 = vrot.slane %v4143, 7
        %v4165 = vrot.slane %v4144, 6
        %vm4166 = vcmask 1041409
        %v4167 = vsel %vm4166, %v4165, %v4164
        %v4168 = vsel %vm858, %v4167, 0
        %4170 = vmatprep.subr.mxu0 0.0
        %4171 = vmatpush1.msra.mxu0 %v4151
        %4172 = vmatprep.subr.mxu0 0.0
        %4173 = vmatpush1.msra.mxu0 %v4152
        %4174 = vmatprep.subr.mxu0 0.0
        %4175 = vmatpush1.msra.mxu0 %v4153
        %4176 = vmatprep.subr.mxu0 0.0
        %4177 = vmatpush1.msra.mxu0 %v4154
        %4178 = vmatprep.subr.mxu0 0.0
        %4179 = vmatpush1.msra.mxu0 0.0
        %4180 = vmatprep.subr.mxu0 0.0
        %4181 = vmatpush1.msra.mxu0 0.0
        %4182 = vmatprep.subr.mxu0 0.0
        %4183 = vmatpush1.msra.mxu0 0.0
        %4184 = vmatprep.subr.mxu0 0.0
        %4185 = vmatpush1.msra.mxu0 0.0
        %4186 = vmatprep.subr.mxu0 0.0
        %4187 = vmatpush1.msra.mxu0 0.0
        %4188 = vmatprep.subr.mxu0 0.0
        %4189 = vmatpush1.msra.mxu0 0.0
        %4190 = vmatprep.subr.mxu0 0.0
        %4191 = vmatpush1.msra.mxu0 0.0
        %4192 = vmatprep.subr.mxu0 0.0
        %4193 = vmatpush1.msra.mxu0 0.0
        %4194 = vmatprep.subr.mxu0 0.0
        %4195 = vmatpush1.msra.mxu0 0.0
        %4196 = vmatprep.subr.mxu0 0.0
        %4197 = vmatpush1.msra.mxu0 0.0
        %4198 = vmatprep.subr.mxu0 0.0
        %4199 = vmatpush1.msra.mxu0 0.0
        %4200 = vmatprep.subr.mxu0 0.0
        %4201 = vmatpush1.msra.mxu0 0.0
        %4202 = vmatprep.subr.mxu0 0.0
        %4203 = vmatpush1.msra.mxu0 0.0
        %4204 = vmatprep.subr.mxu0 0.0
        %4205 = vmatpush1.msra.mxu0 0.0
        %4206 = vmatprep.subr.mxu0 0.0
        %4207 = vmatpush1.msra.mxu0 0.0
        %4208 = vmatprep.subr.mxu0 0.0
        %4209 = vmatpush1.msra.mxu0 0.0
        %4210 = vmatprep.subr.mxu0 0.0
        %4211 = vmatpush1.msra.mxu0 0.0
        %4212 = vmatprep.subr.mxu0 0.0
        %4213 = vmatpush1.msra.mxu0 0.0
        %4214 = vmatprep.subr.mxu0 0.0
        %4215 = vmatpush1.msra.mxu0 0.0
        %4216 = vmatprep.subr.mxu0 0.0
        %4217 = vmatpush1.msra.mxu0 0.0
        %4218 = vmatprep.subr.mxu0 0.0
        %4219 = vmatpush1.msra.mxu0 0.0
        %4220 = vmatprep.subr.mxu0 0.0
        %4221 = vmatpush1.msra.mxu0 0.0
        %4222 = vmatprep.subr.mxu0 0.0
        %4223 = vmatpush1.msra.mxu0 0.0
        %4224 = vmatprep.subr.mxu0 0.0
        %4225 = vmatpush1.msra.mxu0 0.0
        %4226 = vmatprep.subr.mxu0 0.0
        %4227 = vmatpush1.msra.mxu0 0.0
        %4228 = vmatprep.subr.mxu0 0.0
        %4229 = vmatpush1.msra.mxu0 0.0
        %4230 = vmatprep.subr.mxu0 0.0
        %4231 = vmatpush1.msra.mxu0 0.0
        %4232 = vmatprep.subr.mxu0 0.0
        %4233 = vmatpush1.msra.mxu0 0.0
        %4234 = vmatprep.mubr.f32.mxu0 0.0
        %4235 = vmatmul.mubr.f32.gmra.mrb[0].mxu0 %v4168
        %v4236 = vpop.f32.mrb[0].mxu0
        %v4237 = vadd.f32 %v4160, %v4236
        %v4238 = vpop.f32.mrb[0].mxu0
        %4239 = vdwg.mxu0
        %vm4240 = vcmask 1024
        %4241 = vst.msk [vmem:[%s18] sm:$0x3] %vm4240, %v4237
      $region100: #{tpu_custom_call.1} parent=91 // pred_fallthru
        _
      // Predicated region
      $region101: #{tpu_custom_call.1} parent=91 // pred_check
        %p4242 = pneg %p482
      $region102: #{tpu_custom_call.1} parent=91 // pred_check_branch
        %4244 = sbr.rel (%p4242) target = $region104
      $region103: #{tpu_custom_call.1} parent=91 // pred_region
        _
      $region104: #{tpu_custom_call.1} parent=91 // pred_fallthru
        _
      // Predicated region
      $region105: #{tpu_custom_call.1} parent=91 // pred_check
        %p4245 = pneg %p482
      $region106: #{tpu_custom_call.1} parent=91 // pred_check_branch
        %4247 = sbr.rel (%p4245) target = $region108
      $region107: #{tpu_custom_call.1} parent=91 // pred_region
        _
      $region108: #{tpu_custom_call.1} parent=91 // pred_fallthru
        _
    $region92: #{tpu_custom_call.1} parent=5 // pred_fallthru
      _
    %p4248 = scmp.le.s32.totalorder 2, %s26
    // Predicated region
    $region109: #{tpu_custom_call.1} parent=5 // pred_check
      %p4249 = pneg %p4248
    $region110: #{tpu_custom_call.1} parent=5 // pred_check_branch
      %4251 = sbr.rel (%p4249) target = $region112
    $region111: #{tpu_custom_call.1} parent=5 // pred_region
      %s4252 = ssub.s32 %s26, 2
    $region112: #{tpu_custom_call.1} parent=5 // pred_fallthru
      _
  $region6: #{tpu_custom_call.1} parent=0 // loop_footer
    %s30 = sadd.s32 1, %s26
  $region7: #{tpu_custom_call.1} parent=0 // loop_footer_branch
    %25 = sbr.rel target = $region3
  $region8: #{tpu_custom_call.1} parent=0 // loop_exit
    _

</llo_original>
